<compile_context>
chip_gen: v7x
topology: tpu7x:2x2x1
jax: 0.10.0
libtpu: 0.0.40
codegen_flags: <defaults>
</compile_context>

<pallas_src>
import jax
import jax.numpy as jnp
from jax.experimental import pallas as pl
from jax.experimental.pallas import tpu as pltpu

D_IN = 784
D_IN_PAD = 896            # 7 * 128
D_H1, D_H2, D_H3 = 512, 256, 128
D_OUT_PAD = 128           # real output is column 0
TILE_B = 256              # MXU M-dim tile


def _leaky_relu(x, alpha):
    return jnp.where(x > 0, x, alpha * x)


def discriminator_kernel(x_ref,
                         w1_ref, b1_ref,
                         w2_ref, b2_ref,
                         w3_ref, b3_ref,
                         w4_ref, b4_ref,
                         o_ref):
    # bf16 operands on the MXU, f32 accumulation; bias-add / LeakyReLU in f32.
    x = x_ref[...].astype(jnp.bfloat16)

    h = jnp.dot(x, w1_ref[...], preferred_element_type=jnp.float32) + b1_ref[...]
    h = _leaky_relu(h, 0.01)

    h = jnp.dot(h.astype(jnp.bfloat16), w2_ref[...],
                preferred_element_type=jnp.float32) + b2_ref[...]
    h = _leaky_relu(h, 0.001)

    h = jnp.dot(h.astype(jnp.bfloat16), w3_ref[...],
                preferred_element_type=jnp.float32) + b3_ref[...]
    h = _leaky_relu(h, 0.001)

    logits = jnp.dot(h.astype(jnp.bfloat16), w4_ref[...],
                     preferred_element_type=jnp.float32) + b4_ref[...]
    # Sigmoid: exp and approximate reciprocal both go to the EUP slot.
    o_ref[...] = pl.reciprocal(1.0 + jnp.exp(-logits), approx=True).astype(o_ref.dtype)


def _const_spec(arr):
    shape = arr.shape
    # Same block index every grid step => stays resident in VMEM (no re-DMA).
    return pl.BlockSpec(shape, lambda i: tuple(0 for _ in shape))


@jax.jit
def discriminator_forward(x, packed):
    """x: (B, 1, 28, 28) or (B, 784) float32. Returns (B, 1) float32."""
    b = x.shape[0]
    x2d = x.reshape(b, D_IN).astype(jnp.float32)

    # Pad batch to a TILE_B multiple and K to 896 (zeros) once, in the wrapper.
    b_pad = ((b + TILE_B - 1) // TILE_B) * TILE_B
    xp = jnp.zeros((b_pad, D_IN_PAD), jnp.float32).at[:b, :D_IN].set(x2d)

    w1, b1, w2, b2, w3, b3, w4, b4 = packed
    weights = (w1, b1, w2, b2, w3, b3, w4, b4)
    nb = b_pad // TILE_B

    in_specs = [pl.BlockSpec((TILE_B, D_IN_PAD), lambda i: (i, 0))]
    in_specs += [_const_spec(a) for a in weights]

    flops = 2 * b_pad * (D_IN_PAD * D_H1 + D_H1 * D_H2 + D_H2 * D_H3
                         + D_H3 * D_OUT_PAD)
    bytes_accessed = (xp.size * 4 + b_pad * D_OUT_PAD * 4
                      + sum(int(a.size) * a.dtype.itemsize for a in weights))
    cost = pl.CostEstimate(flops=flops,
                           transcendentals=2 * b_pad * D_OUT_PAD,
                           bytes_accessed=bytes_accessed)

    out = pl.pallas_call(
        discriminator_kernel,
        out_shape=jax.ShapeDtypeStruct((b_pad, D_OUT_PAD), jnp.float32),
        grid=(nb,),
        in_specs=in_specs,
        out_specs=pl.BlockSpec((TILE_B, D_OUT_PAD), lambda i: (i, 0)),
        compiler_params=pltpu.CompilerParams(
            dimension_semantics=("parallel",),
            vmem_limit_bytes=16 << 20),
        cost_estimate=cost,
    )(xp, *weights)

    return out[:b, :1]


def init_params(key):
    """PyTorch-like nn.Linear init: U(-1/sqrt(fan_in), 1/sqrt(fan_in)), f32."""
    dims = [(D_IN, D_H1), (D_H1, D_H2), (D_H2, D_H3), (D_H3, 1)]
    params = []
    for fan_in, fan_out in dims:
        key, kw, kb = jax.random.split(key, 3)
        bound = 1.0 / jnp.sqrt(fan_in)
        w = jax.random.uniform(kw, (fan_in, fan_out), jnp.float32, -bound, bound)
        bvec = jax.random.uniform(kb, (1, fan_out), jnp.float32, -bound, bound)
        params.append((w, bvec))
    return params


def pack_params(raw):
    """Kernel operand set: bf16 weights, K/N padding, f32 biases."""
    (w1, b1), (w2, b2), (w3, b3), (w4, b4) = raw
    w1p = jnp.zeros((D_IN_PAD, D_H1), jnp.bfloat16).at[:D_IN].set(
        w1.astype(jnp.bfloat16))
    w4p = jnp.zeros((D_H3, D_OUT_PAD), jnp.bfloat16).at[:, :1].set(
        w4.astype(jnp.bfloat16))
    b4p = jnp.zeros((1, D_OUT_PAD), jnp.float32).at[:, :1].set(b4)
    return (w1p, b1,
            w2.astype(jnp.bfloat16), b2,
            w3.astype(jnp.bfloat16), b3,
            w4p, b4p)


def _reference_forward(x, raw):
    """Plain-JAX reference mirroring the kernel's bf16/f32 mixed precision."""
    b = x.shape[0]
    h = x.reshape(b, D_IN).astype(jnp.float32)
    slopes = (0.01, 0.001, 0.001)
    for (w, bias), s in zip(raw[:3], slopes):
        z = jnp.dot(h.astype(jnp.bfloat16), w.astype(jnp.bfloat16),
                    preferred_element_type=jnp.float32) + bias
        h = jnp.where(z > 0, z, s * z)
    w4, b4 = raw[3]
    logits = jnp.dot(h.astype(jnp.bfloat16), w4.astype(jnp.bfloat16),
                     preferred_element_type=jnp.float32) + b4
    return jax.nn.sigmoid(logits)


if __name__ == "__main__":
    key = jax.random.PRNGKey(0)
    key, kx = jax.random.split(key)

    batch = 8
    x = jax.random.normal(kx, (batch, 1, 28, 28), jnp.float32)  # NCHW, 1*28*28 = 784

    raw_params = init_params(key)
    packed_params = pack_params(raw_params)

    out = jax.block_until_ready(discriminator_forward(x, packed_params))
    ref = _reference_forward(x, raw_params)

    assert out.shape == (batch, 1), out.shape
    # Tolerance covers the approximate EUP reciprocal in the sigmoid.
    assert jnp.allclose(out, ref, atol=1e-2, rtol=1e-2), (
        f"mismatch: max abs diff {jnp.max(jnp.abs(out - ref))}")

    print("KERNEL_OK")
</pallas_src>

<mosaic_0001>
module attributes {stable_mosaic.version = 11 : i64} {
  func.func @discriminator_kernel(%arg0: i32, %arg1: memref<256x896xf32, #tpu.memory_space<vmem>>, %arg2: memref<896x512xbf16, #tpu.memory_space<vmem>>, %arg3: memref<1x512xf32, #tpu.memory_space<vmem>>, %arg4: memref<512x256xbf16, #tpu.memory_space<vmem>>, %arg5: memref<1x256xf32, #tpu.memory_space<vmem>>, %arg6: memref<256x128xbf16, #tpu.memory_space<vmem>>, %arg7: memref<1x128xf32, #tpu.memory_space<vmem>>, %arg8: memref<128x128xbf16, #tpu.memory_space<vmem>>, %arg9: memref<1x128xf32, #tpu.memory_space<vmem>>, %arg10: memref<256x128xf32, #tpu.memory_space<vmem>>) attributes {dimension_semantics = [#tpu.dimension_semantics<parallel>], iteration_bounds = array<i64: 1>, scalar_prefetch = 0 : i64, scratch_operands = 0 : i64, tpu.core_type = #tpu.core_type<tc>, window_params = [{transform_indices = @transform_0, window_bounds = array<i64: 256, 896>}, {pipeline_mode = #tpu.pipeline_mode<synchronous>, transform_indices = @transform_1, window_bounds = array<i64: 896, 512>}, {pipeline_mode = #tpu.pipeline_mode<synchronous>, transform_indices = @transform_2, window_bounds = array<i64: 1, 512>}, {pipeline_mode = #tpu.pipeline_mode<synchronous>, transform_indices = @transform_3, window_bounds = array<i64: 512, 256>}, {pipeline_mode = #tpu.pipeline_mode<synchronous>, transform_indices = @transform_4, window_bounds = array<i64: 1, 256>}, {pipeline_mode = #tpu.pipeline_mode<synchronous>, transform_indices = @transform_5, window_bounds = array<i64: 256, 128>}, {pipeline_mode = #tpu.pipeline_mode<synchronous>, transform_indices = @transform_6, window_bounds = array<i64: 1, 128>}, {pipeline_mode = #tpu.pipeline_mode<synchronous>, transform_indices = @transform_7, window_bounds = array<i64: 128, 128>}, {pipeline_mode = #tpu.pipeline_mode<synchronous>, transform_indices = @transform_8, window_bounds = array<i64: 1, 128>}, {transform_indices = @transform_9, window_bounds = array<i64: 256, 128>}]} {
    %c0 = arith.constant 0 : index
    %c0_0 = arith.constant 0 : index
    %0 = vector.load %arg1[%c0, %c0_0] : memref<256x896xf32, #tpu.memory_space<vmem>>, vector<256x896xf32>
    %1 = arith.truncf %0 : vector<256x896xf32> to vector<256x896xbf16>
    %c0_1 = arith.constant 0 : index
    %c0_2 = arith.constant 0 : index
    %2 = vector.load %arg2[%c0_1, %c0_2] : memref<896x512xbf16, #tpu.memory_space<vmem>>, vector<896x512xbf16>
    %cst = arith.constant dense<0.000000e+00> : vector<256x512xf32>
    %3 = tpu.matmul %1, %2, %cst {dimension_numbers = #tpu.dot_dimension_numbers<[1], [0], [0], [1], [0, 0, 1, 1], [], []>} : vector<256x896xbf16>, vector<896x512xbf16>, vector<256x512xf32> -> vector<256x512xf32>
    %c0_3 = arith.constant 0 : index
    %c0_4 = arith.constant 0 : index
    %4 = vector.load %arg3[%c0_3, %c0_4] : memref<1x512xf32, #tpu.memory_space<vmem>>, vector<1x512xf32>
    %5 = vector.broadcast %4 : vector<1x512xf32> to vector<256x512xf32>
    %6 = arith.addf %3, %5 : vector<256x512xf32>
    %cst_5 = arith.constant 0.000000e+00 : f32
    %7 = vector.broadcast %cst_5 : f32 to vector<256x512xf32>
    %8 = arith.cmpf ogt, %6, %7 : vector<256x512xf32>
    %cst_6 = arith.constant 0.00999999977 : f32
    %9 = vector.broadcast %cst_6 : f32 to vector<256x512xf32>
    %10 = arith.mulf %9, %6 : vector<256x512xf32>
    %11 = arith.select %8, %6, %10 : vector<256x512xi1>, vector<256x512xf32>
    %12 = arith.truncf %11 : vector<256x512xf32> to vector<256x512xbf16>
    %c0_7 = arith.constant 0 : index
    %c0_8 = arith.constant 0 : index
    %13 = vector.load %arg4[%c0_7, %c0_8] : memref<512x256xbf16, #tpu.memory_space<vmem>>, vector<512x256xbf16>
    %cst_9 = arith.constant dense<0.000000e+00> : vector<256x256xf32>
    %14 = tpu.matmul %12, %13, %cst_9 {dimension_numbers = #tpu.dot_dimension_numbers<[1], [0], [0], [1], [0, 0, 1, 1], [], []>} : vector<256x512xbf16>, vector<512x256xbf16>, vector<256x256xf32> -> vector<256x256xf32>
    %c0_10 = arith.constant 0 : index
    %c0_11 = arith.constant 0 : index
    %15 = vector.load %arg5[%c0_10, %c0_11] : memref<1x256xf32, #tpu.memory_space<vmem>>, vector<1x256xf32>
    %16 = vector.broadcast %15 : vector<1x256xf32> to vector<256x256xf32>
    %17 = arith.addf %14, %16 : vector<256x256xf32>
    %cst_12 = arith.constant 0.000000e+00 : f32
    %18 = vector.broadcast %cst_12 : f32 to vector<256x256xf32>
    %19 = arith.cmpf ogt, %17, %18 : vector<256x256xf32>
    %cst_13 = arith.constant 1.000000e-03 : f32
    %20 = vector.broadcast %cst_13 : f32 to vector<256x256xf32>
    %21 = arith.mulf %20, %17 : vector<256x256xf32>
    %22 = arith.select %19, %17, %21 : vector<256x256xi1>, vector<256x256xf32>
    %23 = arith.truncf %22 : vector<256x256xf32> to vector<256x256xbf16>
    %c0_14 = arith.constant 0 : index
    %c0_15 = arith.constant 0 : index
    %24 = vector.load %arg6[%c0_14, %c0_15] : memref<256x128xbf16, #tpu.memory_space<vmem>>, vector<256x128xbf16>
    %cst_16 = arith.constant dense<0.000000e+00> : vector<256x128xf32>
    %25 = tpu.matmul %23, %24, %cst_16 {dimension_numbers = #tpu.dot_dimension_numbers<[1], [0], [0], [1], [0, 0, 1, 1], [], []>} : vector<256x256xbf16>, vector<256x128xbf16>, vector<256x128xf32> -> vector<256x128xf32>
    %c0_17 = arith.constant 0 : index
    %c0_18 = arith.constant 0 : index
    %26 = vector.load %arg7[%c0_17, %c0_18] : memref<1x128xf32, #tpu.memory_space<vmem>>, vector<1x128xf32>
    %27 = vector.broadcast %26 : vector<1x128xf32> to vector<256x128xf32>
    %28 = arith.addf %25, %27 : vector<256x128xf32>
    %cst_19 = arith.constant 0.000000e+00 : f32
    %29 = vector.broadcast %cst_19 : f32 to vector<256x128xf32>
    %30 = arith.cmpf ogt, %28, %29 : vector<256x128xf32>
    %cst_20 = arith.constant 1.000000e-03 : f32
    %31 = vector.broadcast %cst_20 : f32 to vector<256x128xf32>
    %32 = arith.mulf %31, %28 : vector<256x128xf32>
    %33 = arith.select %30, %28, %32 : vector<256x128xi1>, vector<256x128xf32>
    %34 = arith.truncf %33 : vector<256x128xf32> to vector<256x128xbf16>
    %c0_21 = arith.constant 0 : index
    %c0_22 = arith.constant 0 : index
    %35 = vector.load %arg8[%c0_21, %c0_22] : memref<128x128xbf16, #tpu.memory_space<vmem>>, vector<128x128xbf16>
    %cst_23 = arith.constant dense<0.000000e+00> : vector<256x128xf32>
    %36 = tpu.matmul %34, %35, %cst_23 {dimension_numbers = #tpu.dot_dimension_numbers<[1], [0], [0], [1], [0, 0, 1, 1], [], []>} : vector<256x128xbf16>, vector<128x128xbf16>, vector<256x128xf32> -> vector<256x128xf32>
    %c0_24 = arith.constant 0 : index
    %c0_25 = arith.constant 0 : index
    %37 = vector.load %arg9[%c0_24, %c0_25] : memref<1x128xf32, #tpu.memory_space<vmem>>, vector<1x128xf32>
    %38 = vector.broadcast %37 : vector<1x128xf32> to vector<256x128xf32>
    %39 = arith.addf %36, %38 : vector<256x128xf32>
    %cst_26 = arith.constant 0.000000e+00 : f32
    %40 = vector.broadcast %cst_26 : f32 to vector<256x128xf32>
    %41 = arith.subf %40, %39 : vector<256x128xf32>
    %42 = math.exp %41 : vector<256x128xf32>
    %cst_27 = arith.constant 1.000000e+00 : f32
    %43 = vector.broadcast %cst_27 : f32 to vector<256x128xf32>
    %44 = arith.addf %43, %42 : vector<256x128xf32>
    %45 = tpu.reciprocal %44 {approx = true} : vector<256x128xf32> -> vector<256x128xf32>
    %c0_28 = arith.constant 0 : index
    %c0_29 = arith.constant 0 : index
    %46 = vector.load %arg10[%c0_28, %c0_29] : memref<256x128xf32, #tpu.memory_space<vmem>>, vector<256x128xf32>
    tpu.vector_store %arg10[%c0_28, %c0_29], %45 {strides = array<i32>} : memref<256x128xf32, #tpu.memory_space<vmem>>, vector<256x128xf32>,
    return
  }
  func.func @transform_0(%arg0: i32) -> (i32, i32) {
    %c0_i32 = arith.constant 0 : i32
    %c0_i32_0 = arith.constant 0 : i32
    return %arg0, %c0_i32 : i32, i32
  }
  func.func @transform_1(%arg0: i32) -> (i32, i32) {
    %c0_i32 = arith.constant 0 : i32
    %c0_i32_0 = arith.constant 0 : i32
    %c0_i32_1 = arith.constant 0 : i32
    return %c0_i32, %c0_i32_0 : i32, i32
  }
  func.func @transform_2(%arg0: i32) -> (i32, i32) {
    %c0_i32 = arith.constant 0 : i32
    %c0_i32_0 = arith.constant 0 : i32
    %c0_i32_1 = arith.constant 0 : i32
    return %c0_i32, %c0_i32_0 : i32, i32
  }
  func.func @transform_3(%arg0: i32) -> (i32, i32) {
    %c0_i32 = arith.constant 0 : i32
    %c0_i32_0 = arith.constant 0 : i32
    %c0_i32_1 = arith.constant 0 : i32
    return %c0_i32, %c0_i32_0 : i32, i32
  }
  func.func @transform_4(%arg0: i32) -> (i32, i32) {
    %c0_i32 = arith.constant 0 : i32
    %c0_i32_0 = arith.constant 0 : i32
    %c0_i32_1 = arith.constant 0 : i32
    return %c0_i32, %c0_i32_0 : i32, i32
  }
  func.func @transform_5(%arg0: i32) -> (i32, i32) {
    %c0_i32 = arith.constant 0 : i32
    %c0_i32_0 = arith.constant 0 : i32
    %c0_i32_1 = arith.constant 0 : i32
    return %c0_i32, %c0_i32_0 : i32, i32
  }
  func.func @transform_6(%arg0: i32) -> (i32, i32) {
    %c0_i32 = arith.constant 0 : i32
    %c0_i32_0 = arith.constant 0 : i32
    %c0_i32_1 = arith.constant 0 : i32
    return %c0_i32, %c0_i32_0 : i32, i32
  }
  func.func @transform_7(%arg0: i32) -> (i32, i32) {
    %c0_i32 = arith.constant 0 : i32
    %c0_i32_0 = arith.constant 0 : i32
    %c0_i32_1 = arith.constant 0 : i32
    return %c0_i32, %c0_i32_0 : i32, i32
  }
  func.func @transform_8(%arg0: i32) -> (i32, i32) {
    %c0_i32 = arith.constant 0 : i32
    %c0_i32_0 = arith.constant 0 : i32
    %c0_i32_1 = arith.constant 0 : i32
    return %c0_i32, %c0_i32_0 : i32, i32
  }
  func.func @transform_9(%arg0: i32) -> (i32, i32) {
    %c0_i32 = arith.constant 0 : i32
    %c0_i32_0 = arith.constant 0 : i32
    return %arg0, %c0_i32 : i32, i32
  }
}

</mosaic_0001>

<llo_original>
// kernel: discriminator_forward.1
$region0: #{discriminator_forward.1}
  #allocation0 [shape = 'u32[]', space=smem, size = 0x4, offset = 0x4, fixed_abs, tag = 'smem constant byte address 0x4 - core index']
  #allocation1 [shape = 'u32[144,128]{1,0:T(1,128)}', space=vmem, size = 0x12000, scoped, tag = 'internal scratch']
  %s0 = inlined_call_operand.vmem [shape: f32[256,896], index: 0, kind: input, shape index: {}]
  %s1 = inlined_call_operand.vmem [shape: bf16[896,512], index: 1, kind: input, shape index: {}]
  %s2 = inlined_call_operand.vmem [shape: f32[1,512], index: 2, kind: input, shape index: {}]
  %s3 = inlined_call_operand.vmem [shape: bf16[512,256], index: 3, kind: input, shape index: {}]
  %s4 = inlined_call_operand.vmem [shape: f32[1,256], index: 4, kind: input, shape index: {}]
  %s5 = inlined_call_operand.vmem [shape: bf16[256,128], index: 5, kind: input, shape index: {}]
  %s6 = inlined_call_operand.vmem [shape: f32[1,128], index: 6, kind: input, shape index: {}]
  %s7 = inlined_call_operand.vmem [shape: bf16[128,128], index: 7, kind: input, shape index: {}]
  %s8 = inlined_call_operand.vmem [shape: f32[1,128], index: 8, kind: input, shape index: {}]
  %s9 = inlined_call_operand.vmem [shape: f32[256,128], index: 9, kind: output, shape index: {}]
  %s10 = sld [smem:[#allocation0]]
  $region46: #{discriminator_forward.1} parent=0
    _
  %s12 = ssub.s32 1, %s10
  %s13 = scalar_select 0, %s12, %s10
  // Predicated region
  $region2: #{discriminator_forward.1} parent=0 // pred_check
    _
  $region3: #{discriminator_forward.1} parent=0 // pred_check_branch
    %15 = sbr.rel (0) target = $region5
  $region4: #{discriminator_forward.1} parent=0 // pred_region
    _
  $region5: #{discriminator_forward.1} parent=0 // pred_fallthru
    _
  // Predicated region
  $region6: #{discriminator_forward.1} parent=0 // pred_check
    _
  $region7: #{discriminator_forward.1} parent=0 // pred_check_branch
    %17 = sbr.rel (0) target = $region9
  $region8: #{discriminator_forward.1} parent=0 // pred_region
    _
  $region9: #{discriminator_forward.1} parent=0 // pred_fallthru
    _
  // Predicated region
  $region10: #{discriminator_forward.1} parent=0 // pred_check
    _
  $region11: #{discriminator_forward.1} parent=0 // pred_check_branch
    %19 = sbr.rel (0) target = $region13
  $region12: #{discriminator_forward.1} parent=0 // pred_region
    _
  $region13: #{discriminator_forward.1} parent=0 // pred_fallthru
    _
  // Predicated region
  $region14: #{discriminator_forward.1} parent=0 // pred_check
    _
  $region15: #{discriminator_forward.1} parent=0 // pred_check_branch
    %21 = sbr.rel (0) target = $region17
  $region16: #{discriminator_forward.1} parent=0 // pred_region
    _
  $region17: #{discriminator_forward.1} parent=0 // pred_fallthru
    _
  // Predicated region
  $region18: #{discriminator_forward.1} parent=0 // pred_check
    _
  $region19: #{discriminator_forward.1} parent=0 // pred_check_branch
    %23 = sbr.rel (0) target = $region21
  $region20: #{discriminator_forward.1} parent=0 // pred_region
    _
  $region21: #{discriminator_forward.1} parent=0 // pred_fallthru
    _
  // Predicated region
  $region22: #{discriminator_forward.1} parent=0 // pred_check
    _
  $region23: #{discriminator_forward.1} parent=0 // pred_check_branch
    %25 = sbr.rel (0) target = $region25
  $region24: #{discriminator_forward.1} parent=0 // pred_region
    _
  $region25: #{discriminator_forward.1} parent=0 // pred_fallthru
    _
  // Predicated region
  $region26: #{discriminator_forward.1} parent=0 // pred_check
    _
  $region27: #{discriminator_forward.1} parent=0 // pred_check_branch
    %27 = sbr.rel (0) target = $region29
  $region28: #{discriminator_forward.1} parent=0 // pred_region
    _
  $region29: #{discriminator_forward.1} parent=0 // pred_fallthru
    _
  // Predicated region
  $region30: #{discriminator_forward.1} parent=0 // pred_check
    _
  $region31: #{discriminator_forward.1} parent=0 // pred_check_branch
    %29 = sbr.rel (0) target = $region33
  $region32: #{discriminator_forward.1} parent=0 // pred_region
    _
  $region33: #{discriminator_forward.1} parent=0 // pred_fallthru
    _
  // Predicated region
  $region34: #{discriminator_forward.1} parent=0 // pred_check
    _
  $region35: #{discriminator_forward.1} parent=0 // pred_check_branch
    %31 = sbr.rel (0) target = $region37
  $region36: #{discriminator_forward.1} parent=0 // pred_region
    _
  $region37: #{discriminator_forward.1} parent=0 // pred_fallthru
    _
  %v33 = vld [vmem:[%s0] sm:$0xff]
  %v34 = vld [vmem:[%s0 + $0x8] sm:$0xff]
  %v35 = vld [vmem:[%s0 + $0x10] sm:$0xff]
  %v36 = vld [vmem:[%s0 + $0x18] sm:$0xff]
  %v37 = vld [vmem:[%s0 + $0x20] sm:$0xff]
  %v38 = vld [vmem:[%s0 + $0x28] sm:$0xff]
  %v39 = vld [vmem:[%s0 + $0x30] sm:$0xff]
  %v40 = vld [vmem:[%s0 + $0x38] sm:$0xff]
  %v41 = vld [vmem:[%s0 + $0x40] sm:$0xff]
  %v42 = vld [vmem:[%s0 + $0x48] sm:$0xff]
  %v43 = vld [vmem:[%s0 + $0x50] sm:$0xff]
  %v44 = vld [vmem:[%s0 + $0x58] sm:$0xff]
  %v45 = vld [vmem:[%s0 + $0x60] sm:$0xff]
  %v46 = vld [vmem:[%s0 + $0x68] sm:$0xff]
  %v47 = vld [vmem:[%s0 + $0x70] sm:$0xff]
  %v48 = vld [vmem:[%s0 + $0x78] sm:$0xff]
  %v49 = vld [vmem:[%s0 + $0x80] sm:$0xff]
  %v50 = vld [vmem:[%s0 + $0x88] sm:$0xff]
  %v51 = vld [vmem:[%s0 + $0x90] sm:$0xff]
  %v52 = vld [vmem:[%s0 + $0x98] sm:$0xff]
  %v53 = vld [vmem:[%s0 + $0xa0] sm:$0xff]
  %v54 = vld [vmem:[%s0 + $0xa8] sm:$0xff]
  %v55 = vld [vmem:[%s0 + $0xb0] sm:$0xff]
  %v56 = vld [vmem:[%s0 + $0xb8] sm:$0xff]
  %v57 = vld [vmem:[%s0 + $0xc0] sm:$0xff]
  %v58 = vld [vmem:[%s0 + $0xc8] sm:$0xff]
  %v59 = vld [vmem:[%s0 + $0xd0] sm:$0xff]
  %v60 = vld [vmem:[%s0 + $0xd8] sm:$0xff]
  %v61 = vld [vmem:[%s0 + $0xe0] sm:$0xff]
  %v62 = vld [vmem:[%s0 + $0xe8] sm:$0xff]
  %v63 = vld [vmem:[%s0 + $0xf0] sm:$0xff]
  %v64 = vld [vmem:[%s0 + $0xf8] sm:$0xff]
  %v65 = vld [vmem:[%s0 + $0x100] sm:$0xff]
  %v66 = vld [vmem:[%s0 + $0x108] sm:$0xff]
  %v67 = vld [vmem:[%s0 + $0x110] sm:$0xff]
  %v68 = vld [vmem:[%s0 + $0x118] sm:$0xff]
  %v69 = vld [vmem:[%s0 + $0x120] sm:$0xff]
  %v70 = vld [vmem:[%s0 + $0x128] sm:$0xff]
  %v71 = vld [vmem:[%s0 + $0x130] sm:$0xff]
  %v72 = vld [vmem:[%s0 + $0x138] sm:$0xff]
  %v73 = vld [vmem:[%s0 + $0x140] sm:$0xff]
  %v74 = vld [vmem:[%s0 + $0x148] sm:$0xff]
  %v75 = vld [vmem:[%s0 + $0x150] sm:$0xff]
  %v76 = vld [vmem:[%s0 + $0x158] sm:$0xff]
  %v77 = vld [vmem:[%s0 + $0x160] sm:$0xff]
  %v78 = vld [vmem:[%s0 + $0x168] sm:$0xff]
  %v79 = vld [vmem:[%s0 + $0x170] sm:$0xff]
  %v80 = vld [vmem:[%s0 + $0x178] sm:$0xff]
  %v81 = vld [vmem:[%s0 + $0x180] sm:$0xff]
  %v82 = vld [vmem:[%s0 + $0x188] sm:$0xff]
  %v83 = vld [vmem:[%s0 + $0x190] sm:$0xff]
  %v84 = vld [vmem:[%s0 + $0x198] sm:$0xff]
  %v85 = vld [vmem:[%s0 + $0x1a0] sm:$0xff]
  %v86 = vld [vmem:[%s0 + $0x1a8] sm:$0xff]
  %v87 = vld [vmem:[%s0 + $0x1b0] sm:$0xff]
  %v88 = vld [vmem:[%s0 + $0x1b8] sm:$0xff]
  %v89 = vld [vmem:[%s0 + $0x1c0] sm:$0xff]
  %v90 = vld [vmem:[%s0 + $0x1c8] sm:$0xff]
  %v91 = vld [vmem:[%s0 + $0x1d0] sm:$0xff]
  %v92 = vld [vmem:[%s0 + $0x1d8] sm:$0xff]
  %v93 = vld [vmem:[%s0 + $0x1e0] sm:$0xff]
  %v94 = vld [vmem:[%s0 + $0x1e8] sm:$0xff]
  %v95 = vld [vmem:[%s0 + $0x1f0] sm:$0xff]
  %v96 = vld [vmem:[%s0 + $0x1f8] sm:$0xff]
  %v97 = vld [vmem:[%s0 + $0x200] sm:$0xff]
  %v98 = vld [vmem:[%s0 + $0x208] sm:$0xff]
  %v99 = vld [vmem:[%s0 + $0x210] sm:$0xff]
  %v100 = vld [vmem:[%s0 + $0x218] sm:$0xff]
  %v101 = vld [vmem:[%s0 + $0x220] sm:$0xff]
  %v102 = vld [vmem:[%s0 + $0x228] sm:$0xff]
  %v103 = vld [vmem:[%s0 + $0x230] sm:$0xff]
  %v104 = vld [vmem:[%s0 + $0x238] sm:$0xff]
  %v105 = vld [vmem:[%s0 + $0x240] sm:$0xff]
  %v106 = vld [vmem:[%s0 + $0x248] sm:$0xff]
  %v107 = vld [vmem:[%s0 + $0x250] sm:$0xff]
  %v108 = vld [vmem:[%s0 + $0x258] sm:$0xff]
  %v109 = vld [vmem:[%s0 + $0x260] sm:$0xff]
  %v110 = vld [vmem:[%s0 + $0x268] sm:$0xff]
  %v111 = vld [vmem:[%s0 + $0x270] sm:$0xff]
  %v112 = vld [vmem:[%s0 + $0x278] sm:$0xff]
  %v113 = vld [vmem:[%s0 + $0x280] sm:$0xff]
  %v114 = vld [vmem:[%s0 + $0x288] sm:$0xff]
  %v115 = vld [vmem:[%s0 + $0x290] sm:$0xff]
  %v116 = vld [vmem:[%s0 + $0x298] sm:$0xff]
  %v117 = vld [vmem:[%s0 + $0x2a0] sm:$0xff]
  %v118 = vld [vmem:[%s0 + $0x2a8] sm:$0xff]
  %v119 = vld [vmem:[%s0 + $0x2b0] sm:$0xff]
  %v120 = vld [vmem:[%s0 + $0x2b8] sm:$0xff]
  %v121 = vld [vmem:[%s0 + $0x2c0] sm:$0xff]
  %v122 = vld [vmem:[%s0 + $0x2c8] sm:$0xff]
  %v123 = vld [vmem:[%s0 + $0x2d0] sm:$0xff]
  %v124 = vld [vmem:[%s0 + $0x2d8] sm:$0xff]
  %v125 = vld [vmem:[%s0 + $0x2e0] sm:$0xff]
  %v126 = vld [vmem:[%s0 + $0x2e8] sm:$0xff]
  %v127 = vld [vmem:[%s0 + $0x2f0] sm:$0xff]
  %v128 = vld [vmem:[%s0 + $0x2f8] sm:$0xff]
  %v129 = vld [vmem:[%s0 + $0x300] sm:$0xff]
  %v130 = vld [vmem:[%s0 + $0x308] sm:$0xff]
  %v131 = vld [vmem:[%s0 + $0x310] sm:$0xff]
  %v132 = vld [vmem:[%s0 + $0x318] sm:$0xff]
  %v133 = vld [vmem:[%s0 + $0x320] sm:$0xff]
  %v134 = vld [vmem:[%s0 + $0x328] sm:$0xff]
  %v135 = vld [vmem:[%s0 + $0x330] sm:$0xff]
  %v136 = vld [vmem:[%s0 + $0x338] sm:$0xff]
  %v137 = vld [vmem:[%s0 + $0x340] sm:$0xff]
  %v138 = vld [vmem:[%s0 + $0x348] sm:$0xff]
  %v139 = vld [vmem:[%s0 + $0x350] sm:$0xff]
  %v140 = vld [vmem:[%s0 + $0x358] sm:$0xff]
  %v141 = vld [vmem:[%s0 + $0x360] sm:$0xff]
  %v142 = vld [vmem:[%s0 + $0x368] sm:$0xff]
  %v143 = vld [vmem:[%s0 + $0x370] sm:$0xff]
  %v144 = vld [vmem:[%s0 + $0x378] sm:$0xff]
  %v145 = vld [vmem:[%s0 + $0x380] sm:$0xff]
  %v146 = vld [vmem:[%s0 + $0x388] sm:$0xff]
  %v147 = vld [vmem:[%s0 + $0x390] sm:$0xff]
  %v148 = vld [vmem:[%s0 + $0x398] sm:$0xff]
  %v149 = vld [vmem:[%s0 + $0x3a0] sm:$0xff]
  %v150 = vld [vmem:[%s0 + $0x3a8] sm:$0xff]
  %v151 = vld [vmem:[%s0 + $0x3b0] sm:$0xff]
  %v152 = vld [vmem:[%s0 + $0x3b8] sm:$0xff]
  %v153 = vld [vmem:[%s0 + $0x3c0] sm:$0xff]
  %v154 = vld [vmem:[%s0 + $0x3c8] sm:$0xff]
  %v155 = vld [vmem:[%s0 + $0x3d0] sm:$0xff]
  %v156 = vld [vmem:[%s0 + $0x3d8] sm:$0xff]
  %v157 = vld [vmem:[%s0 + $0x3e0] sm:$0xff]
  %v158 = vld [vmem:[%s0 + $0x3e8] sm:$0xff]
  %v159 = vld [vmem:[%s0 + $0x3f0] sm:$0xff]
  %v160 = vld [vmem:[%s0 + $0x3f8] sm:$0xff]
  %v161 = vld [vmem:[%s0 + $0x400] sm:$0xff]
  %v162 = vld [vmem:[%s0 + $0x408] sm:$0xff]
  %v163 = vld [vmem:[%s0 + $0x410] sm:$0xff]
  %v164 = vld [vmem:[%s0 + $0x418] sm:$0xff]
  %v165 = vld [vmem:[%s0 + $0x420] sm:$0xff]
  %v166 = vld [vmem:[%s0 + $0x428] sm:$0xff]
  %v167 = vld [vmem:[%s0 + $0x430] sm:$0xff]
  %v168 = vld [vmem:[%s0 + $0x438] sm:$0xff]
  %v169 = vld [vmem:[%s0 + $0x440] sm:$0xff]
  %v170 = vld [vmem:[%s0 + $0x448] sm:$0xff]
  %v171 = vld [vmem:[%s0 + $0x450] sm:$0xff]
  %v172 = vld [vmem:[%s0 + $0x458] sm:$0xff]
  %v173 = vld [vmem:[%s0 + $0x460] sm:$0xff]
  %v174 = vld [vmem:[%s0 + $0x468] sm:$0xff]
  %v175 = vld [vmem:[%s0 + $0x470] sm:$0xff]
  %v176 = vld [vmem:[%s0 + $0x478] sm:$0xff]
  %v177 = vld [vmem:[%s0 + $0x480] sm:$0xff]
  %v178 = vld [vmem:[%s0 + $0x488] sm:$0xff]
  %v179 = vld [vmem:[%s0 + $0x490] sm:$0xff]
  %v180 = vld [vmem:[%s0 + $0x498] sm:$0xff]
  %v181 = vld [vmem:[%s0 + $0x4a0] sm:$0xff]
  %v182 = vld [vmem:[%s0 + $0x4a8] sm:$0xff]
  %v183 = vld [vmem:[%s0 + $0x4b0] sm:$0xff]
  %v184 = vld [vmem:[%s0 + $0x4b8] sm:$0xff]
  %v185 = vld [vmem:[%s0 + $0x4c0] sm:$0xff]
  %v186 = vld [vmem:[%s0 + $0x4c8] sm:$0xff]
  %v187 = vld [vmem:[%s0 + $0x4d0] sm:$0xff]
  %v188 = vld [vmem:[%s0 + $0x4d8] sm:$0xff]
  %v189 = vld [vmem:[%s0 + $0x4e0] sm:$0xff]
  %v190 = vld [vmem:[%s0 + $0x4e8] sm:$0xff]
  %v191 = vld [vmem:[%s0 + $0x4f0] sm:$0xff]
  %v192 = vld [vmem:[%s0 + $0x4f8] sm:$0xff]
  %v193 = vld [vmem:[%s0 + $0x500] sm:$0xff]
  %v194 = vld [vmem:[%s0 + $0x508] sm:$0xff]
  %v195 = vld [vmem:[%s0 + $0x510] sm:$0xff]
  %v196 = vld [vmem:[%s0 + $0x518] sm:$0xff]
  %v197 = vld [vmem:[%s0 + $0x520] sm:$0xff]
  %v198 = vld [vmem:[%s0 + $0x528] sm:$0xff]
  %v199 = vld [vmem:[%s0 + $0x530] sm:$0xff]
  %v200 = vld [vmem:[%s0 + $0x538] sm:$0xff]
  %v201 = vld [vmem:[%s0 + $0x540] sm:$0xff]
  %v202 = vld [vmem:[%s0 + $0x548] sm:$0xff]
  %v203 = vld [vmem:[%s0 + $0x550] sm:$0xff]
  %v204 = vld [vmem:[%s0 + $0x558] sm:$0xff]
  %v205 = vld [vmem:[%s0 + $0x560] sm:$0xff]
  %v206 = vld [vmem:[%s0 + $0x568] sm:$0xff]
  %v207 = vld [vmem:[%s0 + $0x570] sm:$0xff]
  %v208 = vld [vmem:[%s0 + $0x578] sm:$0xff]
  %v209 = vld [vmem:[%s0 + $0x580] sm:$0xff]
  %v210 = vld [vmem:[%s0 + $0x588] sm:$0xff]
  %v211 = vld [vmem:[%s0 + $0x590] sm:$0xff]
  %v212 = vld [vmem:[%s0 + $0x598] sm:$0xff]
  %v213 = vld [vmem:[%s0 + $0x5a0] sm:$0xff]
  %v214 = vld [vmem:[%s0 + $0x5a8] sm:$0xff]
  %v215 = vld [vmem:[%s0 + $0x5b0] sm:$0xff]
  %v216 = vld [vmem:[%s0 + $0x5b8] sm:$0xff]
  %v217 = vld [vmem:[%s0 + $0x5c0] sm:$0xff]
  %v218 = vld [vmem:[%s0 + $0x5c8] sm:$0xff]
  %v219 = vld [vmem:[%s0 + $0x5d0] sm:$0xff]
  %v220 = vld [vmem:[%s0 + $0x5d8] sm:$0xff]
  %v221 = vld [vmem:[%s0 + $0x5e0] sm:$0xff]
  %v222 = vld [vmem:[%s0 + $0x5e8] sm:$0xff]
  %v223 = vld [vmem:[%s0 + $0x5f0] sm:$0xff]
  %v224 = vld [vmem:[%s0 + $0x5f8] sm:$0xff]
  %v225 = vld [vmem:[%s0 + $0x600] sm:$0xff]
  %v226 = vld [vmem:[%s0 + $0x608] sm:$0xff]
  %v227 = vld [vmem:[%s0 + $0x610] sm:$0xff]
  %v228 = vld [vmem:[%s0 + $0x618] sm:$0xff]
  %v229 = vld [vmem:[%s0 + $0x620] sm:$0xff]
  %v230 = vld [vmem:[%s0 + $0x628] sm:$0xff]
  %v231 = vld [vmem:[%s0 + $0x630] sm:$0xff]
  %v232 = vld [vmem:[%s0 + $0x638] sm:$0xff]
  %v233 = vld [vmem:[%s0 + $0x640] sm:$0xff]
  %v234 = vld [vmem:[%s0 + $0x648] sm:$0xff]
  %v235 = vld [vmem:[%s0 + $0x650] sm:$0xff]
  %v236 = vld [vmem:[%s0 + $0x658] sm:$0xff]
  %v237 = vld [vmem:[%s0 + $0x660] sm:$0xff]
  %v238 = vld [vmem:[%s0 + $0x668] sm:$0xff]
  %v239 = vld [vmem:[%s0 + $0x670] sm:$0xff]
  %v240 = vld [vmem:[%s0 + $0x678] sm:$0xff]
  %v241 = vld [vmem:[%s0 + $0x680] sm:$0xff]
  %v242 = vld [vmem:[%s0 + $0x688] sm:$0xff]
  %v243 = vld [vmem:[%s0 + $0x690] sm:$0xff]
  %v244 = vld [vmem:[%s0 + $0x698] sm:$0xff]
  %v245 = vld [vmem:[%s0 + $0x6a0] sm:$0xff]
  %v246 = vld [vmem:[%s0 + $0x6a8] sm:$0xff]
  %v247 = vld [vmem:[%s0 + $0x6b0] sm:$0xff]
  %v248 = vld [vmem:[%s0 + $0x6b8] sm:$0xff]
  %v249 = vld [vmem:[%s0 + $0x6c0] sm:$0xff]
  %v250 = vld [vmem:[%s0 + $0x6c8] sm:$0xff]
  %v251 = vld [vmem:[%s0 + $0x6d0] sm:$0xff]
  %v252 = vld [vmem:[%s0 + $0x6d8] sm:$0xff]
  %v253 = vld [vmem:[%s0 + $0x6e0] sm:$0xff]
  %v254 = vld [vmem:[%s0 + $0x6e8] sm:$0xff]
  %v255 = vld [vmem:[%s0 + $0x6f0] sm:$0xff]
  %v256 = vld [vmem:[%s0 + $0x6f8] sm:$0xff]
  %v257 = vpack.c.bf16 %v40, %v33
  %v258 = vpack.c.bf16 %v41, %v34
  %v259 = vpack.c.bf16 %v42, %v35
  %v260 = vpack.c.bf16 %v43, %v36
  %v261 = vpack.c.bf16 %v44, %v37
  %v262 = vpack.c.bf16 %v45, %v38
  %v263 = vpack.c.bf16 %v46, %v39
  %v264 = vpack.c.bf16 %v54, %v47
  %v265 = vpack.c.bf16 %v55, %v48
  %v266 = vpack.c.bf16 %v56, %v49
  %v267 = vpack.c.bf16 %v57, %v50
  %v268 = vpack.c.bf16 %v58, %v51
  %v269 = vpack.c.bf16 %v59, %v52
  %v270 = vpack.c.bf16 %v60, %v53
  %v271 = vpack.c.bf16 %v68, %v61
  %v272 = vpack.c.bf16 %v69, %v62
  %v273 = vpack.c.bf16 %v70, %v63
  %v274 = vpack.c.bf16 %v71, %v64
  %v275 = vpack.c.bf16 %v72, %v65
  %v276 = vpack.c.bf16 %v73, %v66
  %v277 = vpack.c.bf16 %v74, %v67
  %v278 = vpack.c.bf16 %v82, %v75
  %v279 = vpack.c.bf16 %v83, %v76
  %v280 = vpack.c.bf16 %v84, %v77
  %v281 = vpack.c.bf16 %v85, %v78
  %v282 = vpack.c.bf16 %v86, %v79
  %v283 = vpack.c.bf16 %v87, %v80
  %v284 = vpack.c.bf16 %v88, %v81
  %v285 = vpack.c.bf16 %v96, %v89
  %v286 = vpack.c.bf16 %v97, %v90
  %v287 = vpack.c.bf16 %v98, %v91
  %v288 = vpack.c.bf16 %v99, %v92
  %v289 = vpack.c.bf16 %v100, %v93
  %v290 = vpack.c.bf16 %v101, %v94
  %v291 = vpack.c.bf16 %v102, %v95
  %v292 = vpack.c.bf16 %v110, %v103
  %v293 = vpack.c.bf16 %v111, %v104
  %v294 = vpack.c.bf16 %v112, %v105
  %v295 = vpack.c.bf16 %v113, %v106
  %v296 = vpack.c.bf16 %v114, %v107
  %v297 = vpack.c.bf16 %v115, %v108
  %v298 = vpack.c.bf16 %v116, %v109
  %v299 = vpack.c.bf16 %v124, %v117
  %v300 = vpack.c.bf16 %v125, %v118
  %v301 = vpack.c.bf16 %v126, %v119
  %v302 = vpack.c.bf16 %v127, %v120
  %v303 = vpack.c.bf16 %v128, %v121
  %v304 = vpack.c.bf16 %v129, %v122
  %v305 = vpack.c.bf16 %v130, %v123
  %v306 = vpack.c.bf16 %v138, %v131
  %v307 = vpack.c.bf16 %v139, %v132
  %v308 = vpack.c.bf16 %v140, %v133
  %v309 = vpack.c.bf16 %v141, %v134
  %v310 = vpack.c.bf16 %v142, %v135
  %v311 = vpack.c.bf16 %v143, %v136
  %v312 = vpack.c.bf16 %v144, %v137
  %v313 = vpack.c.bf16 %v152, %v145
  %v314 = vpack.c.bf16 %v153, %v146
  %v315 = vpack.c.bf16 %v154, %v147
  %v316 = vpack.c.bf16 %v155, %v148
  %v317 = vpack.c.bf16 %v156, %v149
  %v318 = vpack.c.bf16 %v157, %v150
  %v319 = vpack.c.bf16 %v158, %v151
  %v320 = vpack.c.bf16 %v166, %v159
  %v321 = vpack.c.bf16 %v167, %v160
  %v322 = vpack.c.bf16 %v168, %v161
  %v323 = vpack.c.bf16 %v169, %v162
  %v324 = vpack.c.bf16 %v170, %v163
  %v325 = vpack.c.bf16 %v171, %v164
  %v326 = vpack.c.bf16 %v172, %v165
  %v327 = vpack.c.bf16 %v180, %v173
  %v328 = vpack.c.bf16 %v181, %v174
  %v329 = vpack.c.bf16 %v182, %v175
  %v330 = vpack.c.bf16 %v183, %v176
  %v331 = vpack.c.bf16 %v184, %v177
  %v332 = vpack.c.bf16 %v185, %v178
  %v333 = vpack.c.bf16 %v186, %v179
  %v334 = vpack.c.bf16 %v194, %v187
  %v335 = vpack.c.bf16 %v195, %v188
  %v336 = vpack.c.bf16 %v196, %v189
  %v337 = vpack.c.bf16 %v197, %v190
  %v338 = vpack.c.bf16 %v198, %v191
  %v339 = vpack.c.bf16 %v199, %v192
  %v340 = vpack.c.bf16 %v200, %v193
  %v341 = vpack.c.bf16 %v208, %v201
  %v342 = vpack.c.bf16 %v209, %v202
  %v343 = vpack.c.bf16 %v210, %v203
  %v344 = vpack.c.bf16 %v211, %v204
  %v345 = vpack.c.bf16 %v212, %v205
  %v346 = vpack.c.bf16 %v213, %v206
  %v347 = vpack.c.bf16 %v214, %v207
  %v348 = vpack.c.bf16 %v222, %v215
  %v349 = vpack.c.bf16 %v223, %v216
  %v350 = vpack.c.bf16 %v224, %v217
  %v351 = vpack.c.bf16 %v225, %v218
  %v352 = vpack.c.bf16 %v226, %v219
  %v353 = vpack.c.bf16 %v227, %v220
  %v354 = vpack.c.bf16 %v228, %v221
  %v355 = vpack.c.bf16 %v236, %v229
  %v356 = vpack.c.bf16 %v237, %v230
  %v357 = vpack.c.bf16 %v238, %v231
  %v358 = vpack.c.bf16 %v239, %v232
  %v359 = vpack.c.bf16 %v240, %v233
  %v360 = vpack.c.bf16 %v241, %v234
  %v361 = vpack.c.bf16 %v242, %v235
  %v362 = vpack.c.bf16 %v250, %v243
  %v363 = vpack.c.bf16 %v251, %v244
  %v364 = vpack.c.bf16 %v252, %v245
  %v365 = vpack.c.bf16 %v253, %v246
  %v366 = vpack.c.bf16 %v254, %v247
  %v367 = vpack.c.bf16 %v255, %v248
  %v368 = vpack.c.bf16 %v256, %v249
  %v369 = vld [vmem:[%s1] sm:$0xff]
  %v370 = vld [vmem:[%s1 + $0x8] sm:$0xff]
  %v371 = vld [vmem:[%s1 + $0x10] sm:$0xff]
  %v372 = vld [vmem:[%s1 + $0x18] sm:$0xff]
  %v373 = vld [vmem:[%s1 + $0x20] sm:$0xff]
  %v374 = vld [vmem:[%s1 + $0x28] sm:$0xff]
  %v375 = vld [vmem:[%s1 + $0x30] sm:$0xff]
  %v376 = vld [vmem:[%s1 + $0x38] sm:$0xff]
  %v377 = vld [vmem:[%s1 + $0x40] sm:$0xff]
  %v378 = vld [vmem:[%s1 + $0x48] sm:$0xff]
  %v379 = vld [vmem:[%s1 + $0x50] sm:$0xff]
  %v380 = vld [vmem:[%s1 + $0x58] sm:$0xff]
  %v381 = vld [vmem:[%s1 + $0x60] sm:$0xff]
  %v382 = vld [vmem:[%s1 + $0x68] sm:$0xff]
  %v383 = vld [vmem:[%s1 + $0x70] sm:$0xff]
  %v384 = vld [vmem:[%s1 + $0x78] sm:$0xff]
  %v385 = vld [vmem:[%s1 + $0x80] sm:$0xff]
  %v386 = vld [vmem:[%s1 + $0x88] sm:$0xff]
  %v387 = vld [vmem:[%s1 + $0x90] sm:$0xff]
  %v388 = vld [vmem:[%s1 + $0x98] sm:$0xff]
  %v389 = vld [vmem:[%s1 + $0xa0] sm:$0xff]
  %v390 = vld [vmem:[%s1 + $0xa8] sm:$0xff]
  %v391 = vld [vmem:[%s1 + $0xb0] sm:$0xff]
  %v392 = vld [vmem:[%s1 + $0xb8] sm:$0xff]
  %v393 = vld [vmem:[%s1 + $0xc0] sm:$0xff]
  %v394 = vld [vmem:[%s1 + $0xc8] sm:$0xff]
  %v395 = vld [vmem:[%s1 + $0xd0] sm:$0xff]
  %v396 = vld [vmem:[%s1 + $0xd8] sm:$0xff]
  %v397 = vld [vmem:[%s1 + $0xe0] sm:$0xff]
  %v398 = vld [vmem:[%s1 + $0xe8] sm:$0xff]
  %v399 = vld [vmem:[%s1 + $0xf0] sm:$0xff]
  %v400 = vld [vmem:[%s1 + $0xf8] sm:$0xff]
  %v401 = vld [vmem:[%s1 + $0x100] sm:$0xff]
  %v402 = vld [vmem:[%s1 + $0x108] sm:$0xff]
  %v403 = vld [vmem:[%s1 + $0x110] sm:$0xff]
  %v404 = vld [vmem:[%s1 + $0x118] sm:$0xff]
  %v405 = vld [vmem:[%s1 + $0x120] sm:$0xff]
  %v406 = vld [vmem:[%s1 + $0x128] sm:$0xff]
  %v407 = vld [vmem:[%s1 + $0x130] sm:$0xff]
  %v408 = vld [vmem:[%s1 + $0x138] sm:$0xff]
  %v409 = vld [vmem:[%s1 + $0x140] sm:$0xff]
  %v410 = vld [vmem:[%s1 + $0x148] sm:$0xff]
  %v411 = vld [vmem:[%s1 + $0x150] sm:$0xff]
  %v412 = vld [vmem:[%s1 + $0x158] sm:$0xff]
  %v413 = vld [vmem:[%s1 + $0x160] sm:$0xff]
  %v414 = vld [vmem:[%s1 + $0x168] sm:$0xff]
  %v415 = vld [vmem:[%s1 + $0x170] sm:$0xff]
  %v416 = vld [vmem:[%s1 + $0x178] sm:$0xff]
  %v417 = vld [vmem:[%s1 + $0x180] sm:$0xff]
  %v418 = vld [vmem:[%s1 + $0x188] sm:$0xff]
  %v419 = vld [vmem:[%s1 + $0x190] sm:$0xff]
  %v420 = vld [vmem:[%s1 + $0x198] sm:$0xff]
  %v421 = vld [vmem:[%s1 + $0x1a0] sm:$0xff]
  %v422 = vld [vmem:[%s1 + $0x1a8] sm:$0xff]
  %v423 = vld [vmem:[%s1 + $0x1b0] sm:$0xff]
  %v424 = vld [vmem:[%s1 + $0x1b8] sm:$0xff]
  %v425 = vld [vmem:[%s1 + $0x1c0] sm:$0xff]
  %v426 = vld [vmem:[%s1 + $0x1c8] sm:$0xff]
  %v427 = vld [vmem:[%s1 + $0x1d0] sm:$0xff]
  %v428 = vld [vmem:[%s1 + $0x1d8] sm:$0xff]
  %v429 = vld [vmem:[%s1 + $0x1e0] sm:$0xff]
  %v430 = vld [vmem:[%s1 + $0x1e8] sm:$0xff]
  %v431 = vld [vmem:[%s1 + $0x1f0] sm:$0xff]
  %v432 = vld [vmem:[%s1 + $0x1f8] sm:$0xff]
  %v433 = vld [vmem:[%s1 + $0x200] sm:$0xff]
  %v434 = vld [vmem:[%s1 + $0x208] sm:$0xff]
  %v435 = vld [vmem:[%s1 + $0x210] sm:$0xff]
  %v436 = vld [vmem:[%s1 + $0x218] sm:$0xff]
  %v437 = vld [vmem:[%s1 + $0x220] sm:$0xff]
  %v438 = vld [vmem:[%s1 + $0x228] sm:$0xff]
  %v439 = vld [vmem:[%s1 + $0x230] sm:$0xff]
  %v440 = vld [vmem:[%s1 + $0x238] sm:$0xff]
  %v441 = vld [vmem:[%s1 + $0x240] sm:$0xff]
  %v442 = vld [vmem:[%s1 + $0x248] sm:$0xff]
  %v443 = vld [vmem:[%s1 + $0x250] sm:$0xff]
  %v444 = vld [vmem:[%s1 + $0x258] sm:$0xff]
  %v445 = vld [vmem:[%s1 + $0x260] sm:$0xff]
  %v446 = vld [vmem:[%s1 + $0x268] sm:$0xff]
  %v447 = vld [vmem:[%s1 + $0x270] sm:$0xff]
  %v448 = vld [vmem:[%s1 + $0x278] sm:$0xff]
  %v449 = vld [vmem:[%s1 + $0x280] sm:$0xff]
  %v450 = vld [vmem:[%s1 + $0x288] sm:$0xff]
  %v451 = vld [vmem:[%s1 + $0x290] sm:$0xff]
  %v452 = vld [vmem:[%s1 + $0x298] sm:$0xff]
  %v453 = vld [vmem:[%s1 + $0x2a0] sm:$0xff]
  %v454 = vld [vmem:[%s1 + $0x2a8] sm:$0xff]
  %v455 = vld [vmem:[%s1 + $0x2b0] sm:$0xff]
  %v456 = vld [vmem:[%s1 + $0x2b8] sm:$0xff]
  %v457 = vld [vmem:[%s1 + $0x2c0] sm:$0xff]
  %v458 = vld [vmem:[%s1 + $0x2c8] sm:$0xff]
  %v459 = vld [vmem:[%s1 + $0x2d0] sm:$0xff]
  %v460 = vld [vmem:[%s1 + $0x2d8] sm:$0xff]
  %v461 = vld [vmem:[%s1 + $0x2e0] sm:$0xff]
  %v462 = vld [vmem:[%s1 + $0x2e8] sm:$0xff]
  %v463 = vld [vmem:[%s1 + $0x2f0] sm:$0xff]
  %v464 = vld [vmem:[%s1 + $0x2f8] sm:$0xff]
  %v465 = vld [vmem:[%s1 + $0x300] sm:$0xff]
  %v466 = vld [vmem:[%s1 + $0x308] sm:$0xff]
  %v467 = vld [vmem:[%s1 + $0x310] sm:$0xff]
  %v468 = vld [vmem:[%s1 + $0x318] sm:$0xff]
  %v469 = vld [vmem:[%s1 + $0x320] sm:$0xff]
  %v470 = vld [vmem:[%s1 + $0x328] sm:$0xff]
  %v471 = vld [vmem:[%s1 + $0x330] sm:$0xff]
  %v472 = vld [vmem:[%s1 + $0x338] sm:$0xff]
  %v473 = vld [vmem:[%s1 + $0x340] sm:$0xff]
  %v474 = vld [vmem:[%s1 + $0x348] sm:$0xff]
  %v475 = vld [vmem:[%s1 + $0x350] sm:$0xff]
  %v476 = vld [vmem:[%s1 + $0x358] sm:$0xff]
  %v477 = vld [vmem:[%s1 + $0x360] sm:$0xff]
  %v478 = vld [vmem:[%s1 + $0x368] sm:$0xff]
  %v479 = vld [vmem:[%s1 + $0x370] sm:$0xff]
  %v480 = vld [vmem:[%s1 + $0x378] sm:$0xff]
  %v481 = vld [vmem:[%s1 + $0x380] sm:$0xff]
  %v482 = vld [vmem:[%s1 + $0x388] sm:$0xff]
  %v483 = vld [vmem:[%s1 + $0x390] sm:$0xff]
  %v484 = vld [vmem:[%s1 + $0x398] sm:$0xff]
  %v485 = vld [vmem:[%s1 + $0x3a0] sm:$0xff]
  %v486 = vld [vmem:[%s1 + $0x3a8] sm:$0xff]
  %v487 = vld [vmem:[%s1 + $0x3b0] sm:$0xff]
  %v488 = vld [vmem:[%s1 + $0x3b8] sm:$0xff]
  %v489 = vld [vmem:[%s1 + $0x3c0] sm:$0xff]
  %v490 = vld [vmem:[%s1 + $0x3c8] sm:$0xff]
  %v491 = vld [vmem:[%s1 + $0x3d0] sm:$0xff]
  %v492 = vld [vmem:[%s1 + $0x3d8] sm:$0xff]
  %v493 = vld [vmem:[%s1 + $0x3e0] sm:$0xff]
  %v494 = vld [vmem:[%s1 + $0x3e8] sm:$0xff]
  %v495 = vld [vmem:[%s1 + $0x3f0] sm:$0xff]
  %v496 = vld [vmem:[%s1 + $0x3f8] sm:$0xff]
  %v497 = vld [vmem:[%s1 + $0x400] sm:$0xff]
  %v498 = vld [vmem:[%s1 + $0x408] sm:$0xff]
  %v499 = vld [vmem:[%s1 + $0x410] sm:$0xff]
  %v500 = vld [vmem:[%s1 + $0x418] sm:$0xff]
  %v501 = vld [vmem:[%s1 + $0x420] sm:$0xff]
  %v502 = vld [vmem:[%s1 + $0x428] sm:$0xff]
  %v503 = vld [vmem:[%s1 + $0x430] sm:$0xff]
  %v504 = vld [vmem:[%s1 + $0x438] sm:$0xff]
  %v505 = vld [vmem:[%s1 + $0x440] sm:$0xff]
  %v506 = vld [vmem:[%s1 + $0x448] sm:$0xff]
  %v507 = vld [vmem:[%s1 + $0x450] sm:$0xff]
  %v508 = vld [vmem:[%s1 + $0x458] sm:$0xff]
  %v509 = vld [vmem:[%s1 + $0x460] sm:$0xff]
  %v510 = vld [vmem:[%s1 + $0x468] sm:$0xff]
  %v511 = vld [vmem:[%s1 + $0x470] sm:$0xff]
  %v512 = vld [vmem:[%s1 + $0x478] sm:$0xff]
  %v513 = vld [vmem:[%s1 + $0x480] sm:$0xff]
  %v514 = vld [vmem:[%s1 + $0x488] sm:$0xff]
  %v515 = vld [vmem:[%s1 + $0x490] sm:$0xff]
  %v516 = vld [vmem:[%s1 + $0x498] sm:$0xff]
  %v517 = vld [vmem:[%s1 + $0x4a0] sm:$0xff]
  %v518 = vld [vmem:[%s1 + $0x4a8] sm:$0xff]
  %v519 = vld [vmem:[%s1 + $0x4b0] sm:$0xff]
  %v520 = vld [vmem:[%s1 + $0x4b8] sm:$0xff]
  %v521 = vld [vmem:[%s1 + $0x4c0] sm:$0xff]
  %v522 = vld [vmem:[%s1 + $0x4c8] sm:$0xff]
  %v523 = vld [vmem:[%s1 + $0x4d0] sm:$0xff]
  %v524 = vld [vmem:[%s1 + $0x4d8] sm:$0xff]
  %v525 = vld [vmem:[%s1 + $0x4e0] sm:$0xff]
  %v526 = vld [vmem:[%s1 + $0x4e8] sm:$0xff]
  %v527 = vld [vmem:[%s1 + $0x4f0] sm:$0xff]
  %v528 = vld [vmem:[%s1 + $0x4f8] sm:$0xff]
  %v529 = vld [vmem:[%s1 + $0x500] sm:$0xff]
  %v530 = vld [vmem:[%s1 + $0x508] sm:$0xff]
  %v531 = vld [vmem:[%s1 + $0x510] sm:$0xff]
  %v532 = vld [vmem:[%s1 + $0x518] sm:$0xff]
  %v533 = vld [vmem:[%s1 + $0x520] sm:$0xff]
  %v534 = vld [vmem:[%s1 + $0x528] sm:$0xff]
  %v535 = vld [vmem:[%s1 + $0x530] sm:$0xff]
  %v536 = vld [vmem:[%s1 + $0x538] sm:$0xff]
  %v537 = vld [vmem:[%s1 + $0x540] sm:$0xff]
  %v538 = vld [vmem:[%s1 + $0x548] sm:$0xff]
  %v539 = vld [vmem:[%s1 + $0x550] sm:$0xff]
  %v540 = vld [vmem:[%s1 + $0x558] sm:$0xff]
  %v541 = vld [vmem:[%s1 + $0x560] sm:$0xff]
  %v542 = vld [vmem:[%s1 + $0x568] sm:$0xff]
  %v543 = vld [vmem:[%s1 + $0x570] sm:$0xff]
  %v544 = vld [vmem:[%s1 + $0x578] sm:$0xff]
  %v545 = vld [vmem:[%s1 + $0x580] sm:$0xff]
  %v546 = vld [vmem:[%s1 + $0x588] sm:$0xff]
  %v547 = vld [vmem:[%s1 + $0x590] sm:$0xff]
  %v548 = vld [vmem:[%s1 + $0x598] sm:$0xff]
  %v549 = vld [vmem:[%s1 + $0x5a0] sm:$0xff]
  %v550 = vld [vmem:[%s1 + $0x5a8] sm:$0xff]
  %v551 = vld [vmem:[%s1 + $0x5b0] sm:$0xff]
  %v552 = vld [vmem:[%s1 + $0x5b8] sm:$0xff]
  %v553 = vld [vmem:[%s1 + $0x5c0] sm:$0xff]
  %v554 = vld [vmem:[%s1 + $0x5c8] sm:$0xff]
  %v555 = vld [vmem:[%s1 + $0x5d0] sm:$0xff]
  %v556 = vld [vmem:[%s1 + $0x5d8] sm:$0xff]
  %v557 = vld [vmem:[%s1 + $0x5e0] sm:$0xff]
  %v558 = vld [vmem:[%s1 + $0x5e8] sm:$0xff]
  %v559 = vld [vmem:[%s1 + $0x5f0] sm:$0xff]
  %v560 = vld [vmem:[%s1 + $0x5f8] sm:$0xff]
  %v561 = vld [vmem:[%s1 + $0x600] sm:$0xff]
  %v562 = vld [vmem:[%s1 + $0x608] sm:$0xff]
  %v563 = vld [vmem:[%s1 + $0x610] sm:$0xff]
  %v564 = vld [vmem:[%s1 + $0x618] sm:$0xff]
  %v565 = vld [vmem:[%s1 + $0x620] sm:$0xff]
  %v566 = vld [vmem:[%s1 + $0x628] sm:$0xff]
  %v567 = vld [vmem:[%s1 + $0x630] sm:$0xff]
  %v568 = vld [vmem:[%s1 + $0x638] sm:$0xff]
  %v569 = vld [vmem:[%s1 + $0x640] sm:$0xff]
  %v570 = vld [vmem:[%s1 + $0x648] sm:$0xff]
  %v571 = vld [vmem:[%s1 + $0x650] sm:$0xff]
  %v572 = vld [vmem:[%s1 + $0x658] sm:$0xff]
  %v573 = vld [vmem:[%s1 + $0x660] sm:$0xff]
  %v574 = vld [vmem:[%s1 + $0x668] sm:$0xff]
  %v575 = vld [vmem:[%s1 + $0x670] sm:$0xff]
  %v576 = vld [vmem:[%s1 + $0x678] sm:$0xff]
  %v577 = vld [vmem:[%s1 + $0x680] sm:$0xff]
  %v578 = vld [vmem:[%s1 + $0x688] sm:$0xff]
  %v579 = vld [vmem:[%s1 + $0x690] sm:$0xff]
  %v580 = vld [vmem:[%s1 + $0x698] sm:$0xff]
  %v581 = vld [vmem:[%s1 + $0x6a0] sm:$0xff]
  %v582 = vld [vmem:[%s1 + $0x6a8] sm:$0xff]
  %v583 = vld [vmem:[%s1 + $0x6b0] sm:$0xff]
  %v584 = vld [vmem:[%s1 + $0x6b8] sm:$0xff]
  %v585 = vld [vmem:[%s1 + $0x6c0] sm:$0xff]
  %v586 = vld [vmem:[%s1 + $0x6c8] sm:$0xff]
  %v587 = vld [vmem:[%s1 + $0x6d0] sm:$0xff]
  %v588 = vld [vmem:[%s1 + $0x6d8] sm:$0xff]
  %v589 = vld [vmem:[%s1 + $0x6e0] sm:$0xff]
  %v590 = vld [vmem:[%s1 + $0x6e8] sm:$0xff]
  %v591 = vld [vmem:[%s1 + $0x6f0] sm:$0xff]
  %v592 = vld [vmem:[%s1 + $0x6f8] sm:$0xff]
  %v593 = vld [vmem:[%s2] sm:$0xf]
  %v595 = vlaneseq
  %v596 = vshrl.u32 %v595, 7
  %v597 = vsub.s32 0, %v596
  %v598 = vrot.slane %v593, %v597
  %v599 = vlaneseq
  %v600 = vshrl.u32 %v599, 7
  %v601 = vsub.s32 1, %v600
  %v602 = vrot.slane %v593, %v601
  %v603 = vlaneseq
  %v604 = vshrl.u32 %v603, 7
  %v605 = vsub.s32 2, %v604
  %v606 = vrot.slane %v593, %v605
  %v607 = vlaneseq
  %v608 = vshrl.u32 %v607, 7
  %v609 = vsub.s32 3, %v608
  %v610 = vrot.slane %v593, %v609
  %v839 = vunpack.c.l.b16 %v369
  %v840 = vunpack.c.h.b16 %v369
  %v841 = vunpack.c.l.b16 %v370
  %v842 = vunpack.c.h.b16 %v370
  %v843 = vunpack.c.l.b16 %v371
  %v844 = vunpack.c.h.b16 %v371
  %v845 = vunpack.c.l.b16 %v372
  %v846 = vunpack.c.h.b16 %v372
  %v847 = vunpack.c.l.b16 %v373
  %v848 = vunpack.c.h.b16 %v373
  %v849 = vunpack.c.l.b16 %v374
  %v850 = vunpack.c.h.b16 %v374
  %v851 = vunpack.c.l.b16 %v375
  %v852 = vunpack.c.h.b16 %v375
  %v853 = vunpack.c.l.b16 %v376
  %v854 = vunpack.c.h.b16 %v376
  %v855 = vunpack.c.l.b16 %v377
  %v856 = vunpack.c.h.b16 %v377
  %v857 = vunpack.c.l.b16 %v378
  %v858 = vunpack.c.h.b16 %v378
  %v859 = vunpack.c.l.b16 %v379
  %v860 = vunpack.c.h.b16 %v379
  %v861 = vunpack.c.l.b16 %v380
  %v862 = vunpack.c.h.b16 %v380
  %v863 = vunpack.c.l.b16 %v381
  %v864 = vunpack.c.h.b16 %v381
  %v865 = vunpack.c.l.b16 %v382
  %v866 = vunpack.c.h.b16 %v382
  %v867 = vunpack.c.l.b16 %v383
  %v868 = vunpack.c.h.b16 %v383
  %v869 = vunpack.c.l.b16 %v384
  %v870 = vunpack.c.h.b16 %v384
  %v871 = vunpack.c.l.b16 %v385
  %v872 = vunpack.c.h.b16 %v385
  %v873 = vunpack.c.l.b16 %v386
  %v874 = vunpack.c.h.b16 %v386
  %v875 = vunpack.c.l.b16 %v387
  %v876 = vunpack.c.h.b16 %v387
  %v877 = vunpack.c.l.b16 %v388
  %v878 = vunpack.c.h.b16 %v388
  %v879 = vunpack.c.l.b16 %v389
  %v880 = vunpack.c.h.b16 %v389
  %v881 = vunpack.c.l.b16 %v390
  %v882 = vunpack.c.h.b16 %v390
  %v883 = vunpack.c.l.b16 %v391
  %v884 = vunpack.c.h.b16 %v391
  %v885 = vunpack.c.l.b16 %v392
  %v886 = vunpack.c.h.b16 %v392
  %v887 = vunpack.c.l.b16 %v393
  %v888 = vunpack.c.h.b16 %v393
  %v889 = vunpack.c.l.b16 %v394
  %v890 = vunpack.c.h.b16 %v394
  %v891 = vunpack.c.l.b16 %v395
  %v892 = vunpack.c.h.b16 %v395
  %v893 = vunpack.c.l.b16 %v396
  %v894 = vunpack.c.h.b16 %v396
  %v895 = vunpack.c.l.b16 %v397
  %v896 = vunpack.c.h.b16 %v397
  %v897 = vunpack.c.l.b16 %v398
  %v898 = vunpack.c.h.b16 %v398
  %v899 = vunpack.c.l.b16 %v399
  %v900 = vunpack.c.h.b16 %v399
  %v901 = vunpack.c.l.b16 %v400
  %v902 = vunpack.c.h.b16 %v400
  %v903 = vunpack.c.l.b16 %v401
  %v904 = vunpack.c.h.b16 %v401
  %v905 = vunpack.c.l.b16 %v402
  %v906 = vunpack.c.h.b16 %v402
  %v907 = vunpack.c.l.b16 %v403
  %v908 = vunpack.c.h.b16 %v403
  %v909 = vunpack.c.l.b16 %v404
  %v910 = vunpack.c.h.b16 %v404
  %v911 = vunpack.c.l.b16 %v405
  %v912 = vunpack.c.h.b16 %v405
  %v913 = vunpack.c.l.b16 %v406
  %v914 = vunpack.c.h.b16 %v406
  %v915 = vunpack.c.l.b16 %v407
  %v916 = vunpack.c.h.b16 %v407
  %v917 = vunpack.c.l.b16 %v408
  %v918 = vunpack.c.h.b16 %v408
  %v919 = vunpack.c.l.b16 %v409
  %v920 = vunpack.c.h.b16 %v409
  %v921 = vunpack.c.l.b16 %v410
  %v922 = vunpack.c.h.b16 %v410
  %v923 = vunpack.c.l.b16 %v411
  %v924 = vunpack.c.h.b16 %v411
  %v925 = vunpack.c.l.b16 %v412
  %v926 = vunpack.c.h.b16 %v412
  %v927 = vunpack.c.l.b16 %v413
  %v928 = vunpack.c.h.b16 %v413
  %v929 = vunpack.c.l.b16 %v414
  %v930 = vunpack.c.h.b16 %v414
  %v931 = vunpack.c.l.b16 %v415
  %v932 = vunpack.c.h.b16 %v415
  %v933 = vunpack.c.l.b16 %v416
  %v934 = vunpack.c.h.b16 %v416
  %v935 = vunpack.c.l.b16 %v417
  %v936 = vunpack.c.h.b16 %v417
  %v937 = vunpack.c.l.b16 %v418
  %v938 = vunpack.c.h.b16 %v418
  %v939 = vunpack.c.l.b16 %v419
  %v940 = vunpack.c.h.b16 %v419
  %v941 = vunpack.c.l.b16 %v420
  %v942 = vunpack.c.h.b16 %v420
  %v943 = vunpack.c.l.b16 %v421
  %v944 = vunpack.c.h.b16 %v421
  %v945 = vunpack.c.l.b16 %v422
  %v946 = vunpack.c.h.b16 %v422
  %v947 = vunpack.c.l.b16 %v423
  %v948 = vunpack.c.h.b16 %v423
  %v949 = vunpack.c.l.b16 %v424
  %v950 = vunpack.c.h.b16 %v424
  %v951 = vunpack.c.l.b16 %v425
  %v952 = vunpack.c.h.b16 %v425
  %v953 = vunpack.c.l.b16 %v426
  %v954 = vunpack.c.h.b16 %v426
  %v955 = vunpack.c.l.b16 %v427
  %v956 = vunpack.c.h.b16 %v427
  %v957 = vunpack.c.l.b16 %v428
  %v958 = vunpack.c.h.b16 %v428
  %v959 = vunpack.c.l.b16 %v429
  %v960 = vunpack.c.h.b16 %v429
  %v961 = vunpack.c.l.b16 %v430
  %v962 = vunpack.c.h.b16 %v430
  %v963 = vunpack.c.l.b16 %v431
  %v964 = vunpack.c.h.b16 %v431
  %v965 = vunpack.c.l.b16 %v432
  %v966 = vunpack.c.h.b16 %v432
  %v967 = vunpack.c.l.b16 %v433
  %v968 = vunpack.c.h.b16 %v433
  %v969 = vunpack.c.l.b16 %v434
  %v970 = vunpack.c.h.b16 %v434
  %v971 = vunpack.c.l.b16 %v435
  %v972 = vunpack.c.h.b16 %v435
  %v973 = vunpack.c.l.b16 %v436
  %v974 = vunpack.c.h.b16 %v436
  %v975 = vunpack.c.l.b16 %v437
  %v976 = vunpack.c.h.b16 %v437
  %v977 = vunpack.c.l.b16 %v438
  %v978 = vunpack.c.h.b16 %v438
  %v979 = vunpack.c.l.b16 %v439
  %v980 = vunpack.c.h.b16 %v439
  %v981 = vunpack.c.l.b16 %v440
  %v982 = vunpack.c.h.b16 %v440
  %v983 = vunpack.c.l.b16 %v441
  %v984 = vunpack.c.h.b16 %v441
  %v985 = vunpack.c.l.b16 %v442
  %v986 = vunpack.c.h.b16 %v442
  %v987 = vunpack.c.l.b16 %v443
  %v988 = vunpack.c.h.b16 %v443
  %v989 = vunpack.c.l.b16 %v444
  %v990 = vunpack.c.h.b16 %v444
  %v991 = vunpack.c.l.b16 %v445
  %v992 = vunpack.c.h.b16 %v445
  %v993 = vunpack.c.l.b16 %v446
  %v994 = vunpack.c.h.b16 %v446
  %v995 = vunpack.c.l.b16 %v447
  %v996 = vunpack.c.h.b16 %v447
  %v997 = vunpack.c.l.b16 %v448
  %v998 = vunpack.c.h.b16 %v448
  %v999 = vunpack.c.l.b16 %v449
  %v1000 = vunpack.c.h.b16 %v449
  %v1001 = vunpack.c.l.b16 %v450
  %v1002 = vunpack.c.h.b16 %v450
  %v1003 = vunpack.c.l.b16 %v451
  %v1004 = vunpack.c.h.b16 %v451
  %v1005 = vunpack.c.l.b16 %v452
  %v1006 = vunpack.c.h.b16 %v452
  %v1007 = vunpack.c.l.b16 %v453
  %v1008 = vunpack.c.h.b16 %v453
  %v1009 = vunpack.c.l.b16 %v454
  %v1010 = vunpack.c.h.b16 %v454
  %v1011 = vunpack.c.l.b16 %v455
  %v1012 = vunpack.c.h.b16 %v455
  %v1013 = vunpack.c.l.b16 %v456
  %v1014 = vunpack.c.h.b16 %v456
  %v1015 = vunpack.c.l.b16 %v457
  %v1016 = vunpack.c.h.b16 %v457
  %v1017 = vunpack.c.l.b16 %v458
  %v1018 = vunpack.c.h.b16 %v458
  %v1019 = vunpack.c.l.b16 %v459
  %v1020 = vunpack.c.h.b16 %v459
  %v1021 = vunpack.c.l.b16 %v460
  %v1022 = vunpack.c.h.b16 %v460
  %v1023 = vunpack.c.l.b16 %v461
  %v1024 = vunpack.c.h.b16 %v461
  %v1025 = vunpack.c.l.b16 %v462
  %v1026 = vunpack.c.h.b16 %v462
  %v1027 = vunpack.c.l.b16 %v463
  %v1028 = vunpack.c.h.b16 %v463
  %v1029 = vunpack.c.l.b16 %v464
  %v1030 = vunpack.c.h.b16 %v464
  %v1031 = vunpack.c.l.b16 %v465
  %v1032 = vunpack.c.h.b16 %v465
  %v1033 = vunpack.c.l.b16 %v466
  %v1034 = vunpack.c.h.b16 %v466
  %v1035 = vunpack.c.l.b16 %v467
  %v1036 = vunpack.c.h.b16 %v467
  %v1037 = vunpack.c.l.b16 %v468
  %v1038 = vunpack.c.h.b16 %v468
  %v1039 = vunpack.c.l.b16 %v469
  %v1040 = vunpack.c.h.b16 %v469
  %v1041 = vunpack.c.l.b16 %v470
  %v1042 = vunpack.c.h.b16 %v470
  %v1043 = vunpack.c.l.b16 %v471
  %v1044 = vunpack.c.h.b16 %v471
  %v1045 = vunpack.c.l.b16 %v472
  %v1046 = vunpack.c.h.b16 %v472
  %v1047 = vunpack.c.l.b16 %v473
  %v1048 = vunpack.c.h.b16 %v473
  %v1049 = vunpack.c.l.b16 %v474
  %v1050 = vunpack.c.h.b16 %v474
  %v1051 = vunpack.c.l.b16 %v475
  %v1052 = vunpack.c.h.b16 %v475
  %v1053 = vunpack.c.l.b16 %v476
  %v1054 = vunpack.c.h.b16 %v476
  %v1055 = vunpack.c.l.b16 %v477
  %v1056 = vunpack.c.h.b16 %v477
  %v1057 = vunpack.c.l.b16 %v478
  %v1058 = vunpack.c.h.b16 %v478
  %v1059 = vunpack.c.l.b16 %v479
  %v1060 = vunpack.c.h.b16 %v479
  %v1061 = vunpack.c.l.b16 %v480
  %v1062 = vunpack.c.h.b16 %v480
  %v1063 = vunpack.c.l.b16 %v481
  %v1064 = vunpack.c.h.b16 %v481
  %v1065 = vunpack.c.l.b16 %v482
  %v1066 = vunpack.c.h.b16 %v482
  %v1067 = vunpack.c.l.b16 %v483
  %v1068 = vunpack.c.h.b16 %v483
  %v1069 = vunpack.c.l.b16 %v484
  %v1070 = vunpack.c.h.b16 %v484
  %v1071 = vunpack.c.l.b16 %v485
  %v1072 = vunpack.c.h.b16 %v485
  %v1073 = vunpack.c.l.b16 %v486
  %v1074 = vunpack.c.h.b16 %v486
  %v1075 = vunpack.c.l.b16 %v487
  %v1076 = vunpack.c.h.b16 %v487
  %v1077 = vunpack.c.l.b16 %v488
  %v1078 = vunpack.c.h.b16 %v488
  %v1079 = vunpack.c.l.b16 %v489
  %v1080 = vunpack.c.h.b16 %v489
  %v1081 = vunpack.c.l.b16 %v490
  %v1082 = vunpack.c.h.b16 %v490
  %v1083 = vunpack.c.l.b16 %v491
  %v1084 = vunpack.c.h.b16 %v491
  %v1085 = vunpack.c.l.b16 %v492
  %v1086 = vunpack.c.h.b16 %v492
  %v1087 = vunpack.c.l.b16 %v493
  %v1088 = vunpack.c.h.b16 %v493
  %v1089 = vunpack.c.l.b16 %v494
  %v1090 = vunpack.c.h.b16 %v494
  %v1091 = vunpack.c.l.b16 %v495
  %v1092 = vunpack.c.h.b16 %v495
  %v1093 = vunpack.c.l.b16 %v496
  %v1094 = vunpack.c.h.b16 %v496
  %v1095 = vunpack.c.l.b16 %v497
  %v1096 = vunpack.c.h.b16 %v497
  %v1097 = vunpack.c.l.b16 %v498
  %v1098 = vunpack.c.h.b16 %v498
  %v1099 = vunpack.c.l.b16 %v499
  %v1100 = vunpack.c.h.b16 %v499
  %v1101 = vunpack.c.l.b16 %v500
  %v1102 = vunpack.c.h.b16 %v500
  %v1103 = vunpack.c.l.b16 %v501
  %v1104 = vunpack.c.h.b16 %v501
  %v1105 = vunpack.c.l.b16 %v502
  %v1106 = vunpack.c.h.b16 %v502
  %v1107 = vunpack.c.l.b16 %v503
  %v1108 = vunpack.c.h.b16 %v503
  %v1109 = vunpack.c.l.b16 %v504
  %v1110 = vunpack.c.h.b16 %v504
  %v1111 = vunpack.c.l.b16 %v505
  %v1112 = vunpack.c.h.b16 %v505
  %v1113 = vunpack.c.l.b16 %v506
  %v1114 = vunpack.c.h.b16 %v506
  %v1115 = vunpack.c.l.b16 %v507
  %v1116 = vunpack.c.h.b16 %v507
  %v1117 = vunpack.c.l.b16 %v508
  %v1118 = vunpack.c.h.b16 %v508
  %v1119 = vunpack.c.l.b16 %v509
  %v1120 = vunpack.c.h.b16 %v509
  %v1121 = vunpack.c.l.b16 %v510
  %v1122 = vunpack.c.h.b16 %v510
  %v1123 = vunpack.c.l.b16 %v511
  %v1124 = vunpack.c.h.b16 %v511
  %v1125 = vunpack.c.l.b16 %v512
  %v1126 = vunpack.c.h.b16 %v512
  %v1127 = vunpack.c.l.b16 %v513
  %v1128 = vunpack.c.h.b16 %v513
  %v1129 = vunpack.c.l.b16 %v514
  %v1130 = vunpack.c.h.b16 %v514
  %v1131 = vunpack.c.l.b16 %v515
  %v1132 = vunpack.c.h.b16 %v515
  %v1133 = vunpack.c.l.b16 %v516
  %v1134 = vunpack.c.h.b16 %v516
  %v1135 = vunpack.c.l.b16 %v517
  %v1136 = vunpack.c.h.b16 %v517
  %v1137 = vunpack.c.l.b16 %v518
  %v1138 = vunpack.c.h.b16 %v518
  %v1139 = vunpack.c.l.b16 %v519
  %v1140 = vunpack.c.h.b16 %v519
  %v1141 = vunpack.c.l.b16 %v520
  %v1142 = vunpack.c.h.b16 %v520
  %v1143 = vunpack.c.l.b16 %v521
  %v1144 = vunpack.c.h.b16 %v521
  %v1145 = vunpack.c.l.b16 %v522
  %v1146 = vunpack.c.h.b16 %v522
  %v1147 = vunpack.c.l.b16 %v523
  %v1148 = vunpack.c.h.b16 %v523
  %v1149 = vunpack.c.l.b16 %v524
  %v1150 = vunpack.c.h.b16 %v524
  %v1151 = vunpack.c.l.b16 %v525
  %v1152 = vunpack.c.h.b16 %v525
  %v1153 = vunpack.c.l.b16 %v526
  %v1154 = vunpack.c.h.b16 %v526
  %v1155 = vunpack.c.l.b16 %v527
  %v1156 = vunpack.c.h.b16 %v527
  %v1157 = vunpack.c.l.b16 %v528
  %v1158 = vunpack.c.h.b16 %v528
  %v1159 = vunpack.c.l.b16 %v529
  %v1160 = vunpack.c.h.b16 %v529
  %v1161 = vunpack.c.l.b16 %v530
  %v1162 = vunpack.c.h.b16 %v530
  %v1163 = vunpack.c.l.b16 %v531
  %v1164 = vunpack.c.h.b16 %v531
  %v1165 = vunpack.c.l.b16 %v532
  %v1166 = vunpack.c.h.b16 %v532
  %v1167 = vunpack.c.l.b16 %v533
  %v1168 = vunpack.c.h.b16 %v533
  %v1169 = vunpack.c.l.b16 %v534
  %v1170 = vunpack.c.h.b16 %v534
  %v1171 = vunpack.c.l.b16 %v535
  %v1172 = vunpack.c.h.b16 %v535
  %v1173 = vunpack.c.l.b16 %v536
  %v1174 = vunpack.c.h.b16 %v536
  %v1175 = vunpack.c.l.b16 %v537
  %v1176 = vunpack.c.h.b16 %v537
  %v1177 = vunpack.c.l.b16 %v538
  %v1178 = vunpack.c.h.b16 %v538
  %v1179 = vunpack.c.l.b16 %v539
  %v1180 = vunpack.c.h.b16 %v539
  %v1181 = vunpack.c.l.b16 %v540
  %v1182 = vunpack.c.h.b16 %v540
  %v1183 = vunpack.c.l.b16 %v541
  %v1184 = vunpack.c.h.b16 %v541
  %v1185 = vunpack.c.l.b16 %v542
  %v1186 = vunpack.c.h.b16 %v542
  %v1187 = vunpack.c.l.b16 %v543
  %v1188 = vunpack.c.h.b16 %v543
  %v1189 = vunpack.c.l.b16 %v544
  %v1190 = vunpack.c.h.b16 %v544
  %v1191 = vunpack.c.l.b16 %v545
  %v1192 = vunpack.c.h.b16 %v545
  %v1193 = vunpack.c.l.b16 %v546
  %v1194 = vunpack.c.h.b16 %v546
  %v1195 = vunpack.c.l.b16 %v547
  %v1196 = vunpack.c.h.b16 %v547
  %v1197 = vunpack.c.l.b16 %v548
  %v1198 = vunpack.c.h.b16 %v548
  %v1199 = vunpack.c.l.b16 %v549
  %v1200 = vunpack.c.h.b16 %v549
  %v1201 = vunpack.c.l.b16 %v550
  %v1202 = vunpack.c.h.b16 %v550
  %v1203 = vunpack.c.l.b16 %v551
  %v1204 = vunpack.c.h.b16 %v551
  %v1205 = vunpack.c.l.b16 %v552
  %v1206 = vunpack.c.h.b16 %v552
  %v1207 = vunpack.c.l.b16 %v553
  %v1208 = vunpack.c.h.b16 %v553
  %v1209 = vunpack.c.l.b16 %v554
  %v1210 = vunpack.c.h.b16 %v554
  %v1211 = vunpack.c.l.b16 %v555
  %v1212 = vunpack.c.h.b16 %v555
  %v1213 = vunpack.c.l.b16 %v556
  %v1214 = vunpack.c.h.b16 %v556
  %v1215 = vunpack.c.l.b16 %v557
  %v1216 = vunpack.c.h.b16 %v557
  %v1217 = vunpack.c.l.b16 %v558
  %v1218 = vunpack.c.h.b16 %v558
  %v1219 = vunpack.c.l.b16 %v559
  %v1220 = vunpack.c.h.b16 %v559
  %v1221 = vunpack.c.l.b16 %v560
  %v1222 = vunpack.c.h.b16 %v560
  %v1223 = vunpack.c.l.b16 %v561
  %v1224 = vunpack.c.h.b16 %v561
  %v1225 = vunpack.c.l.b16 %v562
  %v1226 = vunpack.c.h.b16 %v562
  %v1227 = vunpack.c.l.b16 %v563
  %v1228 = vunpack.c.h.b16 %v563
  %v1229 = vunpack.c.l.b16 %v564
  %v1230 = vunpack.c.h.b16 %v564
  %v1231 = vunpack.c.l.b16 %v565
  %v1232 = vunpack.c.h.b16 %v565
  %v1233 = vunpack.c.l.b16 %v566
  %v1234 = vunpack.c.h.b16 %v566
  %v1235 = vunpack.c.l.b16 %v567
  %v1236 = vunpack.c.h.b16 %v567
  %v1237 = vunpack.c.l.b16 %v568
  %v1238 = vunpack.c.h.b16 %v568
  %v1239 = vunpack.c.l.b16 %v569
  %v1240 = vunpack.c.h.b16 %v569
  %v1241 = vunpack.c.l.b16 %v570
  %v1242 = vunpack.c.h.b16 %v570
  %v1243 = vunpack.c.l.b16 %v571
  %v1244 = vunpack.c.h.b16 %v571
  %v1245 = vunpack.c.l.b16 %v572
  %v1246 = vunpack.c.h.b16 %v572
  %v1247 = vunpack.c.l.b16 %v573
  %v1248 = vunpack.c.h.b16 %v573
  %v1249 = vunpack.c.l.b16 %v574
  %v1250 = vunpack.c.h.b16 %v574
  %v1251 = vunpack.c.l.b16 %v575
  %v1252 = vunpack.c.h.b16 %v575
  %v1253 = vunpack.c.l.b16 %v576
  %v1254 = vunpack.c.h.b16 %v576
  %v1255 = vunpack.c.l.b16 %v577
  %v1256 = vunpack.c.h.b16 %v577
  %v1257 = vunpack.c.l.b16 %v578
  %v1258 = vunpack.c.h.b16 %v578
  %v1259 = vunpack.c.l.b16 %v579
  %v1260 = vunpack.c.h.b16 %v579
  %v1261 = vunpack.c.l.b16 %v580
  %v1262 = vunpack.c.h.b16 %v580
  %v1263 = vunpack.c.l.b16 %v581
  %v1264 = vunpack.c.h.b16 %v581
  %v1265 = vunpack.c.l.b16 %v582
  %v1266 = vunpack.c.h.b16 %v582
  %v1267 = vunpack.c.l.b16 %v583
  %v1268 = vunpack.c.h.b16 %v583
  %v1269 = vunpack.c.l.b16 %v584
  %v1270 = vunpack.c.h.b16 %v584
  %v1271 = vunpack.c.l.b16 %v585
  %v1272 = vunpack.c.h.b16 %v585
  %v1273 = vunpack.c.l.b16 %v586
  %v1274 = vunpack.c.h.b16 %v586
  %v1275 = vunpack.c.l.b16 %v587
  %v1276 = vunpack.c.h.b16 %v587
  %v1277 = vunpack.c.l.b16 %v588
  %v1278 = vunpack.c.h.b16 %v588
  %v1279 = vunpack.c.l.b16 %v589
  %v1280 = vunpack.c.h.b16 %v589
  %v1281 = vunpack.c.l.b16 %v590
  %v1282 = vunpack.c.h.b16 %v590
  %v1283 = vunpack.c.l.b16 %v591
  %v1284 = vunpack.c.h.b16 %v591
  %v1285 = vunpack.c.l.b16 %v592
  %v1286 = vunpack.c.h.b16 %v592
  %v1287 = vpack.c.b16 %v843, %v839
  %v1288 = vpack.c.b16 %v844, %v840
  %v1289 = vpack.c.b16 %v845, %v841
  %v1290 = vpack.c.b16 %v846, %v842
  %v1291 = vpack.c.b16 %v851, %v847
  %v1292 = vpack.c.b16 %v852, %v848
  %v1293 = vpack.c.b16 %v853, %v849
  %v1294 = vpack.c.b16 %v854, %v850
  %v1295 = vpack.c.b16 %v859, %v855
  %v1296 = vpack.c.b16 %v860, %v856
  %v1297 = vpack.c.b16 %v861, %v857
  %v1298 = vpack.c.b16 %v862, %v858
  %v1299 = vpack.c.b16 %v867, %v863
  %v1300 = vpack.c.b16 %v868, %v864
  %v1301 = vpack.c.b16 %v869, %v865
  %v1302 = vpack.c.b16 %v870, %v866
  %v1303 = vpack.c.b16 %v875, %v871
  %v1304 = vpack.c.b16 %v876, %v872
  %v1305 = vpack.c.b16 %v877, %v873
  %v1306 = vpack.c.b16 %v878, %v874
  %v1307 = vpack.c.b16 %v883, %v879
  %v1308 = vpack.c.b16 %v884, %v880
  %v1309 = vpack.c.b16 %v885, %v881
  %v1310 = vpack.c.b16 %v886, %v882
  %v1311 = vpack.c.b16 %v891, %v887
  %v1312 = vpack.c.b16 %v892, %v888
  %v1313 = vpack.c.b16 %v893, %v889
  %v1314 = vpack.c.b16 %v894, %v890
  %v1315 = vpack.c.b16 %v899, %v895
  %v1316 = vpack.c.b16 %v900, %v896
  %v1317 = vpack.c.b16 %v901, %v897
  %v1318 = vpack.c.b16 %v902, %v898
  %v1319 = vpack.c.b16 %v907, %v903
  %v1320 = vpack.c.b16 %v908, %v904
  %v1321 = vpack.c.b16 %v909, %v905
  %v1322 = vpack.c.b16 %v910, %v906
  %v1323 = vpack.c.b16 %v915, %v911
  %v1324 = vpack.c.b16 %v916, %v912
  %v1325 = vpack.c.b16 %v917, %v913
  %v1326 = vpack.c.b16 %v918, %v914
  %v1327 = vpack.c.b16 %v923, %v919
  %v1328 = vpack.c.b16 %v924, %v920
  %v1329 = vpack.c.b16 %v925, %v921
  %v1330 = vpack.c.b16 %v926, %v922
  %v1331 = vpack.c.b16 %v931, %v927
  %v1332 = vpack.c.b16 %v932, %v928
  %v1333 = vpack.c.b16 %v933, %v929
  %v1334 = vpack.c.b16 %v934, %v930
  %v1335 = vpack.c.b16 %v939, %v935
  %v1336 = vpack.c.b16 %v940, %v936
  %v1337 = vpack.c.b16 %v941, %v937
  %v1338 = vpack.c.b16 %v942, %v938
  %v1339 = vpack.c.b16 %v947, %v943
  %v1340 = vpack.c.b16 %v948, %v944
  %v1341 = vpack.c.b16 %v949, %v945
  %v1342 = vpack.c.b16 %v950, %v946
  %v1343 = vpack.c.b16 %v955, %v951
  %v1344 = vpack.c.b16 %v956, %v952
  %v1345 = vpack.c.b16 %v957, %v953
  %v1346 = vpack.c.b16 %v958, %v954
  %v1347 = vpack.c.b16 %v963, %v959
  %v1348 = vpack.c.b16 %v964, %v960
  %v1349 = vpack.c.b16 %v965, %v961
  %v1350 = vpack.c.b16 %v966, %v962
  %v1351 = vpack.c.b16 %v971, %v967
  %v1352 = vpack.c.b16 %v972, %v968
  %v1353 = vpack.c.b16 %v973, %v969
  %v1354 = vpack.c.b16 %v974, %v970
  %v1355 = vpack.c.b16 %v979, %v975
  %v1356 = vpack.c.b16 %v980, %v976
  %v1357 = vpack.c.b16 %v981, %v977
  %v1358 = vpack.c.b16 %v982, %v978
  %v1359 = vpack.c.b16 %v987, %v983
  %v1360 = vpack.c.b16 %v988, %v984
  %v1361 = vpack.c.b16 %v989, %v985
  %v1362 = vpack.c.b16 %v990, %v986
  %v1363 = vpack.c.b16 %v995, %v991
  %v1364 = vpack.c.b16 %v996, %v992
  %v1365 = vpack.c.b16 %v997, %v993
  %v1366 = vpack.c.b16 %v998, %v994
  %v1367 = vpack.c.b16 %v1003, %v999
  %v1368 = vpack.c.b16 %v1004, %v1000
  %v1369 = vpack.c.b16 %v1005, %v1001
  %v1370 = vpack.c.b16 %v1006, %v1002
  %v1371 = vpack.c.b16 %v1011, %v1007
  %v1372 = vpack.c.b16 %v1012, %v1008
  %v1373 = vpack.c.b16 %v1013, %v1009
  %v1374 = vpack.c.b16 %v1014, %v1010
  %v1375 = vpack.c.b16 %v1019, %v1015
  %v1376 = vpack.c.b16 %v1020, %v1016
  %v1377 = vpack.c.b16 %v1021, %v1017
  %v1378 = vpack.c.b16 %v1022, %v1018
  %v1379 = vpack.c.b16 %v1027, %v1023
  %v1380 = vpack.c.b16 %v1028, %v1024
  %v1381 = vpack.c.b16 %v1029, %v1025
  %v1382 = vpack.c.b16 %v1030, %v1026
  %v1383 = vpack.c.b16 %v1035, %v1031
  %v1384 = vpack.c.b16 %v1036, %v1032
  %v1385 = vpack.c.b16 %v1037, %v1033
  %v1386 = vpack.c.b16 %v1038, %v1034
  %v1387 = vpack.c.b16 %v1043, %v1039
  %v1388 = vpack.c.b16 %v1044, %v1040
  %v1389 = vpack.c.b16 %v1045, %v1041
  %v1390 = vpack.c.b16 %v1046, %v1042
  %v1391 = vpack.c.b16 %v1051, %v1047
  %v1392 = vpack.c.b16 %v1052, %v1048
  %v1393 = vpack.c.b16 %v1053, %v1049
  %v1394 = vpack.c.b16 %v1054, %v1050
  %v1395 = vpack.c.b16 %v1059, %v1055
  %v1396 = vpack.c.b16 %v1060, %v1056
  %v1397 = vpack.c.b16 %v1061, %v1057
  %v1398 = vpack.c.b16 %v1062, %v1058
  %v1399 = vpack.c.b16 %v1067, %v1063
  %v1400 = vpack.c.b16 %v1068, %v1064
  %v1401 = vpack.c.b16 %v1069, %v1065
  %v1402 = vpack.c.b16 %v1070, %v1066
  %v1403 = vpack.c.b16 %v1075, %v1071
  %v1404 = vpack.c.b16 %v1076, %v1072
  %v1405 = vpack.c.b16 %v1077, %v1073
  %v1406 = vpack.c.b16 %v1078, %v1074
  %v1407 = vpack.c.b16 %v1083, %v1079
  %v1408 = vpack.c.b16 %v1084, %v1080
  %v1409 = vpack.c.b16 %v1085, %v1081
  %v1410 = vpack.c.b16 %v1086, %v1082
  %v1411 = vpack.c.b16 %v1091, %v1087
  %v1412 = vpack.c.b16 %v1092, %v1088
  %v1413 = vpack.c.b16 %v1093, %v1089
  %v1414 = vpack.c.b16 %v1094, %v1090
  %v1415 = vpack.c.b16 %v1099, %v1095
  %v1416 = vpack.c.b16 %v1100, %v1096
  %v1417 = vpack.c.b16 %v1101, %v1097
  %v1418 = vpack.c.b16 %v1102, %v1098
  %v1419 = vpack.c.b16 %v1107, %v1103
  %v1420 = vpack.c.b16 %v1108, %v1104
  %v1421 = vpack.c.b16 %v1109, %v1105
  %v1422 = vpack.c.b16 %v1110, %v1106
  %v1423 = vpack.c.b16 %v1115, %v1111
  %v1424 = vpack.c.b16 %v1116, %v1112
  %v1425 = vpack.c.b16 %v1117, %v1113
  %v1426 = vpack.c.b16 %v1118, %v1114
  %v1427 = vpack.c.b16 %v1123, %v1119
  %v1428 = vpack.c.b16 %v1124, %v1120
  %v1429 = vpack.c.b16 %v1125, %v1121
  %v1430 = vpack.c.b16 %v1126, %v1122
  %v1431 = vpack.c.b16 %v1131, %v1127
  %v1432 = vpack.c.b16 %v1132, %v1128
  %v1433 = vpack.c.b16 %v1133, %v1129
  %v1434 = vpack.c.b16 %v1134, %v1130
  %v1435 = vpack.c.b16 %v1139, %v1135
  %v1436 = vpack.c.b16 %v1140, %v1136
  %v1437 = vpack.c.b16 %v1141, %v1137
  %v1438 = vpack.c.b16 %v1142, %v1138
  %v1439 = vpack.c.b16 %v1147, %v1143
  %v1440 = vpack.c.b16 %v1148, %v1144
  %v1441 = vpack.c.b16 %v1149, %v1145
  %v1442 = vpack.c.b16 %v1150, %v1146
  %v1443 = vpack.c.b16 %v1155, %v1151
  %v1444 = vpack.c.b16 %v1156, %v1152
  %v1445 = vpack.c.b16 %v1157, %v1153
  %v1446 = vpack.c.b16 %v1158, %v1154
  %v1447 = vpack.c.b16 %v1163, %v1159
  %v1448 = vpack.c.b16 %v1164, %v1160
  %v1449 = vpack.c.b16 %v1165, %v1161
  %v1450 = vpack.c.b16 %v1166, %v1162
  %v1451 = vpack.c.b16 %v1171, %v1167
  %v1452 = vpack.c.b16 %v1172, %v1168
  %v1453 = vpack.c.b16 %v1173, %v1169
  %v1454 = vpack.c.b16 %v1174, %v1170
  %v1455 = vpack.c.b16 %v1179, %v1175
  %v1456 = vpack.c.b16 %v1180, %v1176
  %v1457 = vpack.c.b16 %v1181, %v1177
  %v1458 = vpack.c.b16 %v1182, %v1178
  %v1459 = vpack.c.b16 %v1187, %v1183
  %v1460 = vpack.c.b16 %v1188, %v1184
  %v1461 = vpack.c.b16 %v1189, %v1185
  %v1462 = vpack.c.b16 %v1190, %v1186
  %v1463 = vpack.c.b16 %v1195, %v1191
  %v1464 = vpack.c.b16 %v1196, %v1192
  %v1465 = vpack.c.b16 %v1197, %v1193
  %v1466 = vpack.c.b16 %v1198, %v1194
  %v1467 = vpack.c.b16 %v1203, %v1199
  %v1468 = vpack.c.b16 %v1204, %v1200
  %v1469 = vpack.c.b16 %v1205, %v1201
  %v1470 = vpack.c.b16 %v1206, %v1202
  %v1471 = vpack.c.b16 %v1211, %v1207
  %v1472 = vpack.c.b16 %v1212, %v1208
  %v1473 = vpack.c.b16 %v1213, %v1209
  %v1474 = vpack.c.b16 %v1214, %v1210
  %v1475 = vpack.c.b16 %v1219, %v1215
  %v1476 = vpack.c.b16 %v1220, %v1216
  %v1477 = vpack.c.b16 %v1221, %v1217
  %v1478 = vpack.c.b16 %v1222, %v1218
  %v1479 = vpack.c.b16 %v1227, %v1223
  %v1480 = vpack.c.b16 %v1228, %v1224
  %v1481 = vpack.c.b16 %v1229, %v1225
  %v1482 = vpack.c.b16 %v1230, %v1226
  %v1483 = vpack.c.b16 %v1235, %v1231
  %v1484 = vpack.c.b16 %v1236, %v1232
  %v1485 = vpack.c.b16 %v1237, %v1233
  %v1486 = vpack.c.b16 %v1238, %v1234
  %v1487 = vpack.c.b16 %v1243, %v1239
  %v1488 = vpack.c.b16 %v1244, %v1240
  %v1489 = vpack.c.b16 %v1245, %v1241
  %v1490 = vpack.c.b16 %v1246, %v1242
  %v1491 = vpack.c.b16 %v1251, %v1247
  %v1492 = vpack.c.b16 %v1252, %v1248
  %v1493 = vpack.c.b16 %v1253, %v1249
  %v1494 = vpack.c.b16 %v1254, %v1250
  %v1495 = vpack.c.b16 %v1259, %v1255
  %v1496 = vpack.c.b16 %v1260, %v1256
  %v1497 = vpack.c.b16 %v1261, %v1257
  %v1498 = vpack.c.b16 %v1262, %v1258
  %v1499 = vpack.c.b16 %v1267, %v1263
  %v1500 = vpack.c.b16 %v1268, %v1264
  %v1501 = vpack.c.b16 %v1269, %v1265
  %v1502 = vpack.c.b16 %v1270, %v1266
  %v1503 = vpack.c.b16 %v1275, %v1271
  %v1504 = vpack.c.b16 %v1276, %v1272
  %v1505 = vpack.c.b16 %v1277, %v1273
  %v1506 = vpack.c.b16 %v1278, %v1274
  %v1507 = vpack.c.b16 %v1283, %v1279
  %v1508 = vpack.c.b16 %v1284, %v1280
  %v1509 = vpack.c.b16 %v1285, %v1281
  %v1510 = vpack.c.b16 %v1286, %v1282
  %1735 = vmatprep.subr.bf16.mxu0 %v1288
  %1736 = vmatpush1.bf16.msra.mxu0 %v1287
  %1737 = vmatprep.subr.bf16.mxu0 %v1292
  %1738 = vmatpush1.bf16.msra.mxu0 %v1291
  %1739 = vmatprep.subr.bf16.mxu0 %v1296
  %1740 = vmatpush1.bf16.msra.mxu0 %v1295
  %1741 = vmatprep.subr.bf16.mxu0 %v1300
  %1742 = vmatpush1.bf16.msra.mxu0 %v1299
  %1743 = vmatprep.subr.bf16.mxu0 %v1304
  %1744 = vmatpush1.bf16.msra.mxu0 %v1303
  %1745 = vmatprep.subr.bf16.mxu0 %v1308
  %1746 = vmatpush1.bf16.msra.mxu0 %v1307
  %1747 = vmatprep.subr.bf16.mxu0 %v1312
  %1748 = vmatpush1.bf16.msra.mxu0 %v1311
  %1749 = vmatprep.subr.bf16.mxu0 %v1316
  %1750 = vmatpush1.bf16.msra.mxu0 %v1315
  %1751 = vmatprep.subr.bf16.mxu0 %v1320
  %1752 = vmatpush1.bf16.msra.mxu0 %v1319
  %1753 = vmatprep.subr.bf16.mxu0 %v1324
  %1754 = vmatpush1.bf16.msra.mxu0 %v1323
  %1755 = vmatprep.subr.bf16.mxu0 %v1328
  %1756 = vmatpush1.bf16.msra.mxu0 %v1327
  %1757 = vmatprep.subr.bf16.mxu0 %v1332
  %1758 = vmatpush1.bf16.msra.mxu0 %v1331
  %1759 = vmatprep.subr.bf16.mxu0 %v1336
  %1760 = vmatpush1.bf16.msra.mxu0 %v1335
  %1761 = vmatprep.subr.bf16.mxu0 %v1340
  %1762 = vmatpush1.bf16.msra.mxu0 %v1339
  %1763 = vmatprep.subr.bf16.mxu0 %v1344
  %1764 = vmatpush1.bf16.msra.mxu0 %v1343
  %1765 = vmatprep.subr.bf16.mxu0 %v1348
  %1766 = vmatpush1.bf16.msra.mxu0 %v1347
  %1767 = vmatprep.mubr.bf16.mxu0 %v258
  %1768 = vmatmul.mubr.bf16.gmra.mrb[0].mxu0 %v257
  %v1769 = vpop.f32.mrb[0].mxu0
  %v1770 = vadd.f32 %v598, %v1769
  %v1771 = vpop.f32.mrb[0].mxu0
  %v1772 = vadd.f32 %v602, %v1771
  %v1773 = vpop.f32.mrb[0].mxu0
  %v1774 = vadd.f32 %v598, %v1773
  %v1775 = vpop.f32.mrb[0].mxu0
  %v1776 = vadd.f32 %v602, %v1775
  %1777 = vmatprep.mubr.bf16.mxu0 %v265
  %1778 = vmatmul.mubr.bf16.gmra.mrb[0].mxu0 %v264
  %v1779 = vpop.f32.mrb[0].mxu0
  %v1780 = vadd.f32 %v598, %v1779
  %v1781 = vpop.f32.mrb[0].mxu0
  %v1782 = vadd.f32 %v602, %v1781
  %v1783 = vpop.f32.mrb[0].mxu0
  %v1784 = vadd.f32 %v598, %v1783
  %v1785 = vpop.f32.mrb[0].mxu0
  %v1786 = vadd.f32 %v602, %v1785
  %1787 = vmatprep.mubr.bf16.mxu0 %v272
  %1788 = vmatmul.mubr.bf16.gmra.mrb[0].mxu0 %v271
  %v1789 = vpop.f32.mrb[0].mxu0
  %v1790 = vadd.f32 %v598, %v1789
  %v1791 = vpop.f32.mrb[0].mxu0
  %v1792 = vadd.f32 %v602, %v1791
  %v1793 = vpop.f32.mrb[0].mxu0
  %v1794 = vadd.f32 %v598, %v1793
  %v1795 = vpop.f32.mrb[0].mxu0
  %v1796 = vadd.f32 %v602, %v1795
  %1797 = vmatprep.mubr.bf16.mxu0 %v279
  %1798 = vmatmul.mubr.bf16.gmra.mrb[0].mxu0 %v278
  %v1799 = vpop.f32.mrb[0].mxu0
  %v1800 = vadd.f32 %v598, %v1799
  %v1801 = vpop.f32.mrb[0].mxu0
  %v1802 = vadd.f32 %v602, %v1801
  %v1803 = vpop.f32.mrb[0].mxu0
  %v1804 = vadd.f32 %v598, %v1803
  %v1805 = vpop.f32.mrb[0].mxu0
  %v1806 = vadd.f32 %v602, %v1805
  %1807 = vmatprep.mubr.bf16.mxu0 %v286
  %1808 = vmatmul.mubr.bf16.gmra.mrb[0].mxu0 %v285
  %v1809 = vpop.f32.mrb[0].mxu0
  %v1810 = vadd.f32 %v598, %v1809
  %v1811 = vpop.f32.mrb[0].mxu0
  %v1812 = vadd.f32 %v602, %v1811
  %v1813 = vpop.f32.mrb[0].mxu0
  %v1814 = vadd.f32 %v598, %v1813
  %v1815 = vpop.f32.mrb[0].mxu0
  %v1816 = vadd.f32 %v602, %v1815
  %1817 = vmatprep.mubr.bf16.mxu0 %v293
  %1818 = vmatmul.mubr.bf16.gmra.mrb[0].mxu0 %v292
  %v1819 = vpop.f32.mrb[0].mxu0
  %v1820 = vadd.f32 %v598, %v1819
  %v1821 = vpop.f32.mrb[0].mxu0
  %v1822 = vadd.f32 %v602, %v1821
  %v1823 = vpop.f32.mrb[0].mxu0
  %v1824 = vadd.f32 %v598, %v1823
  %v1825 = vpop.f32.mrb[0].mxu0
  %v1826 = vadd.f32 %v602, %v1825
  %1827 = vmatprep.mubr.bf16.mxu0 %v300
  %1828 = vmatmul.mubr.bf16.gmra.mrb[0].mxu0 %v299
  %v1829 = vpop.f32.mrb[0].mxu0
  %v1830 = vadd.f32 %v598, %v1829
  %v1831 = vpop.f32.mrb[0].mxu0
  %v1832 = vadd.f32 %v602, %v1831
  %v1833 = vpop.f32.mrb[0].mxu0
  %v1834 = vadd.f32 %v598, %v1833
  %v1835 = vpop.f32.mrb[0].mxu0
  %v1836 = vadd.f32 %v602, %v1835
  %1837 = vmatprep.mubr.bf16.mxu0 %v307
  %1838 = vmatmul.mubr.bf16.gmra.mrb[0].mxu0 %v306
  %v1839 = vpop.f32.mrb[0].mxu0
  %v1840 = vadd.f32 %v598, %v1839
  %v1841 = vpop.f32.mrb[0].mxu0
  %v1842 = vadd.f32 %v602, %v1841
  %v1843 = vpop.f32.mrb[0].mxu0
  %v1844 = vadd.f32 %v598, %v1843
  %v1845 = vpop.f32.mrb[0].mxu0
  %v1846 = vadd.f32 %v602, %v1845
  %1847 = vmatprep.mubr.bf16.mxu0 %v314
  %1848 = vmatmul.mubr.bf16.gmra.mrb[0].mxu0 %v313
  %v1849 = vpop.f32.mrb[0].mxu0
  %v1850 = vadd.f32 %v598, %v1849
  %v1851 = vpop.f32.mrb[0].mxu0
  %v1852 = vadd.f32 %v602, %v1851
  %v1853 = vpop.f32.mrb[0].mxu0
  %v1854 = vadd.f32 %v598, %v1853
  %v1855 = vpop.f32.mrb[0].mxu0
  %v1856 = vadd.f32 %v602, %v1855
  %1857 = vmatprep.mubr.bf16.mxu0 %v321
  %1858 = vmatmul.mubr.bf16.gmra.mrb[0].mxu0 %v320
  %v1859 = vpop.f32.mrb[0].mxu0
  %v1860 = vadd.f32 %v598, %v1859
  %v1861 = vpop.f32.mrb[0].mxu0
  %v1862 = vadd.f32 %v602, %v1861
  %v1863 = vpop.f32.mrb[0].mxu0
  %v1864 = vadd.f32 %v598, %v1863
  %v1865 = vpop.f32.mrb[0].mxu0
  %v1866 = vadd.f32 %v602, %v1865
  %1867 = vmatprep.mubr.bf16.mxu0 %v328
  %1868 = vmatmul.mubr.bf16.gmra.mrb[0].mxu0 %v327
  %v1869 = vpop.f32.mrb[0].mxu0
  %v1870 = vadd.f32 %v598, %v1869
  %v1871 = vpop.f32.mrb[0].mxu0
  %v1872 = vadd.f32 %v602, %v1871
  %v1873 = vpop.f32.mrb[0].mxu0
  %v1874 = vadd.f32 %v598, %v1873
  %v1875 = vpop.f32.mrb[0].mxu0
  %v1876 = vadd.f32 %v602, %v1875
  %1877 = vmatprep.mubr.bf16.mxu0 %v335
  %1878 = vmatmul.mubr.bf16.gmra.mrb[0].mxu0 %v334
  %v1879 = vpop.f32.mrb[0].mxu0
  %v1880 = vadd.f32 %v598, %v1879
  %v1881 = vpop.f32.mrb[0].mxu0
  %v1882 = vadd.f32 %v602, %v1881
  %v1883 = vpop.f32.mrb[0].mxu0
  %v1884 = vadd.f32 %v598, %v1883
  %v1885 = vpop.f32.mrb[0].mxu0
  %v1886 = vadd.f32 %v602, %v1885
  %1887 = vmatprep.mubr.bf16.mxu0 %v342
  %1888 = vmatmul.mubr.bf16.gmra.mrb[0].mxu0 %v341
  %v1889 = vpop.f32.mrb[0].mxu0
  %v1890 = vadd.f32 %v598, %v1889
  %v1891 = vpop.f32.mrb[0].mxu0
  %v1892 = vadd.f32 %v602, %v1891
  %v1893 = vpop.f32.mrb[0].mxu0
  %v1894 = vadd.f32 %v598, %v1893
  %v1895 = vpop.f32.mrb[0].mxu0
  %v1896 = vadd.f32 %v602, %v1895
  %1897 = vmatprep.mubr.bf16.mxu0 %v349
  %1898 = vmatmul.mubr.bf16.gmra.mrb[0].mxu0 %v348
  %v1899 = vpop.f32.mrb[0].mxu0
  %v1900 = vadd.f32 %v598, %v1899
  %v1901 = vpop.f32.mrb[0].mxu0
  %v1902 = vadd.f32 %v602, %v1901
  %v1903 = vpop.f32.mrb[0].mxu0
  %v1904 = vadd.f32 %v598, %v1903
  %v1905 = vpop.f32.mrb[0].mxu0
  %v1906 = vadd.f32 %v602, %v1905
  %1907 = vmatprep.mubr.bf16.mxu0 %v356
  %1908 = vmatmul.mubr.bf16.gmra.mrb[0].mxu0 %v355
  %v1909 = vpop.f32.mrb[0].mxu0
  %v1910 = vadd.f32 %v598, %v1909
  %v1911 = vpop.f32.mrb[0].mxu0
  %v1912 = vadd.f32 %v602, %v1911
  %v1913 = vpop.f32.mrb[0].mxu0
  %v1914 = vadd.f32 %v598, %v1913
  %v1915 = vpop.f32.mrb[0].mxu0
  %v1916 = vadd.f32 %v602, %v1915
  %1917 = vmatprep.mubr.bf16.mxu0 %v363
  %1918 = vmatmul.mubr.bf16.gmra.mrb[0].mxu0 %v362
  %v1919 = vpop.f32.mrb[0].mxu0
  %v1920 = vadd.f32 %v598, %v1919
  %v1921 = vpop.f32.mrb[0].mxu0
  %v1922 = vadd.f32 %v602, %v1921
  %v1923 = vpop.f32.mrb[0].mxu0
  %v1924 = vadd.f32 %v598, %v1923
  %v1925 = vpop.f32.mrb[0].mxu0
  %v1926 = vadd.f32 %v602, %v1925
  %1927 = vdwg.mxu0
  %1928 = vmatprep.subr.bf16.mxu0 %v1352
  %1929 = vmatpush1.bf16.msra.mxu0 %v1351
  %1930 = vmatprep.subr.bf16.mxu0 %v1356
  %1931 = vmatpush1.bf16.msra.mxu0 %v1355
  %1932 = vmatprep.subr.bf16.mxu0 %v1360
  %1933 = vmatpush1.bf16.msra.mxu0 %v1359
  %1934 = vmatprep.subr.bf16.mxu0 %v1364
  %1935 = vmatpush1.bf16.msra.mxu0 %v1363
  %1936 = vmatprep.subr.bf16.mxu0 %v1368
  %1937 = vmatpush1.bf16.msra.mxu0 %v1367
  %1938 = vmatprep.subr.bf16.mxu0 %v1372
  %1939 = vmatpush1.bf16.msra.mxu0 %v1371
  %1940 = vmatprep.subr.bf16.mxu0 %v1376
  %1941 = vmatpush1.bf16.msra.mxu0 %v1375
  %1942 = vmatprep.subr.bf16.mxu0 %v1380
  %1943 = vmatpush1.bf16.msra.mxu0 %v1379
  %1944 = vmatprep.subr.bf16.mxu0 %v1384
  %1945 = vmatpush1.bf16.msra.mxu0 %v1383
  %1946 = vmatprep.subr.bf16.mxu0 %v1388
  %1947 = vmatpush1.bf16.msra.mxu0 %v1387
  %1948 = vmatprep.subr.bf16.mxu0 %v1392
  %1949 = vmatpush1.bf16.msra.mxu0 %v1391
  %1950 = vmatprep.subr.bf16.mxu0 %v1396
  %1951 = vmatpush1.bf16.msra.mxu0 %v1395
  %1952 = vmatprep.subr.bf16.mxu0 %v1400
  %1953 = vmatpush1.bf16.msra.mxu0 %v1399
  %1954 = vmatprep.subr.bf16.mxu0 %v1404
  %1955 = vmatpush1.bf16.msra.mxu0 %v1403
  %1956 = vmatprep.subr.bf16.mxu0 %v1408
  %1957 = vmatpush1.bf16.msra.mxu0 %v1407
  %1958 = vmatprep.subr.bf16.mxu0 %v1412
  %1959 = vmatpush1.bf16.msra.mxu0 %v1411
  %1960 = vmatprep.mubr.bf16.mxu0 %v260
  %1961 = vmatmul.mubr.bf16.gmra.mrb[0].mxu0 %v259
  %v1962 = vpop.f32.mrb[0].mxu0
  %v1963 = vadd.f32 %v1770, %v1962
  %v1964 = vpop.f32.mrb[0].mxu0
  %v1965 = vadd.f32 %v1772, %v1964
  %v1966 = vpop.f32.mrb[0].mxu0
  %v1967 = vadd.f32 %v1774, %v1966
  %v1968 = vpop.f32.mrb[0].mxu0
  %v1969 = vadd.f32 %v1776, %v1968
  %1970 = vmatprep.mubr.bf16.mxu0 %v267
  %1971 = vmatmul.mubr.bf16.gmra.mrb[0].mxu0 %v266
  %v1972 = vpop.f32.mrb[0].mxu0
  %v1973 = vadd.f32 %v1780, %v1972
  %v1974 = vpop.f32.mrb[0].mxu0
  %v1975 = vadd.f32 %v1782, %v1974
  %v1976 = vpop.f32.mrb[0].mxu0
  %v1977 = vadd.f32 %v1784, %v1976
  %v1978 = vpop.f32.mrb[0].mxu0
  %v1979 = vadd.f32 %v1786, %v1978
  %1980 = vmatprep.mubr.bf16.mxu0 %v274
  %1981 = vmatmul.mubr.bf16.gmra.mrb[0].mxu0 %v273
  %v1982 = vpop.f32.mrb[0].mxu0
  %v1983 = vadd.f32 %v1790, %v1982
  %v1984 = vpop.f32.mrb[0].mxu0
  %v1985 = vadd.f32 %v1792, %v1984
  %v1986 = vpop.f32.mrb[0].mxu0
  %v1987 = vadd.f32 %v1794, %v1986
  %v1988 = vpop.f32.mrb[0].mxu0
  %v1989 = vadd.f32 %v1796, %v1988
  %1990 = vmatprep.mubr.bf16.mxu0 %v281
  %1991 = vmatmul.mubr.bf16.gmra.mrb[0].mxu0 %v280
  %v1992 = vpop.f32.mrb[0].mxu0
  %v1993 = vadd.f32 %v1800, %v1992
  %v1994 = vpop.f32.mrb[0].mxu0
  %v1995 = vadd.f32 %v1802, %v1994
  %v1996 = vpop.f32.mrb[0].mxu0
  %v1997 = vadd.f32 %v1804, %v1996
  %v1998 = vpop.f32.mrb[0].mxu0
  %v1999 = vadd.f32 %v1806, %v1998
  %2000 = vmatprep.mubr.bf16.mxu0 %v288
  %2001 = vmatmul.mubr.bf16.gmra.mrb[0].mxu0 %v287
  %v2002 = vpop.f32.mrb[0].mxu0
  %v2003 = vadd.f32 %v1810, %v2002
  %v2004 = vpop.f32.mrb[0].mxu0
  %v2005 = vadd.f32 %v1812, %v2004
  %v2006 = vpop.f32.mrb[0].mxu0
  %v2007 = vadd.f32 %v1814, %v2006
  %v2008 = vpop.f32.mrb[0].mxu0
  %v2009 = vadd.f32 %v1816, %v2008
  %2010 = vmatprep.mubr.bf16.mxu0 %v295
  %2011 = vmatmul.mubr.bf16.gmra.mrb[0].mxu0 %v294
  %v2012 = vpop.f32.mrb[0].mxu0
  %v2013 = vadd.f32 %v1820, %v2012
  %v2014 = vpop.f32.mrb[0].mxu0
  %v2015 = vadd.f32 %v1822, %v2014
  %v2016 = vpop.f32.mrb[0].mxu0
  %v2017 = vadd.f32 %v1824, %v2016
  %v2018 = vpop.f32.mrb[0].mxu0
  %v2019 = vadd.f32 %v1826, %v2018
  %2020 = vmatprep.mubr.bf16.mxu0 %v302
  %2021 = vmatmul.mubr.bf16.gmra.mrb[0].mxu0 %v301
  %v2022 = vpop.f32.mrb[0].mxu0
  %v2023 = vadd.f32 %v1830, %v2022
  %v2024 = vpop.f32.mrb[0].mxu0
  %v2025 = vadd.f32 %v1832, %v2024
  %v2026 = vpop.f32.mrb[0].mxu0
  %v2027 = vadd.f32 %v1834, %v2026
  %v2028 = vpop.f32.mrb[0].mxu0
  %v2029 = vadd.f32 %v1836, %v2028
  %2030 = vmatprep.mubr.bf16.mxu0 %v309
  %2031 = vmatmul.mubr.bf16.gmra.mrb[0].mxu0 %v308
  %v2032 = vpop.f32.mrb[0].mxu0
  %v2033 = vadd.f32 %v1840, %v2032
  %v2034 = vpop.f32.mrb[0].mxu0
  %v2035 = vadd.f32 %v1842, %v2034
  %v2036 = vpop.f32.mrb[0].mxu0
  %v2037 = vadd.f32 %v1844, %v2036
  %v2038 = vpop.f32.mrb[0].mxu0
  %v2039 = vadd.f32 %v1846, %v2038
  %2040 = vmatprep.mubr.bf16.mxu0 %v316
  %2041 = vmatmul.mubr.bf16.gmra.mrb[0].mxu0 %v315
  %v2042 = vpop.f32.mrb[0].mxu0
  %v2043 = vadd.f32 %v1850, %v2042
  %v2044 = vpop.f32.mrb[0].mxu0
  %v2045 = vadd.f32 %v1852, %v2044
  %v2046 = vpop.f32.mrb[0].mxu0
  %v2047 = vadd.f32 %v1854, %v2046
  %v2048 = vpop.f32.mrb[0].mxu0
  %v2049 = vadd.f32 %v1856, %v2048
  %2050 = vmatprep.mubr.bf16.mxu0 %v323
  %2051 = vmatmul.mubr.bf16.gmra.mrb[0].mxu0 %v322
  %v2052 = vpop.f32.mrb[0].mxu0
  %v2053 = vadd.f32 %v1860, %v2052
  %v2054 = vpop.f32.mrb[0].mxu0
  %v2055 = vadd.f32 %v1862, %v2054
  %v2056 = vpop.f32.mrb[0].mxu0
  %v2057 = vadd.f32 %v1864, %v2056
  %v2058 = vpop.f32.mrb[0].mxu0
  %v2059 = vadd.f32 %v1866, %v2058
  %2060 = vmatprep.mubr.bf16.mxu0 %v330
  %2061 = vmatmul.mubr.bf16.gmra.mrb[0].mxu0 %v329
  %v2062 = vpop.f32.mrb[0].mxu0
  %v2063 = vadd.f32 %v1870, %v2062
  %v2064 = vpop.f32.mrb[0].mxu0
  %v2065 = vadd.f32 %v1872, %v2064
  %v2066 = vpop.f32.mrb[0].mxu0
  %v2067 = vadd.f32 %v1874, %v2066
  %v2068 = vpop.f32.mrb[0].mxu0
  %v2069 = vadd.f32 %v1876, %v2068
  %2070 = vmatprep.mubr.bf16.mxu0 %v337
  %2071 = vmatmul.mubr.bf16.gmra.mrb[0].mxu0 %v336
  %v2072 = vpop.f32.mrb[0].mxu0
  %v2073 = vadd.f32 %v1880, %v2072
  %v2074 = vpop.f32.mrb[0].mxu0
  %v2075 = vadd.f32 %v1882, %v2074
  %v2076 = vpop.f32.mrb[0].mxu0
  %v2077 = vadd.f32 %v1884, %v2076
  %v2078 = vpop.f32.mrb[0].mxu0
  %v2079 = vadd.f32 %v1886, %v2078
  %2080 = vmatprep.mubr.bf16.mxu0 %v344
  %2081 = vmatmul.mubr.bf16.gmra.mrb[0].mxu0 %v343
  %v2082 = vpop.f32.mrb[0].mxu0
  %v2083 = vadd.f32 %v1890, %v2082
  %v2084 = vpop.f32.mrb[0].mxu0
  %v2085 = vadd.f32 %v1892, %v2084
  %v2086 = vpop.f32.mrb[0].mxu0
  %v2087 = vadd.f32 %v1894, %v2086
  %v2088 = vpop.f32.mrb[0].mxu0
  %v2089 = vadd.f32 %v1896, %v2088
  %2090 = vmatprep.mubr.bf16.mxu0 %v351
  %2091 = vmatmul.mubr.bf16.gmra.mrb[0].mxu0 %v350
  %v2092 = vpop.f32.mrb[0].mxu0
  %v2093 = vadd.f32 %v1900, %v2092
  %v2094 = vpop.f32.mrb[0].mxu0
  %v2095 = vadd.f32 %v1902, %v2094
  %v2096 = vpop.f32.mrb[0].mxu0
  %v2097 = vadd.f32 %v1904, %v2096
  %v2098 = vpop.f32.mrb[0].mxu0
  %v2099 = vadd.f32 %v1906, %v2098
  %2100 = vmatprep.mubr.bf16.mxu0 %v358
  %2101 = vmatmul.mubr.bf16.gmra.mrb[0].mxu0 %v357
  %v2102 = vpop.f32.mrb[0].mxu0
  %v2103 = vadd.f32 %v1910, %v2102
  %v2104 = vpop.f32.mrb[0].mxu0
  %v2105 = vadd.f32 %v1912, %v2104
  %v2106 = vpop.f32.mrb[0].mxu0
  %v2107 = vadd.f32 %v1914, %v2106
  %v2108 = vpop.f32.mrb[0].mxu0
  %v2109 = vadd.f32 %v1916, %v2108
  %2110 = vmatprep.mubr.bf16.mxu0 %v365
  %2111 = vmatmul.mubr.bf16.gmra.mrb[0].mxu0 %v364
  %v2112 = vpop.f32.mrb[0].mxu0
  %v2113 = vadd.f32 %v1920, %v2112
  %v2114 = vpop.f32.mrb[0].mxu0
  %v2115 = vadd.f32 %v1922, %v2114
  %v2116 = vpop.f32.mrb[0].mxu0
  %v2117 = vadd.f32 %v1924, %v2116
  %v2118 = vpop.f32.mrb[0].mxu0
  %v2119 = vadd.f32 %v1926, %v2118
  %2120 = vdwg.mxu0
  %2121 = vmatprep.subr.bf16.mxu0 %v1416
  %2122 = vmatpush1.bf16.msra.mxu0 %v1415
  %2123 = vmatprep.subr.bf16.mxu0 %v1420
  %2124 = vmatpush1.bf16.msra.mxu0 %v1419
  %2125 = vmatprep.subr.bf16.mxu0 %v1424
  %2126 = vmatpush1.bf16.msra.mxu0 %v1423
  %2127 = vmatprep.subr.bf16.mxu0 %v1428
  %2128 = vmatpush1.bf16.msra.mxu0 %v1427
  %2129 = vmatprep.subr.bf16.mxu0 %v1432
  %2130 = vmatpush1.bf16.msra.mxu0 %v1431
  %2131 = vmatprep.subr.bf16.mxu0 %v1436
  %2132 = vmatpush1.bf16.msra.mxu0 %v1435
  %2133 = vmatprep.subr.bf16.mxu0 %v1440
  %2134 = vmatpush1.bf16.msra.mxu0 %v1439
  %2135 = vmatprep.subr.bf16.mxu0 %v1444
  %2136 = vmatpush1.bf16.msra.mxu0 %v1443
  %2137 = vmatprep.subr.bf16.mxu0 %v1448
  %2138 = vmatpush1.bf16.msra.mxu0 %v1447
  %2139 = vmatprep.subr.bf16.mxu0 %v1452
  %2140 = vmatpush1.bf16.msra.mxu0 %v1451
  %2141 = vmatprep.subr.bf16.mxu0 %v1456
  %2142 = vmatpush1.bf16.msra.mxu0 %v1455
  %2143 = vmatprep.subr.bf16.mxu0 %v1460
  %2144 = vmatpush1.bf16.msra.mxu0 %v1459
  %2145 = vmatprep.subr.bf16.mxu0 %v1464
  %2146 = vmatpush1.bf16.msra.mxu0 %v1463
  %2147 = vmatprep.subr.bf16.mxu0 %v1468
  %2148 = vmatpush1.bf16.msra.mxu0 %v1467
  %2149 = vmatprep.subr.bf16.mxu0 %v1472
  %2150 = vmatpush1.bf16.msra.mxu0 %v1471
  %2151 = vmatprep.subr.bf16.mxu0 %v1476
  %2152 = vmatpush1.bf16.msra.mxu0 %v1475
  %2153 = vmatprep.mubr.bf16.mxu0 %v262
  %2154 = vmatmul.mubr.bf16.gmra.mrb[0].mxu0 %v261
  %v2155 = vpop.f32.mrb[0].mxu0
  %v2156 = vadd.f32 %v1963, %v2155
  %v2157 = vpop.f32.mrb[0].mxu0
  %v2158 = vadd.f32 %v1965, %v2157
  %v2159 = vpop.f32.mrb[0].mxu0
  %v2160 = vadd.f32 %v1967, %v2159
  %v2161 = vpop.f32.mrb[0].mxu0
  %v2162 = vadd.f32 %v1969, %v2161
  %2163 = vmatprep.mubr.bf16.mxu0 %v269
  %2164 = vmatmul.mubr.bf16.gmra.mrb[0].mxu0 %v268
  %v2165 = vpop.f32.mrb[0].mxu0
  %v2166 = vadd.f32 %v1973, %v2165
  %v2167 = vpop.f32.mrb[0].mxu0
  %v2168 = vadd.f32 %v1975, %v2167
  %v2169 = vpop.f32.mrb[0].mxu0
  %v2170 = vadd.f32 %v1977, %v2169
  %v2171 = vpop.f32.mrb[0].mxu0
  %v2172 = vadd.f32 %v1979, %v2171
  %2173 = vmatprep.mubr.bf16.mxu0 %v276
  %2174 = vmatmul.mubr.bf16.gmra.mrb[0].mxu0 %v275
  %v2175 = vpop.f32.mrb[0].mxu0
  %v2176 = vadd.f32 %v1983, %v2175
  %v2177 = vpop.f32.mrb[0].mxu0
  %v2178 = vadd.f32 %v1985, %v2177
  %v2179 = vpop.f32.mrb[0].mxu0
  %v2180 = vadd.f32 %v1987, %v2179
  %v2181 = vpop.f32.mrb[0].mxu0
  %v2182 = vadd.f32 %v1989, %v2181
  %2183 = vmatprep.mubr.bf16.mxu0 %v283
  %2184 = vmatmul.mubr.bf16.gmra.mrb[0].mxu0 %v282
  %v2185 = vpop.f32.mrb[0].mxu0
  %v2186 = vadd.f32 %v1993, %v2185
  %v2187 = vpop.f32.mrb[0].mxu0
  %v2188 = vadd.f32 %v1995, %v2187
  %v2189 = vpop.f32.mrb[0].mxu0
  %v2190 = vadd.f32 %v1997, %v2189
  %v2191 = vpop.f32.mrb[0].mxu0
  %v2192 = vadd.f32 %v1999, %v2191
  %2193 = vmatprep.mubr.bf16.mxu0 %v290
  %2194 = vmatmul.mubr.bf16.gmra.mrb[0].mxu0 %v289
  %v2195 = vpop.f32.mrb[0].mxu0
  %v2196 = vadd.f32 %v2003, %v2195
  %v2197 = vpop.f32.mrb[0].mxu0
  %v2198 = vadd.f32 %v2005, %v2197
  %v2199 = vpop.f32.mrb[0].mxu0
  %v2200 = vadd.f32 %v2007, %v2199
  %v2201 = vpop.f32.mrb[0].mxu0
  %v2202 = vadd.f32 %v2009, %v2201
  %2203 = vmatprep.mubr.bf16.mxu0 %v297
  %2204 = vmatmul.mubr.bf16.gmra.mrb[0].mxu0 %v296
  %v2205 = vpop.f32.mrb[0].mxu0
  %v2206 = vadd.f32 %v2013, %v2205
  %v2207 = vpop.f32.mrb[0].mxu0
  %v2208 = vadd.f32 %v2015, %v2207
  %v2209 = vpop.f32.mrb[0].mxu0
  %v2210 = vadd.f32 %v2017, %v2209
  %v2211 = vpop.f32.mrb[0].mxu0
  %v2212 = vadd.f32 %v2019, %v2211
  %2213 = vmatprep.mubr.bf16.mxu0 %v304
  %2214 = vmatmul.mubr.bf16.gmra.mrb[0].mxu0 %v303
  %v2215 = vpop.f32.mrb[0].mxu0
  %v2216 = vadd.f32 %v2023, %v2215
  %v2217 = vpop.f32.mrb[0].mxu0
  %v2218 = vadd.f32 %v2025, %v2217
  %v2219 = vpop.f32.mrb[0].mxu0
  %v2220 = vadd.f32 %v2027, %v2219
  %v2221 = vpop.f32.mrb[0].mxu0
  %v2222 = vadd.f32 %v2029, %v2221
  %2223 = vmatprep.mubr.bf16.mxu0 %v311
  %2224 = vmatmul.mubr.bf16.gmra.mrb[0].mxu0 %v310
  %v2225 = vpop.f32.mrb[0].mxu0
  %v2226 = vadd.f32 %v2033, %v2225
  %v2227 = vpop.f32.mrb[0].mxu0
  %v2228 = vadd.f32 %v2035, %v2227
  %v2229 = vpop.f32.mrb[0].mxu0
  %v2230 = vadd.f32 %v2037, %v2229
  %v2231 = vpop.f32.mrb[0].mxu0
  %v2232 = vadd.f32 %v2039, %v2231
  %2233 = vmatprep.mubr.bf16.mxu0 %v318
  %2234 = vmatmul.mubr.bf16.gmra.mrb[0].mxu0 %v317
  %v2235 = vpop.f32.mrb[0].mxu0
  %v2236 = vadd.f32 %v2043, %v2235
  %v2237 = vpop.f32.mrb[0].mxu0
  %v2238 = vadd.f32 %v2045, %v2237
  %v2239 = vpop.f32.mrb[0].mxu0
  %v2240 = vadd.f32 %v2047, %v2239
  %v2241 = vpop.f32.mrb[0].mxu0
  %v2242 = vadd.f32 %v2049, %v2241
  %2243 = vmatprep.mubr.bf16.mxu0 %v325
  %2244 = vmatmul.mubr.bf16.gmra.mrb[0].mxu0 %v324
  %v2245 = vpop.f32.mrb[0].mxu0
  %v2246 = vadd.f32 %v2053, %v2245
  %v2247 = vpop.f32.mrb[0].mxu0
  %v2248 = vadd.f32 %v2055, %v2247
  %v2249 = vpop.f32.mrb[0].mxu0
  %v2250 = vadd.f32 %v2057, %v2249
  %v2251 = vpop.f32.mrb[0].mxu0
  %v2252 = vadd.f32 %v2059, %v2251
  %2253 = vmatprep.mubr.bf16.mxu0 %v332
  %2254 = vmatmul.mubr.bf16.gmra.mrb[0].mxu0 %v331
  %v2255 = vpop.f32.mrb[0].mxu0
  %v2256 = vadd.f32 %v2063, %v2255
  %v2257 = vpop.f32.mrb[0].mxu0
  %v2258 = vadd.f32 %v2065, %v2257
  %v2259 = vpop.f32.mrb[0].mxu0
  %v2260 = vadd.f32 %v2067, %v2259
  %v2261 = vpop.f32.mrb[0].mxu0
  %v2262 = vadd.f32 %v2069, %v2261
  %2263 = vmatprep.mubr.bf16.mxu0 %v339
  %2264 = vmatmul.mubr.bf16.gmra.mrb[0].mxu0 %v338
  %v2265 = vpop.f32.mrb[0].mxu0
  %v2266 = vadd.f32 %v2073, %v2265
  %v2267 = vpop.f32.mrb[0].mxu0
  %v2268 = vadd.f32 %v2075, %v2267
  %v2269 = vpop.f32.mrb[0].mxu0
  %v2270 = vadd.f32 %v2077, %v2269
  %v2271 = vpop.f32.mrb[0].mxu0
  %v2272 = vadd.f32 %v2079, %v2271
  %2273 = vmatprep.mubr.bf16.mxu0 %v346
  %2274 = vmatmul.mubr.bf16.gmra.mrb[0].mxu0 %v345
  %v2275 = vpop.f32.mrb[0].mxu0
  %v2276 = vadd.f32 %v2083, %v2275
  %v2277 = vpop.f32.mrb[0].mxu0
  %v2278 = vadd.f32 %v2085, %v2277
  %v2279 = vpop.f32.mrb[0].mxu0
  %v2280 = vadd.f32 %v2087, %v2279
  %v2281 = vpop.f32.mrb[0].mxu0
  %v2282 = vadd.f32 %v2089, %v2281
  %2283 = vmatprep.mubr.bf16.mxu0 %v353
  %2284 = vmatmul.mubr.bf16.gmra.mrb[0].mxu0 %v352
  %v2285 = vpop.f32.mrb[0].mxu0
  %v2286 = vadd.f32 %v2093, %v2285
  %v2287 = vpop.f32.mrb[0].mxu0
  %v2288 = vadd.f32 %v2095, %v2287
  %v2289 = vpop.f32.mrb[0].mxu0
  %v2290 = vadd.f32 %v2097, %v2289
  %v2291 = vpop.f32.mrb[0].mxu0
  %v2292 = vadd.f32 %v2099, %v2291
  %2293 = vmatprep.mubr.bf16.mxu0 %v360
  %2294 = vmatmul.mubr.bf16.gmra.mrb[0].mxu0 %v359
  %v2295 = vpop.f32.mrb[0].mxu0
  %v2296 = vadd.f32 %v2103, %v2295
  %v2297 = vpop.f32.mrb[0].mxu0
  %v2298 = vadd.f32 %v2105, %v2297
  %v2299 = vpop.f32.mrb[0].mxu0
  %v2300 = vadd.f32 %v2107, %v2299
  %v2301 = vpop.f32.mrb[0].mxu0
  %v2302 = vadd.f32 %v2109, %v2301
  %2303 = vmatprep.mubr.bf16.mxu0 %v367
  %2304 = vmatmul.mubr.bf16.gmra.mrb[0].mxu0 %v366
  %v2305 = vpop.f32.mrb[0].mxu0
  %v2306 = vadd.f32 %v2113, %v2305
  %v2307 = vpop.f32.mrb[0].mxu0
  %v2308 = vadd.f32 %v2115, %v2307
  %v2309 = vpop.f32.mrb[0].mxu0
  %v2310 = vadd.f32 %v2117, %v2309
  %v2311 = vpop.f32.mrb[0].mxu0
  %v2312 = vadd.f32 %v2119, %v2311
  %2313 = vdwg.mxu0
  %2314 = vmatprep.subr.bf16.mxu0 %v1480
  %2315 = vmatpush1.bf16.msra.mxu0 %v1479
  %2316 = vmatprep.subr.bf16.mxu0 %v1484
  %2317 = vmatpush1.bf16.msra.mxu0 %v1483
  %2318 = vmatprep.subr.bf16.mxu0 %v1488
  %2319 = vmatpush1.bf16.msra.mxu0 %v1487
  %2320 = vmatprep.subr.bf16.mxu0 %v1492
  %2321 = vmatpush1.bf16.msra.mxu0 %v1491
  %2322 = vmatprep.subr.bf16.mxu0 %v1496
  %2323 = vmatpush1.bf16.msra.mxu0 %v1495
  %2324 = vmatprep.subr.bf16.mxu0 %v1500
  %2325 = vmatpush1.bf16.msra.mxu0 %v1499
  %2326 = vmatprep.subr.bf16.mxu0 %v1504
  %2327 = vmatpush1.bf16.msra.mxu0 %v1503
  %2328 = vmatprep.subr.bf16.mxu0 %v1508
  %2329 = vmatpush1.bf16.msra.mxu0 %v1507
  %2330 = vmatprep.subr.bf16.mxu0 0
  %2331 = vmatpush1.bf16.msra.mxu0 0
  %2332 = vmatprep.subr.bf16.mxu0 0
  %2333 = vmatpush1.bf16.msra.mxu0 0
  %2334 = vmatprep.subr.bf16.mxu0 0
  %2335 = vmatpush1.bf16.msra.mxu0 0
  %2336 = vmatprep.subr.bf16.mxu0 0
  %2337 = vmatpush1.bf16.msra.mxu0 0
  %2338 = vmatprep.subr.bf16.mxu0 0
  %2339 = vmatpush1.bf16.msra.mxu0 0
  %2340 = vmatprep.subr.bf16.mxu0 0
  %2341 = vmatpush1.bf16.msra.mxu0 0
  %2342 = vmatprep.subr.bf16.mxu0 0
  %2343 = vmatpush1.bf16.msra.mxu0 0
  %2344 = vmatprep.subr.bf16.mxu0 0
  %2345 = vmatpush1.bf16.msra.mxu0 0
  %2346 = vmatprep.mubr.bf16.mxu0 0
  %2347 = vmatmul.mubr.bf16.gmra.mrb[0].mxu0 %v263
  %v2348 = vpop.f32.mrb[0].mxu0
  %v2349 = vadd.f32 %v2156, %v2348
  %v2350 = vpop.f32.mrb[0].mxu0
  %v2351 = vadd.f32 %v2158, %v2350
  %v2352 = vpop.f32.mrb[0].mxu0
  %v2353 = vadd.f32 %v2160, %v2352
  %v2354 = vpop.f32.mrb[0].mxu0
  %v2355 = vadd.f32 %v2162, %v2354
  %2356 = vmatprep.mubr.bf16.mxu0 0
  %2357 = vmatmul.mubr.bf16.gmra.mrb[0].mxu0 %v270
  %v2358 = vpop.f32.mrb[0].mxu0
  %v2359 = vadd.f32 %v2166, %v2358
  %v2360 = vpop.f32.mrb[0].mxu0
  %v2361 = vadd.f32 %v2168, %v2360
  %v2362 = vpop.f32.mrb[0].mxu0
  %v2363 = vadd.f32 %v2170, %v2362
  %v2364 = vpop.f32.mrb[0].mxu0
  %v2365 = vadd.f32 %v2172, %v2364
  %2366 = vmatprep.mubr.bf16.mxu0 0
  %2367 = vmatmul.mubr.bf16.gmra.mrb[0].mxu0 %v277
  %v2368 = vpop.f32.mrb[0].mxu0
  %v2369 = vadd.f32 %v2176, %v2368
  %v2370 = vpop.f32.mrb[0].mxu0
  %v2371 = vadd.f32 %v2178, %v2370
  %v2372 = vpop.f32.mrb[0].mxu0
  %v2373 = vadd.f32 %v2180, %v2372
  %v2374 = vpop.f32.mrb[0].mxu0
  %v2375 = vadd.f32 %v2182, %v2374
  %2376 = vmatprep.mubr.bf16.mxu0 0
  %2377 = vmatmul.mubr.bf16.gmra.mrb[0].mxu0 %v284
  %v2378 = vpop.f32.mrb[0].mxu0
  %v2379 = vadd.f32 %v2186, %v2378
  %v2380 = vpop.f32.mrb[0].mxu0
  %v2381 = vadd.f32 %v2188, %v2380
  %v2382 = vpop.f32.mrb[0].mxu0
  %v2383 = vadd.f32 %v2190, %v2382
  %v2384 = vpop.f32.mrb[0].mxu0
  %v2385 = vadd.f32 %v2192, %v2384
  %2386 = vmatprep.mubr.bf16.mxu0 0
  %2387 = vmatmul.mubr.bf16.gmra.mrb[0].mxu0 %v291
  %v2388 = vpop.f32.mrb[0].mxu0
  %v2389 = vadd.f32 %v2196, %v2388
  %v2390 = vpop.f32.mrb[0].mxu0
  %v2391 = vadd.f32 %v2198, %v2390
  %v2392 = vpop.f32.mrb[0].mxu0
  %v2393 = vadd.f32 %v2200, %v2392
  %v2394 = vpop.f32.mrb[0].mxu0
  %v2395 = vadd.f32 %v2202, %v2394
  %2396 = vmatprep.mubr.bf16.mxu0 0
  %2397 = vmatmul.mubr.bf16.gmra.mrb[0].mxu0 %v298
  %v2398 = vpop.f32.mrb[0].mxu0
  %v2399 = vadd.f32 %v2206, %v2398
  %v2400 = vpop.f32.mrb[0].mxu0
  %v2401 = vadd.f32 %v2208, %v2400
  %v2402 = vpop.f32.mrb[0].mxu0
  %v2403 = vadd.f32 %v2210, %v2402
  %v2404 = vpop.f32.mrb[0].mxu0
  %v2405 = vadd.f32 %v2212, %v2404
  %2406 = vmatprep.mubr.bf16.mxu0 0
  %2407 = vmatmul.mubr.bf16.gmra.mrb[0].mxu0 %v305
  %v2408 = vpop.f32.mrb[0].mxu0
  %v2409 = vadd.f32 %v2216, %v2408
  %v2410 = vpop.f32.mrb[0].mxu0
  %v2411 = vadd.f32 %v2218, %v2410
  %v2412 = vpop.f32.mrb[0].mxu0
  %v2413 = vadd.f32 %v2220, %v2412
  %v2414 = vpop.f32.mrb[0].mxu0
  %v2415 = vadd.f32 %v2222, %v2414
  %2416 = vmatprep.mubr.bf16.mxu0 0
  %2417 = vmatmul.mubr.bf16.gmra.mrb[0].mxu0 %v312
  %v2418 = vpop.f32.mrb[0].mxu0
  %v2419 = vadd.f32 %v2226, %v2418
  %v2420 = vpop.f32.mrb[0].mxu0
  %v2421 = vadd.f32 %v2228, %v2420
  %v2422 = vpop.f32.mrb[0].mxu0
  %v2423 = vadd.f32 %v2230, %v2422
  %v2424 = vpop.f32.mrb[0].mxu0
  %v2425 = vadd.f32 %v2232, %v2424
  %2426 = vmatprep.mubr.bf16.mxu0 0
  %2427 = vmatmul.mubr.bf16.gmra.mrb[0].mxu0 %v319
  %v2428 = vpop.f32.mrb[0].mxu0
  %v2429 = vadd.f32 %v2236, %v2428
  %v2430 = vpop.f32.mrb[0].mxu0
  %v2431 = vadd.f32 %v2238, %v2430
  %v2432 = vpop.f32.mrb[0].mxu0
  %v2433 = vadd.f32 %v2240, %v2432
  %v2434 = vpop.f32.mrb[0].mxu0
  %v2435 = vadd.f32 %v2242, %v2434
  %2436 = vmatprep.mubr.bf16.mxu0 0
  %2437 = vmatmul.mubr.bf16.gmra.mrb[0].mxu0 %v326
  %v2438 = vpop.f32.mrb[0].mxu0
  %v2439 = vadd.f32 %v2246, %v2438
  %v2440 = vpop.f32.mrb[0].mxu0
  %v2441 = vadd.f32 %v2248, %v2440
  %v2442 = vpop.f32.mrb[0].mxu0
  %v2443 = vadd.f32 %v2250, %v2442
  %v2444 = vpop.f32.mrb[0].mxu0
  %v2445 = vadd.f32 %v2252, %v2444
  %2446 = vmatprep.mubr.bf16.mxu0 0
  %2447 = vmatmul.mubr.bf16.gmra.mrb[0].mxu0 %v333
  %v2448 = vpop.f32.mrb[0].mxu0
  %v2449 = vadd.f32 %v2256, %v2448
  %v2450 = vpop.f32.mrb[0].mxu0
  %v2451 = vadd.f32 %v2258, %v2450
  %v2452 = vpop.f32.mrb[0].mxu0
  %v2453 = vadd.f32 %v2260, %v2452
  %v2454 = vpop.f32.mrb[0].mxu0
  %v2455 = vadd.f32 %v2262, %v2454
  %2456 = vmatprep.mubr.bf16.mxu0 0
  %2457 = vmatmul.mubr.bf16.gmra.mrb[0].mxu0 %v340
  %v2458 = vpop.f32.mrb[0].mxu0
  %v2459 = vadd.f32 %v2266, %v2458
  %v2460 = vpop.f32.mrb[0].mxu0
  %v2461 = vadd.f32 %v2268, %v2460
  %v2462 = vpop.f32.mrb[0].mxu0
  %v2463 = vadd.f32 %v2270, %v2462
  %v2464 = vpop.f32.mrb[0].mxu0
  %v2465 = vadd.f32 %v2272, %v2464
  %2466 = vmatprep.mubr.bf16.mxu0 0
  %2467 = vmatmul.mubr.bf16.gmra.mrb[0].mxu0 %v347
  %v2468 = vpop.f32.mrb[0].mxu0
  %v2469 = vadd.f32 %v2276, %v2468
  %v2470 = vpop.f32.mrb[0].mxu0
  %v2471 = vadd.f32 %v2278, %v2470
  %v2472 = vpop.f32.mrb[0].mxu0
  %v2473 = vadd.f32 %v2280, %v2472
  %v2474 = vpop.f32.mrb[0].mxu0
  %v2475 = vadd.f32 %v2282, %v2474
  %2476 = vmatprep.mubr.bf16.mxu0 0
  %2477 = vmatmul.mubr.bf16.gmra.mrb[0].mxu0 %v354
  %v2478 = vpop.f32.mrb[0].mxu0
  %v2479 = vadd.f32 %v2286, %v2478
  %v2480 = vpop.f32.mrb[0].mxu0
  %v2481 = vadd.f32 %v2288, %v2480
  %v2482 = vpop.f32.mrb[0].mxu0
  %v2483 = vadd.f32 %v2290, %v2482
  %v2484 = vpop.f32.mrb[0].mxu0
  %v2485 = vadd.f32 %v2292, %v2484
  %2486 = vmatprep.mubr.bf16.mxu0 0
  %2487 = vmatmul.mubr.bf16.gmra.mrb[0].mxu0 %v361
  %v2488 = vpop.f32.mrb[0].mxu0
  %v2489 = vadd.f32 %v2296, %v2488
  %v2490 = vpop.f32.mrb[0].mxu0
  %v2491 = vadd.f32 %v2298, %v2490
  %v2492 = vpop.f32.mrb[0].mxu0
  %v2493 = vadd.f32 %v2300, %v2492
  %v2494 = vpop.f32.mrb[0].mxu0
  %v2495 = vadd.f32 %v2302, %v2494
  %2496 = vmatprep.mubr.bf16.mxu0 0
  %2497 = vmatmul.mubr.bf16.gmra.mrb[0].mxu0 %v368
  %v2498 = vpop.f32.mrb[0].mxu0
  %v2499 = vadd.f32 %v2306, %v2498
  %v2500 = vpop.f32.mrb[0].mxu0
  %v2501 = vadd.f32 %v2308, %v2500
  %v2502 = vpop.f32.mrb[0].mxu0
  %v2503 = vadd.f32 %v2310, %v2502
  %v2504 = vpop.f32.mrb[0].mxu0
  %v2505 = vadd.f32 %v2312, %v2504
  %2506 = vdwg.mxu0
  %2507 = vmatprep.subr.bf16.mxu0 %v1290
  %2508 = vmatpush1.bf16.msra.mxu0 %v1289
  %2509 = vmatprep.subr.bf16.mxu0 %v1294
  %2510 = vmatpush1.bf16.msra.mxu0 %v1293
  %2511 = vmatprep.subr.bf16.mxu0 %v1298
  %2512 = vmatpush1.bf16.msra.mxu0 %v1297
  %2513 = vmatprep.subr.bf16.mxu0 %v1302
  %2514 = vmatpush1.bf16.msra.mxu0 %v1301
  %2515 = vmatprep.subr.bf16.mxu0 %v1306
  %2516 = vmatpush1.bf16.msra.mxu0 %v1305
  %2517 = vmatprep.subr.bf16.mxu0 %v1310
  %2518 = vmatpush1.bf16.msra.mxu0 %v1309
  %2519 = vmatprep.subr.bf16.mxu0 %v1314
  %2520 = vmatpush1.bf16.msra.mxu0 %v1313
  %2521 = vmatprep.subr.bf16.mxu0 %v1318
  %2522 = vmatpush1.bf16.msra.mxu0 %v1317
  %2523 = vmatprep.subr.bf16.mxu0 %v1322
  %2524 = vmatpush1.bf16.msra.mxu0 %v1321
  %2525 = vmatprep.subr.bf16.mxu0 %v1326
  %2526 = vmatpush1.bf16.msra.mxu0 %v1325
  %2527 = vmatprep.subr.bf16.mxu0 %v1330
  %2528 = vmatpush1.bf16.msra.mxu0 %v1329
  %2529 = vmatprep.subr.bf16.mxu0 %v1334
  %2530 = vmatpush1.bf16.msra.mxu0 %v1333
  %2531 = vmatprep.subr.bf16.mxu0 %v1338
  %2532 = vmatpush1.bf16.msra.mxu0 %v1337
  %2533 = vmatprep.subr.bf16.mxu0 %v1342
  %2534 = vmatpush1.bf16.msra.mxu0 %v1341
  %2535 = vmatprep.subr.bf16.mxu0 %v1346
  %2536 = vmatpush1.bf16.msra.mxu0 %v1345
  %2537 = vmatprep.subr.bf16.mxu0 %v1350
  %2538 = vmatpush1.bf16.msra.mxu0 %v1349
  %2539 = vmatprep.mubr.bf16.mxu0 %v258
  %2540 = vmatmul.mubr.bf16.gmra.mrb[0].mxu0 %v257
  %v2541 = vpop.f32.mrb[0].mxu0
  %v2542 = vadd.f32 %v606, %v2541
  %v2543 = vpop.f32.mrb[0].mxu0
  %v2544 = vadd.f32 %v610, %v2543
  %v2545 = vpop.f32.mrb[0].mxu0
  %v2546 = vadd.f32 %v606, %v2545
  %v2547 = vpop.f32.mrb[0].mxu0
  %v2548 = vadd.f32 %v610, %v2547
  %2549 = vmatprep.mubr.bf16.mxu0 %v265
  %2550 = vmatmul.mubr.bf16.gmra.mrb[0].mxu0 %v264
  %v2551 = vpop.f32.mrb[0].mxu0
  %v2552 = vadd.f32 %v606, %v2551
  %v2553 = vpop.f32.mrb[0].mxu0
  %v2554 = vadd.f32 %v610, %v2553
  %v2555 = vpop.f32.mrb[0].mxu0
  %v2556 = vadd.f32 %v606, %v2555
  %v2557 = vpop.f32.mrb[0].mxu0
  %v2558 = vadd.f32 %v610, %v2557
  %2559 = vmatprep.mubr.bf16.mxu0 %v272
  %2560 = vmatmul.mubr.bf16.gmra.mrb[0].mxu0 %v271
  %v2561 = vpop.f32.mrb[0].mxu0
  %v2562 = vadd.f32 %v606, %v2561
  %v2563 = vpop.f32.mrb[0].mxu0
  %v2564 = vadd.f32 %v610, %v2563
  %v2565 = vpop.f32.mrb[0].mxu0
  %v2566 = vadd.f32 %v606, %v2565
  %v2567 = vpop.f32.mrb[0].mxu0
  %v2568 = vadd.f32 %v610, %v2567
  %2569 = vmatprep.mubr.bf16.mxu0 %v279
  %2570 = vmatmul.mubr.bf16.gmra.mrb[0].mxu0 %v278
  %v2571 = vpop.f32.mrb[0].mxu0
  %v2572 = vadd.f32 %v606, %v2571
  %v2573 = vpop.f32.mrb[0].mxu0
  %v2574 = vadd.f32 %v610, %v2573
  %v2575 = vpop.f32.mrb[0].mxu0
  %v2576 = vadd.f32 %v606, %v2575
  %v2577 = vpop.f32.mrb[0].mxu0
  %v2578 = vadd.f32 %v610, %v2577
  %2579 = vmatprep.mubr.bf16.mxu0 %v286
  %2580 = vmatmul.mubr.bf16.gmra.mrb[0].mxu0 %v285
  %v2581 = vpop.f32.mrb[0].mxu0
  %v2582 = vadd.f32 %v606, %v2581
  %v2583 = vpop.f32.mrb[0].mxu0
  %v2584 = vadd.f32 %v610, %v2583
  %v2585 = vpop.f32.mrb[0].mxu0
  %v2586 = vadd.f32 %v606, %v2585
  %v2587 = vpop.f32.mrb[0].mxu0
  %v2588 = vadd.f32 %v610, %v2587
  %2589 = vmatprep.mubr.bf16.mxu0 %v293
  %2590 = vmatmul.mubr.bf16.gmra.mrb[0].mxu0 %v292
  %v2591 = vpop.f32.mrb[0].mxu0
  %v2592 = vadd.f32 %v606, %v2591
  %v2593 = vpop.f32.mrb[0].mxu0
  %v2594 = vadd.f32 %v610, %v2593
  %v2595 = vpop.f32.mrb[0].mxu0
  %v2596 = vadd.f32 %v606, %v2595
  %v2597 = vpop.f32.mrb[0].mxu0
  %v2598 = vadd.f32 %v610, %v2597
  %2599 = vmatprep.mubr.bf16.mxu0 %v300
  %2600 = vmatmul.mubr.bf16.gmra.mrb[0].mxu0 %v299
  %v2601 = vpop.f32.mrb[0].mxu0
  %v2602 = vadd.f32 %v606, %v2601
  %v2603 = vpop.f32.mrb[0].mxu0
  %v2604 = vadd.f32 %v610, %v2603
  %v2605 = vpop.f32.mrb[0].mxu0
  %v2606 = vadd.f32 %v606, %v2605
  %v2607 = vpop.f32.mrb[0].mxu0
  %v2608 = vadd.f32 %v610, %v2607
  %2609 = vmatprep.mubr.bf16.mxu0 %v307
  %2610 = vmatmul.mubr.bf16.gmra.mrb[0].mxu0 %v306
  %v2611 = vpop.f32.mrb[0].mxu0
  %v2612 = vadd.f32 %v606, %v2611
  %v2613 = vpop.f32.mrb[0].mxu0
  %v2614 = vadd.f32 %v610, %v2613
  %v2615 = vpop.f32.mrb[0].mxu0
  %v2616 = vadd.f32 %v606, %v2615
  %v2617 = vpop.f32.mrb[0].mxu0
  %v2618 = vadd.f32 %v610, %v2617
  %2619 = vmatprep.mubr.bf16.mxu0 %v314
  %2620 = vmatmul.mubr.bf16.gmra.mrb[0].mxu0 %v313
  %v2621 = vpop.f32.mrb[0].mxu0
  %v2622 = vadd.f32 %v606, %v2621
  %v2623 = vpop.f32.mrb[0].mxu0
  %v2624 = vadd.f32 %v610, %v2623
  %v2625 = vpop.f32.mrb[0].mxu0
  %v2626 = vadd.f32 %v606, %v2625
  %v2627 = vpop.f32.mrb[0].mxu0
  %v2628 = vadd.f32 %v610, %v2627
  %2629 = vmatprep.mubr.bf16.mxu0 %v321
  %2630 = vmatmul.mubr.bf16.gmra.mrb[0].mxu0 %v320
  %v2631 = vpop.f32.mrb[0].mxu0
  %v2632 = vadd.f32 %v606, %v2631
  %v2633 = vpop.f32.mrb[0].mxu0
  %v2634 = vadd.f32 %v610, %v2633
  %v2635 = vpop.f32.mrb[0].mxu0
  %v2636 = vadd.f32 %v606, %v2635
  %v2637 = vpop.f32.mrb[0].mxu0
  %v2638 = vadd.f32 %v610, %v2637
  %2639 = vmatprep.mubr.bf16.mxu0 %v328
  %2640 = vmatmul.mubr.bf16.gmra.mrb[0].mxu0 %v327
  %v2641 = vpop.f32.mrb[0].mxu0
  %v2642 = vadd.f32 %v606, %v2641
  %v2643 = vpop.f32.mrb[0].mxu0
  %v2644 = vadd.f32 %v610, %v2643
  %v2645 = vpop.f32.mrb[0].mxu0
  %v2646 = vadd.f32 %v606, %v2645
  %v2647 = vpop.f32.mrb[0].mxu0
  %v2648 = vadd.f32 %v610, %v2647
  %2649 = vmatprep.mubr.bf16.mxu0 %v335
  %2650 = vmatmul.mubr.bf16.gmra.mrb[0].mxu0 %v334
  %v2651 = vpop.f32.mrb[0].mxu0
  %v2652 = vadd.f32 %v606, %v2651
  %v2653 = vpop.f32.mrb[0].mxu0
  %v2654 = vadd.f32 %v610, %v2653
  %v2655 = vpop.f32.mrb[0].mxu0
  %v2656 = vadd.f32 %v606, %v2655
  %v2657 = vpop.f32.mrb[0].mxu0
  %v2658 = vadd.f32 %v610, %v2657
  %2659 = vmatprep.mubr.bf16.mxu0 %v342
  %2660 = vmatmul.mubr.bf16.gmra.mrb[0].mxu0 %v341
  %v2661 = vpop.f32.mrb[0].mxu0
  %v2662 = vadd.f32 %v606, %v2661
  %v2663 = vpop.f32.mrb[0].mxu0
  %v2664 = vadd.f32 %v610, %v2663
  %v2665 = vpop.f32.mrb[0].mxu0
  %v2666 = vadd.f32 %v606, %v2665
  %v2667 = vpop.f32.mrb[0].mxu0
  %v2668 = vadd.f32 %v610, %v2667
  %2669 = vmatprep.mubr.bf16.mxu0 %v349
  %2670 = vmatmul.mubr.bf16.gmra.mrb[0].mxu0 %v348
  %v2671 = vpop.f32.mrb[0].mxu0
  %v2672 = vadd.f32 %v606, %v2671
  %v2673 = vpop.f32.mrb[0].mxu0
  %v2674 = vadd.f32 %v610, %v2673
  %v2675 = vpop.f32.mrb[0].mxu0
  %v2676 = vadd.f32 %v606, %v2675
  %v2677 = vpop.f32.mrb[0].mxu0
  %v2678 = vadd.f32 %v610, %v2677
  %2679 = vmatprep.mubr.bf16.mxu0 %v356
  %2680 = vmatmul.mubr.bf16.gmra.mrb[0].mxu0 %v355
  %v2681 = vpop.f32.mrb[0].mxu0
  %v2682 = vadd.f32 %v606, %v2681
  %v2683 = vpop.f32.mrb[0].mxu0
  %v2684 = vadd.f32 %v610, %v2683
  %v2685 = vpop.f32.mrb[0].mxu0
  %v2686 = vadd.f32 %v606, %v2685
  %v2687 = vpop.f32.mrb[0].mxu0
  %v2688 = vadd.f32 %v610, %v2687
  %2689 = vmatprep.mubr.bf16.mxu0 %v363
  %2690 = vmatmul.mubr.bf16.gmra.mrb[0].mxu0 %v362
  %v2691 = vpop.f32.mrb[0].mxu0
  %v2692 = vadd.f32 %v606, %v2691
  %v2693 = vpop.f32.mrb[0].mxu0
  %v2694 = vadd.f32 %v610, %v2693
  %v2695 = vpop.f32.mrb[0].mxu0
  %v2696 = vadd.f32 %v606, %v2695
  %v2697 = vpop.f32.mrb[0].mxu0
  %v2698 = vadd.f32 %v610, %v2697
  %2699 = vdwg.mxu0
  %2700 = vmatprep.subr.bf16.mxu0 %v1354
  %2701 = vmatpush1.bf16.msra.mxu0 %v1353
  %2702 = vmatprep.subr.bf16.mxu0 %v1358
  %2703 = vmatpush1.bf16.msra.mxu0 %v1357
  %2704 = vmatprep.subr.bf16.mxu0 %v1362
  %2705 = vmatpush1.bf16.msra.mxu0 %v1361
  %2706 = vmatprep.subr.bf16.mxu0 %v1366
  %2707 = vmatpush1.bf16.msra.mxu0 %v1365
  %2708 = vmatprep.subr.bf16.mxu0 %v1370
  %2709 = vmatpush1.bf16.msra.mxu0 %v1369
  %2710 = vmatprep.subr.bf16.mxu0 %v1374
  %2711 = vmatpush1.bf16.msra.mxu0 %v1373
  %2712 = vmatprep.subr.bf16.mxu0 %v1378
  %2713 = vmatpush1.bf16.msra.mxu0 %v1377
  %2714 = vmatprep.subr.bf16.mxu0 %v1382
  %2715 = vmatpush1.bf16.msra.mxu0 %v1381
  %2716 = vmatprep.subr.bf16.mxu0 %v1386
  %2717 = vmatpush1.bf16.msra.mxu0 %v1385
  %2718 = vmatprep.subr.bf16.mxu0 %v1390
  %2719 = vmatpush1.bf16.msra.mxu0 %v1389
  %2720 = vmatprep.subr.bf16.mxu0 %v1394
  %2721 = vmatpush1.bf16.msra.mxu0 %v1393
  %2722 = vmatprep.subr.bf16.mxu0 %v1398
  %2723 = vmatpush1.bf16.msra.mxu0 %v1397
  %2724 = vmatprep.subr.bf16.mxu0 %v1402
  %2725 = vmatpush1.bf16.msra.mxu0 %v1401
  %2726 = vmatprep.subr.bf16.mxu0 %v1406
  %2727 = vmatpush1.bf16.msra.mxu0 %v1405
  %2728 = vmatprep.subr.bf16.mxu0 %v1410
  %2729 = vmatpush1.bf16.msra.mxu0 %v1409
  %2730 = vmatprep.subr.bf16.mxu0 %v1414
  %2731 = vmatpush1.bf16.msra.mxu0 %v1413
  %2732 = vmatprep.mubr.bf16.mxu0 %v260
  %2733 = vmatmul.mubr.bf16.gmra.mrb[0].mxu0 %v259
  %v2734 = vpop.f32.mrb[0].mxu0
  %v2735 = vadd.f32 %v2542, %v2734
  %v2736 = vpop.f32.mrb[0].mxu0
  %v2737 = vadd.f32 %v2544, %v2736
  %v2738 = vpop.f32.mrb[0].mxu0
  %v2739 = vadd.f32 %v2546, %v2738
  %v2740 = vpop.f32.mrb[0].mxu0
  %v2741 = vadd.f32 %v2548, %v2740
  %2742 = vmatprep.mubr.bf16.mxu0 %v267
  %2743 = vmatmul.mubr.bf16.gmra.mrb[0].mxu0 %v266
  %v2744 = vpop.f32.mrb[0].mxu0
  %v2745 = vadd.f32 %v2552, %v2744
  %v2746 = vpop.f32.mrb[0].mxu0
  %v2747 = vadd.f32 %v2554, %v2746
  %v2748 = vpop.f32.mrb[0].mxu0
  %v2749 = vadd.f32 %v2556, %v2748
  %v2750 = vpop.f32.mrb[0].mxu0
  %v2751 = vadd.f32 %v2558, %v2750
  %2752 = vmatprep.mubr.bf16.mxu0 %v274
  %2753 = vmatmul.mubr.bf16.gmra.mrb[0].mxu0 %v273
  %v2754 = vpop.f32.mrb[0].mxu0
  %v2755 = vadd.f32 %v2562, %v2754
  %v2756 = vpop.f32.mrb[0].mxu0
  %v2757 = vadd.f32 %v2564, %v2756
  %v2758 = vpop.f32.mrb[0].mxu0
  %v2759 = vadd.f32 %v2566, %v2758
  %v2760 = vpop.f32.mrb[0].mxu0
  %v2761 = vadd.f32 %v2568, %v2760
  %2762 = vmatprep.mubr.bf16.mxu0 %v281
  %2763 = vmatmul.mubr.bf16.gmra.mrb[0].mxu0 %v280
  %v2764 = vpop.f32.mrb[0].mxu0
  %v2765 = vadd.f32 %v2572, %v2764
  %v2766 = vpop.f32.mrb[0].mxu0
  %v2767 = vadd.f32 %v2574, %v2766
  %v2768 = vpop.f32.mrb[0].mxu0
  %v2769 = vadd.f32 %v2576, %v2768
  %v2770 = vpop.f32.mrb[0].mxu0
  %v2771 = vadd.f32 %v2578, %v2770
  %2772 = vmatprep.mubr.bf16.mxu0 %v288
  %2773 = vmatmul.mubr.bf16.gmra.mrb[0].mxu0 %v287
  %v2774 = vpop.f32.mrb[0].mxu0
  %v2775 = vadd.f32 %v2582, %v2774
  %v2776 = vpop.f32.mrb[0].mxu0
  %v2777 = vadd.f32 %v2584, %v2776
  %v2778 = vpop.f32.mrb[0].mxu0
  %v2779 = vadd.f32 %v2586, %v2778
  %v2780 = vpop.f32.mrb[0].mxu0
  %v2781 = vadd.f32 %v2588, %v2780
  %2782 = vmatprep.mubr.bf16.mxu0 %v295
  %2783 = vmatmul.mubr.bf16.gmra.mrb[0].mxu0 %v294
  %v2784 = vpop.f32.mrb[0].mxu0
  %v2785 = vadd.f32 %v2592, %v2784
  %v2786 = vpop.f32.mrb[0].mxu0
  %v2787 = vadd.f32 %v2594, %v2786
  %v2788 = vpop.f32.mrb[0].mxu0
  %v2789 = vadd.f32 %v2596, %v2788
  %v2790 = vpop.f32.mrb[0].mxu0
  %v2791 = vadd.f32 %v2598, %v2790
  %2792 = vmatprep.mubr.bf16.mxu0 %v302
  %2793 = vmatmul.mubr.bf16.gmra.mrb[0].mxu0 %v301
  %v2794 = vpop.f32.mrb[0].mxu0
  %v2795 = vadd.f32 %v2602, %v2794
  %v2796 = vpop.f32.mrb[0].mxu0
  %v2797 = vadd.f32 %v2604, %v2796
  %v2798 = vpop.f32.mrb[0].mxu0
  %v2799 = vadd.f32 %v2606, %v2798
  %v2800 = vpop.f32.mrb[0].mxu0
  %v2801 = vadd.f32 %v2608, %v2800
  %2802 = vmatprep.mubr.bf16.mxu0 %v309
  %2803 = vmatmul.mubr.bf16.gmra.mrb[0].mxu0 %v308
  %v2804 = vpop.f32.mrb[0].mxu0
  %v2805 = vadd.f32 %v2612, %v2804
  %v2806 = vpop.f32.mrb[0].mxu0
  %v2807 = vadd.f32 %v2614, %v2806
  %v2808 = vpop.f32.mrb[0].mxu0
  %v2809 = vadd.f32 %v2616, %v2808
  %v2810 = vpop.f32.mrb[0].mxu0
  %v2811 = vadd.f32 %v2618, %v2810
  %2812 = vmatprep.mubr.bf16.mxu0 %v316
  %2813 = vmatmul.mubr.bf16.gmra.mrb[0].mxu0 %v315
  %v2814 = vpop.f32.mrb[0].mxu0
  %v2815 = vadd.f32 %v2622, %v2814
  %v2816 = vpop.f32.mrb[0].mxu0
  %v2817 = vadd.f32 %v2624, %v2816
  %v2818 = vpop.f32.mrb[0].mxu0
  %v2819 = vadd.f32 %v2626, %v2818
  %v2820 = vpop.f32.mrb[0].mxu0
  %v2821 = vadd.f32 %v2628, %v2820
  %2822 = vmatprep.mubr.bf16.mxu0 %v323
  %2823 = vmatmul.mubr.bf16.gmra.mrb[0].mxu0 %v322
  %v2824 = vpop.f32.mrb[0].mxu0
  %v2825 = vadd.f32 %v2632, %v2824
  %v2826 = vpop.f32.mrb[0].mxu0
  %v2827 = vadd.f32 %v2634, %v2826
  %v2828 = vpop.f32.mrb[0].mxu0
  %v2829 = vadd.f32 %v2636, %v2828
  %v2830 = vpop.f32.mrb[0].mxu0
  %v2831 = vadd.f32 %v2638, %v2830
  %2832 = vmatprep.mubr.bf16.mxu0 %v330
  %2833 = vmatmul.mubr.bf16.gmra.mrb[0].mxu0 %v329
  %v2834 = vpop.f32.mrb[0].mxu0
  %v2835 = vadd.f32 %v2642, %v2834
  %v2836 = vpop.f32.mrb[0].mxu0
  %v2837 = vadd.f32 %v2644, %v2836
  %v2838 = vpop.f32.mrb[0].mxu0
  %v2839 = vadd.f32 %v2646, %v2838
  %v2840 = vpop.f32.mrb[0].mxu0
  %v2841 = vadd.f32 %v2648, %v2840
  %2842 = vmatprep.mubr.bf16.mxu0 %v337
  %2843 = vmatmul.mubr.bf16.gmra.mrb[0].mxu0 %v336
  %v2844 = vpop.f32.mrb[0].mxu0
  %v2845 = vadd.f32 %v2652, %v2844
  %v2846 = vpop.f32.mrb[0].mxu0
  %v2847 = vadd.f32 %v2654, %v2846
  %v2848 = vpop.f32.mrb[0].mxu0
  %v2849 = vadd.f32 %v2656, %v2848
  %v2850 = vpop.f32.mrb[0].mxu0
  %v2851 = vadd.f32 %v2658, %v2850
  %2852 = vmatprep.mubr.bf16.mxu0 %v344
  %2853 = vmatmul.mubr.bf16.gmra.mrb[0].mxu0 %v343
  %v2854 = vpop.f32.mrb[0].mxu0
  %v2855 = vadd.f32 %v2662, %v2854
  %v2856 = vpop.f32.mrb[0].mxu0
  %v2857 = vadd.f32 %v2664, %v2856
  %v2858 = vpop.f32.mrb[0].mxu0
  %v2859 = vadd.f32 %v2666, %v2858
  %v2860 = vpop.f32.mrb[0].mxu0
  %v2861 = vadd.f32 %v2668, %v2860
  %2862 = vmatprep.mubr.bf16.mxu0 %v351
  %2863 = vmatmul.mubr.bf16.gmra.mrb[0].mxu0 %v350
  %v2864 = vpop.f32.mrb[0].mxu0
  %v2865 = vadd.f32 %v2672, %v2864
  %v2866 = vpop.f32.mrb[0].mxu0
  %v2867 = vadd.f32 %v2674, %v2866
  %v2868 = vpop.f32.mrb[0].mxu0
  %v2869 = vadd.f32 %v2676, %v2868
  %v2870 = vpop.f32.mrb[0].mxu0
  %v2871 = vadd.f32 %v2678, %v2870
  %2872 = vmatprep.mubr.bf16.mxu0 %v358
  %2873 = vmatmul.mubr.bf16.gmra.mrb[0].mxu0 %v357
  %v2874 = vpop.f32.mrb[0].mxu0
  %v2875 = vadd.f32 %v2682, %v2874
  %v2876 = vpop.f32.mrb[0].mxu0
  %v2877 = vadd.f32 %v2684, %v2876
  %v2878 = vpop.f32.mrb[0].mxu0
  %v2879 = vadd.f32 %v2686, %v2878
  %v2880 = vpop.f32.mrb[0].mxu0
  %v2881 = vadd.f32 %v2688, %v2880
  %2882 = vmatprep.mubr.bf16.mxu0 %v365
  %2883 = vmatmul.mubr.bf16.gmra.mrb[0].mxu0 %v364
  %v2884 = vpop.f32.mrb[0].mxu0
  %v2885 = vadd.f32 %v2692, %v2884
  %v2886 = vpop.f32.mrb[0].mxu0
  %v2887 = vadd.f32 %v2694, %v2886
  %v2888 = vpop.f32.mrb[0].mxu0
  %v2889 = vadd.f32 %v2696, %v2888
  %v2890 = vpop.f32.mrb[0].mxu0
  %v2891 = vadd.f32 %v2698, %v2890
  %2892 = vdwg.mxu0
  %2893 = vmatprep.subr.bf16.mxu0 %v1418
  %2894 = vmatpush1.bf16.msra.mxu0 %v1417
  %2895 = vmatprep.subr.bf16.mxu0 %v1422
  %2896 = vmatpush1.bf16.msra.mxu0 %v1421
  %2897 = vmatprep.subr.bf16.mxu0 %v1426
  %2898 = vmatpush1.bf16.msra.mxu0 %v1425
  %2899 = vmatprep.subr.bf16.mxu0 %v1430
  %2900 = vmatpush1.bf16.msra.mxu0 %v1429
  %2901 = vmatprep.subr.bf16.mxu0 %v1434
  %2902 = vmatpush1.bf16.msra.mxu0 %v1433
  %2903 = vmatprep.subr.bf16.mxu0 %v1438
  %2904 = vmatpush1.bf16.msra.mxu0 %v1437
  %2905 = vmatprep.subr.bf16.mxu0 %v1442
  %2906 = vmatpush1.bf16.msra.mxu0 %v1441
  %2907 = vmatprep.subr.bf16.mxu0 %v1446
  %2908 = vmatpush1.bf16.msra.mxu0 %v1445
  %2909 = vmatprep.subr.bf16.mxu0 %v1450
  %2910 = vmatpush1.bf16.msra.mxu0 %v1449
  %2911 = vmatprep.subr.bf16.mxu0 %v1454
  %2912 = vmatpush1.bf16.msra.mxu0 %v1453
  %2913 = vmatprep.subr.bf16.mxu0 %v1458
  %2914 = vmatpush1.bf16.msra.mxu0 %v1457
  %2915 = vmatprep.subr.bf16.mxu0 %v1462
  %2916 = vmatpush1.bf16.msra.mxu0 %v1461
  %2917 = vmatprep.subr.bf16.mxu0 %v1466
  %2918 = vmatpush1.bf16.msra.mxu0 %v1465
  %2919 = vmatprep.subr.bf16.mxu0 %v1470
  %2920 = vmatpush1.bf16.msra.mxu0 %v1469
  %2921 = vmatprep.subr.bf16.mxu0 %v1474
  %2922 = vmatpush1.bf16.msra.mxu0 %v1473
  %2923 = vmatprep.subr.bf16.mxu0 %v1478
  %2924 = vmatpush1.bf16.msra.mxu0 %v1477
  %2925 = vmatprep.mubr.bf16.mxu0 %v262
  %2926 = vmatmul.mubr.bf16.gmra.mrb[0].mxu0 %v261
  %v2927 = vpop.f32.mrb[0].mxu0
  %v2928 = vadd.f32 %v2735, %v2927
  %v2929 = vpop.f32.mrb[0].mxu0
  %v2930 = vadd.f32 %v2737, %v2929
  %v2931 = vpop.f32.mrb[0].mxu0
  %v2932 = vadd.f32 %v2739, %v2931
  %v2933 = vpop.f32.mrb[0].mxu0
  %v2934 = vadd.f32 %v2741, %v2933
  %2935 = vmatprep.mubr.bf16.mxu0 %v269
  %2936 = vmatmul.mubr.bf16.gmra.mrb[0].mxu0 %v268
  %v2937 = vpop.f32.mrb[0].mxu0
  %v2938 = vadd.f32 %v2745, %v2937
  %v2939 = vpop.f32.mrb[0].mxu0
  %v2940 = vadd.f32 %v2747, %v2939
  %v2941 = vpop.f32.mrb[0].mxu0
  %v2942 = vadd.f32 %v2749, %v2941
  %v2943 = vpop.f32.mrb[0].mxu0
  %v2944 = vadd.f32 %v2751, %v2943
  %2945 = vmatprep.mubr.bf16.mxu0 %v276
  %2946 = vmatmul.mubr.bf16.gmra.mrb[0].mxu0 %v275
  %v2947 = vpop.f32.mrb[0].mxu0
  %v2948 = vadd.f32 %v2755, %v2947
  %v2949 = vpop.f32.mrb[0].mxu0
  %v2950 = vadd.f32 %v2757, %v2949
  %v2951 = vpop.f32.mrb[0].mxu0
  %v2952 = vadd.f32 %v2759, %v2951
  %v2953 = vpop.f32.mrb[0].mxu0
  %v2954 = vadd.f32 %v2761, %v2953
  %2955 = vmatprep.mubr.bf16.mxu0 %v283
  %2956 = vmatmul.mubr.bf16.gmra.mrb[0].mxu0 %v282
  %v2957 = vpop.f32.mrb[0].mxu0
  %v2958 = vadd.f32 %v2765, %v2957
  %v2959 = vpop.f32.mrb[0].mxu0
  %v2960 = vadd.f32 %v2767, %v2959
  %v2961 = vpop.f32.mrb[0].mxu0
  %v2962 = vadd.f32 %v2769, %v2961
  %v2963 = vpop.f32.mrb[0].mxu0
  %v2964 = vadd.f32 %v2771, %v2963
  %2965 = vmatprep.mubr.bf16.mxu0 %v290
  %2966 = vmatmul.mubr.bf16.gmra.mrb[0].mxu0 %v289
  %v2967 = vpop.f32.mrb[0].mxu0
  %v2968 = vadd.f32 %v2775, %v2967
  %v2969 = vpop.f32.mrb[0].mxu0
  %v2970 = vadd.f32 %v2777, %v2969
  %v2971 = vpop.f32.mrb[0].mxu0
  %v2972 = vadd.f32 %v2779, %v2971
  %v2973 = vpop.f32.mrb[0].mxu0
  %v2974 = vadd.f32 %v2781, %v2973
  %2975 = vmatprep.mubr.bf16.mxu0 %v297
  %2976 = vmatmul.mubr.bf16.gmra.mrb[0].mxu0 %v296
  %v2977 = vpop.f32.mrb[0].mxu0
  %v2978 = vadd.f32 %v2785, %v2977
  %v2979 = vpop.f32.mrb[0].mxu0
  %v2980 = vadd.f32 %v2787, %v2979
  %v2981 = vpop.f32.mrb[0].mxu0
  %v2982 = vadd.f32 %v2789, %v2981
  %v2983 = vpop.f32.mrb[0].mxu0
  %v2984 = vadd.f32 %v2791, %v2983
  %2985 = vmatprep.mubr.bf16.mxu0 %v304
  %2986 = vmatmul.mubr.bf16.gmra.mrb[0].mxu0 %v303
  %v2987 = vpop.f32.mrb[0].mxu0
  %v2988 = vadd.f32 %v2795, %v2987
  %v2989 = vpop.f32.mrb[0].mxu0
  %v2990 = vadd.f32 %v2797, %v2989
  %v2991 = vpop.f32.mrb[0].mxu0
  %v2992 = vadd.f32 %v2799, %v2991
  %v2993 = vpop.f32.mrb[0].mxu0
  %v2994 = vadd.f32 %v2801, %v2993
  %2995 = vmatprep.mubr.bf16.mxu0 %v311
  %2996 = vmatmul.mubr.bf16.gmra.mrb[0].mxu0 %v310
  %v2997 = vpop.f32.mrb[0].mxu0
  %v2998 = vadd.f32 %v2805, %v2997
  %v2999 = vpop.f32.mrb[0].mxu0
  %v3000 = vadd.f32 %v2807, %v2999
  %v3001 = vpop.f32.mrb[0].mxu0
  %v3002 = vadd.f32 %v2809, %v3001
  %v3003 = vpop.f32.mrb[0].mxu0
  %v3004 = vadd.f32 %v2811, %v3003
  %3005 = vmatprep.mubr.bf16.mxu0 %v318
  %3006 = vmatmul.mubr.bf16.gmra.mrb[0].mxu0 %v317
  %v3007 = vpop.f32.mrb[0].mxu0
  %v3008 = vadd.f32 %v2815, %v3007
  %v3009 = vpop.f32.mrb[0].mxu0
  %v3010 = vadd.f32 %v2817, %v3009
  %v3011 = vpop.f32.mrb[0].mxu0
  %v3012 = vadd.f32 %v2819, %v3011
  %v3013 = vpop.f32.mrb[0].mxu0
  %v3014 = vadd.f32 %v2821, %v3013
  %3015 = vmatprep.mubr.bf16.mxu0 %v325
  %3016 = vmatmul.mubr.bf16.gmra.mrb[0].mxu0 %v324
  %v3017 = vpop.f32.mrb[0].mxu0
  %v3018 = vadd.f32 %v2825, %v3017
  %v3019 = vpop.f32.mrb[0].mxu0
  %v3020 = vadd.f32 %v2827, %v3019
  %v3021 = vpop.f32.mrb[0].mxu0
  %v3022 = vadd.f32 %v2829, %v3021
  %v3023 = vpop.f32.mrb[0].mxu0
  %v3024 = vadd.f32 %v2831, %v3023
  %3025 = vmatprep.mubr.bf16.mxu0 %v332
  %3026 = vmatmul.mubr.bf16.gmra.mrb[0].mxu0 %v331
  %v3027 = vpop.f32.mrb[0].mxu0
  %v3028 = vadd.f32 %v2835, %v3027
  %v3029 = vpop.f32.mrb[0].mxu0
  %v3030 = vadd.f32 %v2837, %v3029
  %v3031 = vpop.f32.mrb[0].mxu0
  %v3032 = vadd.f32 %v2839, %v3031
  %v3033 = vpop.f32.mrb[0].mxu0
  %v3034 = vadd.f32 %v2841, %v3033
  %3035 = vmatprep.mubr.bf16.mxu0 %v339
  %3036 = vmatmul.mubr.bf16.gmra.mrb[0].mxu0 %v338
  %v3037 = vpop.f32.mrb[0].mxu0
  %v3038 = vadd.f32 %v2845, %v3037
  %v3039 = vpop.f32.mrb[0].mxu0
  %v3040 = vadd.f32 %v2847, %v3039
  %v3041 = vpop.f32.mrb[0].mxu0
  %v3042 = vadd.f32 %v2849, %v3041
  %v3043 = vpop.f32.mrb[0].mxu0
  %v3044 = vadd.f32 %v2851, %v3043
  %3045 = vmatprep.mubr.bf16.mxu0 %v346
  %3046 = vmatmul.mubr.bf16.gmra.mrb[0].mxu0 %v345
  %v3047 = vpop.f32.mrb[0].mxu0
  %v3048 = vadd.f32 %v2855, %v3047
  %v3049 = vpop.f32.mrb[0].mxu0
  %v3050 = vadd.f32 %v2857, %v3049
  %v3051 = vpop.f32.mrb[0].mxu0
  %v3052 = vadd.f32 %v2859, %v3051
  %v3053 = vpop.f32.mrb[0].mxu0
  %v3054 = vadd.f32 %v2861, %v3053
  %3055 = vmatprep.mubr.bf16.mxu0 %v353
  %3056 = vmatmul.mubr.bf16.gmra.mrb[0].mxu0 %v352
  %v3057 = vpop.f32.mrb[0].mxu0
  %v3058 = vadd.f32 %v2865, %v3057
  %v3059 = vpop.f32.mrb[0].mxu0
  %v3060 = vadd.f32 %v2867, %v3059
  %v3061 = vpop.f32.mrb[0].mxu0
  %v3062 = vadd.f32 %v2869, %v3061
  %v3063 = vpop.f32.mrb[0].mxu0
  %v3064 = vadd.f32 %v2871, %v3063
  %3065 = vmatprep.mubr.bf16.mxu0 %v360
  %3066 = vmatmul.mubr.bf16.gmra.mrb[0].mxu0 %v359
  %v3067 = vpop.f32.mrb[0].mxu0
  %v3068 = vadd.f32 %v2875, %v3067
  %v3069 = vpop.f32.mrb[0].mxu0
  %v3070 = vadd.f32 %v2877, %v3069
  %v3071 = vpop.f32.mrb[0].mxu0
  %v3072 = vadd.f32 %v2879, %v3071
  %v3073 = vpop.f32.mrb[0].mxu0
  %v3074 = vadd.f32 %v2881, %v3073
  %3075 = vmatprep.mubr.bf16.mxu0 %v367
  %3076 = vmatmul.mubr.bf16.gmra.mrb[0].mxu0 %v366
  %v3077 = vpop.f32.mrb[0].mxu0
  %v3078 = vadd.f32 %v2885, %v3077
  %v3079 = vpop.f32.mrb[0].mxu0
  %v3080 = vadd.f32 %v2887, %v3079
  %v3081 = vpop.f32.mrb[0].mxu0
  %v3082 = vadd.f32 %v2889, %v3081
  %v3083 = vpop.f32.mrb[0].mxu0
  %v3084 = vadd.f32 %v2891, %v3083
  %3085 = vdwg.mxu0
  %3086 = vmatprep.subr.bf16.mxu0 %v1482
  %3087 = vmatpush1.bf16.msra.mxu0 %v1481
  %3088 = vmatprep.subr.bf16.mxu0 %v1486
  %3089 = vmatpush1.bf16.msra.mxu0 %v1485
  %3090 = vmatprep.subr.bf16.mxu0 %v1490
  %3091 = vmatpush1.bf16.msra.mxu0 %v1489
  %3092 = vmatprep.subr.bf16.mxu0 %v1494
  %3093 = vmatpush1.bf16.msra.mxu0 %v1493
  %3094 = vmatprep.subr.bf16.mxu0 %v1498
  %3095 = vmatpush1.bf16.msra.mxu0 %v1497
  %3096 = vmatprep.subr.bf16.mxu0 %v1502
  %3097 = vmatpush1.bf16.msra.mxu0 %v1501
  %3098 = vmatprep.subr.bf16.mxu0 %v1506
  %3099 = vmatpush1.bf16.msra.mxu0 %v1505
  %3100 = vmatprep.subr.bf16.mxu0 %v1510
  %3101 = vmatpush1.bf16.msra.mxu0 %v1509
  %3102 = vmatprep.subr.bf16.mxu0 0
  %3103 = vmatpush1.bf16.msra.mxu0 0
  %3104 = vmatprep.subr.bf16.mxu0 0
  %3105 = vmatpush1.bf16.msra.mxu0 0
  %3106 = vmatprep.subr.bf16.mxu0 0
  %3107 = vmatpush1.bf16.msra.mxu0 0
  %3108 = vmatprep.subr.bf16.mxu0 0
  %3109 = vmatpush1.bf16.msra.mxu0 0
  %3110 = vmatprep.subr.bf16.mxu0 0
  %3111 = vmatpush1.bf16.msra.mxu0 0
  %3112 = vmatprep.subr.bf16.mxu0 0
  %3113 = vmatpush1.bf16.msra.mxu0 0
  %3114 = vmatprep.subr.bf16.mxu0 0
  %3115 = vmatpush1.bf16.msra.mxu0 0
  %3116 = vmatprep.subr.bf16.mxu0 0
  %3117 = vmatpush1.bf16.msra.mxu0 0
  %3118 = vmatprep.mubr.bf16.mxu0 0
  %3119 = vmatmul.mubr.bf16.gmra.mrb[0].mxu0 %v263
  %v3120 = vpop.f32.mrb[0].mxu0
  %v3121 = vadd.f32 %v2928, %v3120
  %v3122 = vpop.f32.mrb[0].mxu0
  %v3123 = vadd.f32 %v2930, %v3122
  %v3124 = vpop.f32.mrb[0].mxu0
  %v3125 = vadd.f32 %v2932, %v3124
  %v3126 = vpop.f32.mrb[0].mxu0
  %v3127 = vadd.f32 %v2934, %v3126
  %3128 = vmatprep.mubr.bf16.mxu0 0
  %3129 = vmatmul.mubr.bf16.gmra.mrb[0].mxu0 %v270
  %v3130 = vpop.f32.mrb[0].mxu0
  %v3131 = vadd.f32 %v2938, %v3130
  %v3132 = vpop.f32.mrb[0].mxu0
  %v3133 = vadd.f32 %v2940, %v3132
  %v3134 = vpop.f32.mrb[0].mxu0
  %v3135 = vadd.f32 %v2942, %v3134
  %v3136 = vpop.f32.mrb[0].mxu0
  %v3137 = vadd.f32 %v2944, %v3136
  %3138 = vmatprep.mubr.bf16.mxu0 0
  %3139 = vmatmul.mubr.bf16.gmra.mrb[0].mxu0 %v277
  %v3140 = vpop.f32.mrb[0].mxu0
  %v3141 = vadd.f32 %v2948, %v3140
  %v3142 = vpop.f32.mrb[0].mxu0
  %v3143 = vadd.f32 %v2950, %v3142
  %v3144 = vpop.f32.mrb[0].mxu0
  %v3145 = vadd.f32 %v2952, %v3144
  %v3146 = vpop.f32.mrb[0].mxu0
  %v3147 = vadd.f32 %v2954, %v3146
  %3148 = vmatprep.mubr.bf16.mxu0 0
  %3149 = vmatmul.mubr.bf16.gmra.mrb[0].mxu0 %v284
  %v3150 = vpop.f32.mrb[0].mxu0
  %v3151 = vadd.f32 %v2958, %v3150
  %v3152 = vpop.f32.mrb[0].mxu0
  %v3153 = vadd.f32 %v2960, %v3152
  %v3154 = vpop.f32.mrb[0].mxu0
  %v3155 = vadd.f32 %v2962, %v3154
  %v3156 = vpop.f32.mrb[0].mxu0
  %v3157 = vadd.f32 %v2964, %v3156
  %3158 = vmatprep.mubr.bf16.mxu0 0
  %3159 = vmatmul.mubr.bf16.gmra.mrb[0].mxu0 %v291
  %v3160 = vpop.f32.mrb[0].mxu0
  %v3161 = vadd.f32 %v2968, %v3160
  %v3162 = vpop.f32.mrb[0].mxu0
  %v3163 = vadd.f32 %v2970, %v3162
  %v3164 = vpop.f32.mrb[0].mxu0
  %v3165 = vadd.f32 %v2972, %v3164
  %v3166 = vpop.f32.mrb[0].mxu0
  %v3167 = vadd.f32 %v2974, %v3166
  %3168 = vmatprep.mubr.bf16.mxu0 0
  %3169 = vmatmul.mubr.bf16.gmra.mrb[0].mxu0 %v298
  %v3170 = vpop.f32.mrb[0].mxu0
  %v3171 = vadd.f32 %v2978, %v3170
  %v3172 = vpop.f32.mrb[0].mxu0
  %v3173 = vadd.f32 %v2980, %v3172
  %v3174 = vpop.f32.mrb[0].mxu0
  %v3175 = vadd.f32 %v2982, %v3174
  %v3176 = vpop.f32.mrb[0].mxu0
  %v3177 = vadd.f32 %v2984, %v3176
  %3178 = vmatprep.mubr.bf16.mxu0 0
  %3179 = vmatmul.mubr.bf16.gmra.mrb[0].mxu0 %v305
  %v3180 = vpop.f32.mrb[0].mxu0
  %v3181 = vadd.f32 %v2988, %v3180
  %v3182 = vpop.f32.mrb[0].mxu0
  %v3183 = vadd.f32 %v2990, %v3182
  %v3184 = vpop.f32.mrb[0].mxu0
  %v3185 = vadd.f32 %v2992, %v3184
  %v3186 = vpop.f32.mrb[0].mxu0
  %v3187 = vadd.f32 %v2994, %v3186
  %3188 = vmatprep.mubr.bf16.mxu0 0
  %3189 = vmatmul.mubr.bf16.gmra.mrb[0].mxu0 %v312
  %v3190 = vpop.f32.mrb[0].mxu0
  %v3191 = vadd.f32 %v2998, %v3190
  %v3192 = vpop.f32.mrb[0].mxu0
  %v3193 = vadd.f32 %v3000, %v3192
  %v3194 = vpop.f32.mrb[0].mxu0
  %v3195 = vadd.f32 %v3002, %v3194
  %v3196 = vpop.f32.mrb[0].mxu0
  %v3197 = vadd.f32 %v3004, %v3196
  %3198 = vmatprep.mubr.bf16.mxu0 0
  %3199 = vmatmul.mubr.bf16.gmra.mrb[0].mxu0 %v319
  %v3200 = vpop.f32.mrb[0].mxu0
  %v3201 = vadd.f32 %v3008, %v3200
  %v3202 = vpop.f32.mrb[0].mxu0
  %v3203 = vadd.f32 %v3010, %v3202
  %v3204 = vpop.f32.mrb[0].mxu0
  %v3205 = vadd.f32 %v3012, %v3204
  %v3206 = vpop.f32.mrb[0].mxu0
  %v3207 = vadd.f32 %v3014, %v3206
  %3208 = vmatprep.mubr.bf16.mxu0 0
  %3209 = vmatmul.mubr.bf16.gmra.mrb[0].mxu0 %v326
  %v3210 = vpop.f32.mrb[0].mxu0
  %v3211 = vadd.f32 %v3018, %v3210
  %v3212 = vpop.f32.mrb[0].mxu0
  %v3213 = vadd.f32 %v3020, %v3212
  %v3214 = vpop.f32.mrb[0].mxu0
  %v3215 = vadd.f32 %v3022, %v3214
  %v3216 = vpop.f32.mrb[0].mxu0
  %v3217 = vadd.f32 %v3024, %v3216
  %3218 = vmatprep.mubr.bf16.mxu0 0
  %3219 = vmatmul.mubr.bf16.gmra.mrb[0].mxu0 %v333
  %v3220 = vpop.f32.mrb[0].mxu0
  %v3221 = vadd.f32 %v3028, %v3220
  %v3222 = vpop.f32.mrb[0].mxu0
  %v3223 = vadd.f32 %v3030, %v3222
  %v3224 = vpop.f32.mrb[0].mxu0
  %v3225 = vadd.f32 %v3032, %v3224
  %v3226 = vpop.f32.mrb[0].mxu0
  %v3227 = vadd.f32 %v3034, %v3226
  %3228 = vmatprep.mubr.bf16.mxu0 0
  %3229 = vmatmul.mubr.bf16.gmra.mrb[0].mxu0 %v340
  %v3230 = vpop.f32.mrb[0].mxu0
  %v3231 = vadd.f32 %v3038, %v3230
  %v3232 = vpop.f32.mrb[0].mxu0
  %v3233 = vadd.f32 %v3040, %v3232
  %v3234 = vpop.f32.mrb[0].mxu0
  %v3235 = vadd.f32 %v3042, %v3234
  %v3236 = vpop.f32.mrb[0].mxu0
  %v3237 = vadd.f32 %v3044, %v3236
  %3238 = vmatprep.mubr.bf16.mxu0 0
  %3239 = vmatmul.mubr.bf16.gmra.mrb[0].mxu0 %v347
  %v3240 = vpop.f32.mrb[0].mxu0
  %v3241 = vadd.f32 %v3048, %v3240
  %v3242 = vpop.f32.mrb[0].mxu0
  %v3243 = vadd.f32 %v3050, %v3242
  %v3244 = vpop.f32.mrb[0].mxu0
  %v3245 = vadd.f32 %v3052, %v3244
  %v3246 = vpop.f32.mrb[0].mxu0
  %v3247 = vadd.f32 %v3054, %v3246
  %3248 = vmatprep.mubr.bf16.mxu0 0
  %3249 = vmatmul.mubr.bf16.gmra.mrb[0].mxu0 %v354
  %v3250 = vpop.f32.mrb[0].mxu0
  %v3251 = vadd.f32 %v3058, %v3250
  %v3252 = vpop.f32.mrb[0].mxu0
  %v3253 = vadd.f32 %v3060, %v3252
  %v3254 = vpop.f32.mrb[0].mxu0
  %v3255 = vadd.f32 %v3062, %v3254
  %v3256 = vpop.f32.mrb[0].mxu0
  %v3257 = vadd.f32 %v3064, %v3256
  %3258 = vmatprep.mubr.bf16.mxu0 0
  %3259 = vmatmul.mubr.bf16.gmra.mrb[0].mxu0 %v361
  %v3260 = vpop.f32.mrb[0].mxu0
  %v3261 = vadd.f32 %v3068, %v3260
  %v3262 = vpop.f32.mrb[0].mxu0
  %v3263 = vadd.f32 %v3070, %v3262
  %v3264 = vpop.f32.mrb[0].mxu0
  %v3265 = vadd.f32 %v3072, %v3264
  %v3266 = vpop.f32.mrb[0].mxu0
  %v3267 = vadd.f32 %v3074, %v3266
  %3268 = vmatprep.mubr.bf16.mxu0 0
  %3269 = vmatmul.mubr.bf16.gmra.mrb[0].mxu0 %v368
  %v3270 = vpop.f32.mrb[0].mxu0
  %v3271 = vadd.f32 %v3078, %v3270
  %v3272 = vpop.f32.mrb[0].mxu0
  %v3273 = vadd.f32 %v3080, %v3272
  %v3274 = vpop.f32.mrb[0].mxu0
  %v3275 = vadd.f32 %v3082, %v3274
  %v3276 = vpop.f32.mrb[0].mxu0
  %v3277 = vadd.f32 %v3084, %v3276
  %3278 = vdwg.mxu0
  %vm3279 = vcmp.gt.f32.partialorder %v2349, 0.0
  %vm3280 = vcmp.gt.f32.partialorder %v2351, 0.0
  %vm3281 = vcmp.gt.f32.partialorder %v3121, 0.0
  %vm3282 = vcmp.gt.f32.partialorder %v3123, 0.0
  %vm3283 = vcmp.gt.f32.partialorder %v2353, 0.0
  %vm3284 = vcmp.gt.f32.partialorder %v2355, 0.0
  %vm3285 = vcmp.gt.f32.partialorder %v3125, 0.0
  %vm3286 = vcmp.gt.f32.partialorder %v3127, 0.0
  %vm3287 = vcmp.gt.f32.partialorder %v2359, 0.0
  %vm3288 = vcmp.gt.f32.partialorder %v2361, 0.0
  %vm3289 = vcmp.gt.f32.partialorder %v3131, 0.0
  %vm3290 = vcmp.gt.f32.partialorder %v3133, 0.0
  %vm3291 = vcmp.gt.f32.partialorder %v2363, 0.0
  %vm3292 = vcmp.gt.f32.partialorder %v2365, 0.0
  %vm3293 = vcmp.gt.f32.partialorder %v3135, 0.0
  %vm3294 = vcmp.gt.f32.partialorder %v3137, 0.0
  %vm3295 = vcmp.gt.f32.partialorder %v2369, 0.0
  %vm3296 = vcmp.gt.f32.partialorder %v2371, 0.0
  %vm3297 = vcmp.gt.f32.partialorder %v3141, 0.0
  %vm3298 = vcmp.gt.f32.partialorder %v3143, 0.0
  %vm3299 = vcmp.gt.f32.partialorder %v2373, 0.0
  %vm3300 = vcmp.gt.f32.partialorder %v2375, 0.0
  %vm3301 = vcmp.gt.f32.partialorder %v3145, 0.0
  %vm3302 = vcmp.gt.f32.partialorder %v3147, 0.0
  %vm3303 = vcmp.gt.f32.partialorder %v2379, 0.0
  %vm3304 = vcmp.gt.f32.partialorder %v2381, 0.0
  %vm3305 = vcmp.gt.f32.partialorder %v3151, 0.0
  %vm3306 = vcmp.gt.f32.partialorder %v3153, 0.0
  %vm3307 = vcmp.gt.f32.partialorder %v2383, 0.0
  %vm3308 = vcmp.gt.f32.partialorder %v2385, 0.0
  %vm3309 = vcmp.gt.f32.partialorder %v3155, 0.0
  %vm3310 = vcmp.gt.f32.partialorder %v3157, 0.0
  %vm3311 = vcmp.gt.f32.partialorder %v2389, 0.0
  %vm3312 = vcmp.gt.f32.partialorder %v2391, 0.0
  %vm3313 = vcmp.gt.f32.partialorder %v3161, 0.0
  %vm3314 = vcmp.gt.f32.partialorder %v3163, 0.0
  %vm3315 = vcmp.gt.f32.partialorder %v2393, 0.0
  %vm3316 = vcmp.gt.f32.partialorder %v2395, 0.0
  %vm3317 = vcmp.gt.f32.partialorder %v3165, 0.0
  %vm3318 = vcmp.gt.f32.partialorder %v3167, 0.0
  %vm3319 = vcmp.gt.f32.partialorder %v2399, 0.0
  %vm3320 = vcmp.gt.f32.partialorder %v2401, 0.0
  %vm3321 = vcmp.gt.f32.partialorder %v3171, 0.0
  %vm3322 = vcmp.gt.f32.partialorder %v3173, 0.0
  %vm3323 = vcmp.gt.f32.partialorder %v2403, 0.0
  %vm3324 = vcmp.gt.f32.partialorder %v2405, 0.0
  %vm3325 = vcmp.gt.f32.partialorder %v3175, 0.0
  %vm3326 = vcmp.gt.f32.partialorder %v3177, 0.0
  %vm3327 = vcmp.gt.f32.partialorder %v2409, 0.0
  %vm3328 = vcmp.gt.f32.partialorder %v2411, 0.0
  %vm3329 = vcmp.gt.f32.partialorder %v3181, 0.0
  %vm3330 = vcmp.gt.f32.partialorder %v3183, 0.0
  %vm3331 = vcmp.gt.f32.partialorder %v2413, 0.0
  %vm3332 = vcmp.gt.f32.partialorder %v2415, 0.0
  %vm3333 = vcmp.gt.f32.partialorder %v3185, 0.0
  %vm3334 = vcmp.gt.f32.partialorder %v3187, 0.0
  %vm3335 = vcmp.gt.f32.partialorder %v2419, 0.0
  %vm3336 = vcmp.gt.f32.partialorder %v2421, 0.0
  %vm3337 = vcmp.gt.f32.partialorder %v3191, 0.0
  %vm3338 = vcmp.gt.f32.partialorder %v3193, 0.0
  %vm3339 = vcmp.gt.f32.partialorder %v2423, 0.0
  %vm3340 = vcmp.gt.f32.partialorder %v2425, 0.0
  %vm3341 = vcmp.gt.f32.partialorder %v3195, 0.0
  %vm3342 = vcmp.gt.f32.partialorder %v3197, 0.0
  %vm3343 = vcmp.gt.f32.partialorder %v2429, 0.0
  %vm3344 = vcmp.gt.f32.partialorder %v2431, 0.0
  %vm3345 = vcmp.gt.f32.partialorder %v3201, 0.0
  %vm3346 = vcmp.gt.f32.partialorder %v3203, 0.0
  %vm3347 = vcmp.gt.f32.partialorder %v2433, 0.0
  %vm3348 = vcmp.gt.f32.partialorder %v2435, 0.0
  %vm3349 = vcmp.gt.f32.partialorder %v3205, 0.0
  %vm3350 = vcmp.gt.f32.partialorder %v3207, 0.0
  %vm3351 = vcmp.gt.f32.partialorder %v2439, 0.0
  %vm3352 = vcmp.gt.f32.partialorder %v2441, 0.0
  %vm3353 = vcmp.gt.f32.partialorder %v3211, 0.0
  %vm3354 = vcmp.gt.f32.partialorder %v3213, 0.0
  %vm3355 = vcmp.gt.f32.partialorder %v2443, 0.0
  %vm3356 = vcmp.gt.f32.partialorder %v2445, 0.0
  %vm3357 = vcmp.gt.f32.partialorder %v3215, 0.0
  %vm3358 = vcmp.gt.f32.partialorder %v3217, 0.0
  %vm3359 = vcmp.gt.f32.partialorder %v2449, 0.0
  %vm3360 = vcmp.gt.f32.partialorder %v2451, 0.0
  %vm3361 = vcmp.gt.f32.partialorder %v3221, 0.0
  %vm3362 = vcmp.gt.f32.partialorder %v3223, 0.0
  %vm3363 = vcmp.gt.f32.partialorder %v2453, 0.0
  %vm3364 = vcmp.gt.f32.partialorder %v2455, 0.0
  %vm3365 = vcmp.gt.f32.partialorder %v3225, 0.0
  %vm3366 = vcmp.gt.f32.partialorder %v3227, 0.0
  %vm3367 = vcmp.gt.f32.partialorder %v2459, 0.0
  %vm3368 = vcmp.gt.f32.partialorder %v2461, 0.0
  %vm3369 = vcmp.gt.f32.partialorder %v3231, 0.0
  %vm3370 = vcmp.gt.f32.partialorder %v3233, 0.0
  %vm3371 = vcmp.gt.f32.partialorder %v2463, 0.0
  %vm3372 = vcmp.gt.f32.partialorder %v2465, 0.0
  %vm3373 = vcmp.gt.f32.partialorder %v3235, 0.0
  %vm3374 = vcmp.gt.f32.partialorder %v3237, 0.0
  %vm3375 = vcmp.gt.f32.partialorder %v2469, 0.0
  %vm3376 = vcmp.gt.f32.partialorder %v2471, 0.0
  %vm3377 = vcmp.gt.f32.partialorder %v3241, 0.0
  %vm3378 = vcmp.gt.f32.partialorder %v3243, 0.0
  %vm3379 = vcmp.gt.f32.partialorder %v2473, 0.0
  %vm3380 = vcmp.gt.f32.partialorder %v2475, 0.0
  %vm3381 = vcmp.gt.f32.partialorder %v3245, 0.0
  %vm3382 = vcmp.gt.f32.partialorder %v3247, 0.0
  %vm3383 = vcmp.gt.f32.partialorder %v2479, 0.0
  %vm3384 = vcmp.gt.f32.partialorder %v2481, 0.0
  %vm3385 = vcmp.gt.f32.partialorder %v3251, 0.0
  %vm3386 = vcmp.gt.f32.partialorder %v3253, 0.0
  %vm3387 = vcmp.gt.f32.partialorder %v2483, 0.0
  %vm3388 = vcmp.gt.f32.partialorder %v2485, 0.0
  %vm3389 = vcmp.gt.f32.partialorder %v3255, 0.0
  %vm3390 = vcmp.gt.f32.partialorder %v3257, 0.0
  %vm3391 = vcmp.gt.f32.partialorder %v2489, 0.0
  %vm3392 = vcmp.gt.f32.partialorder %v2491, 0.0
  %vm3393 = vcmp.gt.f32.partialorder %v3261, 0.0
  %vm3394 = vcmp.gt.f32.partialorder %v3263, 0.0
  %vm3395 = vcmp.gt.f32.partialorder %v2493, 0.0
  %vm3396 = vcmp.gt.f32.partialorder %v2495, 0.0
  %vm3397 = vcmp.gt.f32.partialorder %v3265, 0.0
  %vm3398 = vcmp.gt.f32.partialorder %v3267, 0.0
  %vm3399 = vcmp.gt.f32.partialorder %v2499, 0.0
  %vm3400 = vcmp.gt.f32.partialorder %v2501, 0.0
  %vm3401 = vcmp.gt.f32.partialorder %v3271, 0.0
  %vm3402 = vcmp.gt.f32.partialorder %v3273, 0.0
  %vm3403 = vcmp.gt.f32.partialorder %v2503, 0.0
  %vm3404 = vcmp.gt.f32.partialorder %v2505, 0.0
  %vm3405 = vcmp.gt.f32.partialorder %v3275, 0.0
  %vm3406 = vcmp.gt.f32.partialorder %v3277, 0.0
  %v3407 = vmul.f32 %v2349, 0.01
  %v3408 = vmul.f32 %v2351, 0.01
  %v3409 = vmul.f32 %v3121, 0.01
  %v3410 = vmul.f32 %v3123, 0.01
  %v3411 = vmul.f32 %v2353, 0.01
  %v3412 = vmul.f32 %v2355, 0.01
  %v3413 = vmul.f32 %v3125, 0.01
  %v3414 = vmul.f32 %v3127, 0.01
  %v3415 = vmul.f32 %v2359, 0.01
  %v3416 = vmul.f32 %v2361, 0.01
  %v3417 = vmul.f32 %v3131, 0.01
  %v3418 = vmul.f32 %v3133, 0.01
  %v3419 = vmul.f32 %v2363, 0.01
  %v3420 = vmul.f32 %v2365, 0.01
  %v3421 = vmul.f32 %v3135, 0.01
  %v3422 = vmul.f32 %v3137, 0.01
  %v3423 = vmul.f32 %v2369, 0.01
  %v3424 = vmul.f32 %v2371, 0.01
  %v3425 = vmul.f32 %v3141, 0.01
  %v3426 = vmul.f32 %v3143, 0.01
  %v3427 = vmul.f32 %v2373, 0.01
  %v3428 = vmul.f32 %v2375, 0.01
  %v3429 = vmul.f32 %v3145, 0.01
  %v3430 = vmul.f32 %v3147, 0.01
  %v3431 = vmul.f32 %v2379, 0.01
  %v3432 = vmul.f32 %v2381, 0.01
  %v3433 = vmul.f32 %v3151, 0.01
  %v3434 = vmul.f32 %v3153, 0.01
  %v3435 = vmul.f32 %v2383, 0.01
  %v3436 = vmul.f32 %v2385, 0.01
  %v3437 = vmul.f32 %v3155, 0.01
  %v3438 = vmul.f32 %v3157, 0.01
  %v3439 = vmul.f32 %v2389, 0.01
  %v3440 = vmul.f32 %v2391, 0.01
  %v3441 = vmul.f32 %v3161, 0.01
  %v3442 = vmul.f32 %v3163, 0.01
  %v3443 = vmul.f32 %v2393, 0.01
  %v3444 = vmul.f32 %v2395, 0.01
  %v3445 = vmul.f32 %v3165, 0.01
  %v3446 = vmul.f32 %v3167, 0.01
  %v3447 = vmul.f32 %v2399, 0.01
  %v3448 = vmul.f32 %v2401, 0.01
  %v3449 = vmul.f32 %v3171, 0.01
  %v3450 = vmul.f32 %v3173, 0.01
  %v3451 = vmul.f32 %v2403, 0.01
  %v3452 = vmul.f32 %v2405, 0.01
  %v3453 = vmul.f32 %v3175, 0.01
  %v3454 = vmul.f32 %v3177, 0.01
  %v3455 = vmul.f32 %v2409, 0.01
  %v3456 = vmul.f32 %v2411, 0.01
  %v3457 = vmul.f32 %v3181, 0.01
  %v3458 = vmul.f32 %v3183, 0.01
  %v3459 = vmul.f32 %v2413, 0.01
  %v3460 = vmul.f32 %v2415, 0.01
  %v3461 = vmul.f32 %v3185, 0.01
  %v3462 = vmul.f32 %v3187, 0.01
  %v3463 = vmul.f32 %v2419, 0.01
  %v3464 = vmul.f32 %v2421, 0.01
  %v3465 = vmul.f32 %v3191, 0.01
  %v3466 = vmul.f32 %v3193, 0.01
  %v3467 = vmul.f32 %v2423, 0.01
  %v3468 = vmul.f32 %v2425, 0.01
  %v3469 = vmul.f32 %v3195, 0.01
  %v3470 = vmul.f32 %v3197, 0.01
  %v3471 = vmul.f32 %v2429, 0.01
  %v3472 = vmul.f32 %v2431, 0.01
  %v3473 = vmul.f32 %v3201, 0.01
  %v3474 = vmul.f32 %v3203, 0.01
  %v3475 = vmul.f32 %v2433, 0.01
  %v3476 = vmul.f32 %v2435, 0.01
  %v3477 = vmul.f32 %v3205, 0.01
  %v3478 = vmul.f32 %v3207, 0.01
  %v3479 = vmul.f32 %v2439, 0.01
  %v3480 = vmul.f32 %v2441, 0.01
  %v3481 = vmul.f32 %v3211, 0.01
  %v3482 = vmul.f32 %v3213, 0.01
  %v3483 = vmul.f32 %v2443, 0.01
  %v3484 = vmul.f32 %v2445, 0.01
  %v3485 = vmul.f32 %v3215, 0.01
  %v3486 = vmul.f32 %v3217, 0.01
  %v3487 = vmul.f32 %v2449, 0.01
  %v3488 = vmul.f32 %v2451, 0.01
  %v3489 = vmul.f32 %v3221, 0.01
  %v3490 = vmul.f32 %v3223, 0.01
  %v3491 = vmul.f32 %v2453, 0.01
  %v3492 = vmul.f32 %v2455, 0.01
  %v3493 = vmul.f32 %v3225, 0.01
  %v3494 = vmul.f32 %v3227, 0.01
  %v3495 = vmul.f32 %v2459, 0.01
  %v3496 = vmul.f32 %v2461, 0.01
  %v3497 = vmul.f32 %v3231, 0.01
  %v3498 = vmul.f32 %v3233, 0.01
  %v3499 = vmul.f32 %v2463, 0.01
  %v3500 = vmul.f32 %v2465, 0.01
  %v3501 = vmul.f32 %v3235, 0.01
  %v3502 = vmul.f32 %v3237, 0.01
  %v3503 = vmul.f32 %v2469, 0.01
  %v3504 = vmul.f32 %v2471, 0.01
  %v3505 = vmul.f32 %v3241, 0.01
  %v3506 = vmul.f32 %v3243, 0.01
  %v3507 = vmul.f32 %v2473, 0.01
  %v3508 = vmul.f32 %v2475, 0.01
  %v3509 = vmul.f32 %v3245, 0.01
  %v3510 = vmul.f32 %v3247, 0.01
  %v3511 = vmul.f32 %v2479, 0.01
  %v3512 = vmul.f32 %v2481, 0.01
  %v3513 = vmul.f32 %v3251, 0.01
  %v3514 = vmul.f32 %v3253, 0.01
  %v3515 = vmul.f32 %v2483, 0.01
  %v3516 = vmul.f32 %v2485, 0.01
  %v3517 = vmul.f32 %v3255, 0.01
  %v3518 = vmul.f32 %v3257, 0.01
  %v3519 = vmul.f32 %v2489, 0.01
  %v3520 = vmul.f32 %v2491, 0.01
  %v3521 = vmul.f32 %v3261, 0.01
  %v3522 = vmul.f32 %v3263, 0.01
  %v3523 = vmul.f32 %v2493, 0.01
  %v3524 = vmul.f32 %v2495, 0.01
  %v3525 = vmul.f32 %v3265, 0.01
  %v3526 = vmul.f32 %v3267, 0.01
  %v3527 = vmul.f32 %v2499, 0.01
  %v3528 = vmul.f32 %v2501, 0.01
  %v3529 = vmul.f32 %v3271, 0.01
  %v3530 = vmul.f32 %v3273, 0.01
  %v3531 = vmul.f32 %v2503, 0.01
  %v3532 = vmul.f32 %v2505, 0.01
  %v3533 = vmul.f32 %v3275, 0.01
  %v3534 = vmul.f32 %v3277, 0.01
  %v3535 = vsel %vm3279, %v2349, %v3407
  %v3536 = vsel %vm3280, %v2351, %v3408
  %v3537 = vsel %vm3281, %v3121, %v3409
  %v3538 = vsel %vm3282, %v3123, %v3410
  %v3539 = vsel %vm3283, %v2353, %v3411
  %v3540 = vsel %vm3284, %v2355, %v3412
  %v3541 = vsel %vm3285, %v3125, %v3413
  %v3542 = vsel %vm3286, %v3127, %v3414
  %v3543 = vsel %vm3287, %v2359, %v3415
  %v3544 = vsel %vm3288, %v2361, %v3416
  %v3545 = vsel %vm3289, %v3131, %v3417
  %v3546 = vsel %vm3290, %v3133, %v3418
  %v3547 = vsel %vm3291, %v2363, %v3419
  %v3548 = vsel %vm3292, %v2365, %v3420
  %v3549 = vsel %vm3293, %v3135, %v3421
  %v3550 = vsel %vm3294, %v3137, %v3422
  %v3551 = vsel %vm3295, %v2369, %v3423
  %v3552 = vsel %vm3296, %v2371, %v3424
  %v3553 = vsel %vm3297, %v3141, %v3425
  %v3554 = vsel %vm3298, %v3143, %v3426
  %v3555 = vsel %vm3299, %v2373, %v3427
  %v3556 = vsel %vm3300, %v2375, %v3428
  %v3557 = vsel %vm3301, %v3145, %v3429
  %v3558 = vsel %vm3302, %v3147, %v3430
  %v3559 = vsel %vm3303, %v2379, %v3431
  %v3560 = vsel %vm3304, %v2381, %v3432
  %v3561 = vsel %vm3305, %v3151, %v3433
  %v3562 = vsel %vm3306, %v3153, %v3434
  %v3563 = vsel %vm3307, %v2383, %v3435
  %v3564 = vsel %vm3308, %v2385, %v3436
  %v3565 = vsel %vm3309, %v3155, %v3437
  %v3566 = vsel %vm3310, %v3157, %v3438
  %v3567 = vsel %vm3311, %v2389, %v3439
  %v3568 = vsel %vm3312, %v2391, %v3440
  %v3569 = vsel %vm3313, %v3161, %v3441
  %v3570 = vsel %vm3314, %v3163, %v3442
  %v3571 = vsel %vm3315, %v2393, %v3443
  %v3572 = vsel %vm3316, %v2395, %v3444
  %v3573 = vsel %vm3317, %v3165, %v3445
  %v3574 = vsel %vm3318, %v3167, %v3446
  %v3575 = vsel %vm3319, %v2399, %v3447
  %v3576 = vsel %vm3320, %v2401, %v3448
  %v3577 = vsel %vm3321, %v3171, %v3449
  %v3578 = vsel %vm3322, %v3173, %v3450
  %v3579 = vsel %vm3323, %v2403, %v3451
  %v3580 = vsel %vm3324, %v2405, %v3452
  %v3581 = vsel %vm3325, %v3175, %v3453
  %v3582 = vsel %vm3326, %v3177, %v3454
  %v3583 = vsel %vm3327, %v2409, %v3455
  %v3584 = vsel %vm3328, %v2411, %v3456
  %v3585 = vsel %vm3329, %v3181, %v3457
  %v3586 = vsel %vm3330, %v3183, %v3458
  %v3587 = vsel %vm3331, %v2413, %v3459
  %v3588 = vsel %vm3332, %v2415, %v3460
  %v3589 = vsel %vm3333, %v3185, %v3461
  %v3590 = vsel %vm3334, %v3187, %v3462
  %v3591 = vsel %vm3335, %v2419, %v3463
  %v3592 = vsel %vm3336, %v2421, %v3464
  %v3593 = vsel %vm3337, %v3191, %v3465
  %v3594 = vsel %vm3338, %v3193, %v3466
  %v3595 = vsel %vm3339, %v2423, %v3467
  %v3596 = vsel %vm3340, %v2425, %v3468
  %v3597 = vsel %vm3341, %v3195, %v3469
  %v3598 = vsel %vm3342, %v3197, %v3470
  %v3599 = vsel %vm3343, %v2429, %v3471
  %v3600 = vsel %vm3344, %v2431, %v3472
  %v3601 = vsel %vm3345, %v3201, %v3473
  %v3602 = vsel %vm3346, %v3203, %v3474
  %v3603 = vsel %vm3347, %v2433, %v3475
  %v3604 = vsel %vm3348, %v2435, %v3476
  %v3605 = vsel %vm3349, %v3205, %v3477
  %v3606 = vsel %vm3350, %v3207, %v3478
  %v3607 = vsel %vm3351, %v2439, %v3479
  %v3608 = vsel %vm3352, %v2441, %v3480
  %v3609 = vsel %vm3353, %v3211, %v3481
  %v3610 = vsel %vm3354, %v3213, %v3482
  %v3611 = vsel %vm3355, %v2443, %v3483
  %v3612 = vsel %vm3356, %v2445, %v3484
  %v3613 = vsel %vm3357, %v3215, %v3485
  %v3614 = vsel %vm3358, %v3217, %v3486
  %v3615 = vsel %vm3359, %v2449, %v3487
  %v3616 = vsel %vm3360, %v2451, %v3488
  %v3617 = vsel %vm3361, %v3221, %v3489
  %v3618 = vsel %vm3362, %v3223, %v3490
  %v3619 = vsel %vm3363, %v2453, %v3491
  %v3620 = vsel %vm3364, %v2455, %v3492
  %v3621 = vsel %vm3365, %v3225, %v3493
  %v3622 = vsel %vm3366, %v3227, %v3494
  %v3623 = vsel %vm3367, %v2459, %v3495
  %v3624 = vsel %vm3368, %v2461, %v3496
  %v3625 = vsel %vm3369, %v3231, %v3497
  %v3626 = vsel %vm3370, %v3233, %v3498
  %v3627 = vsel %vm3371, %v2463, %v3499
  %v3628 = vsel %vm3372, %v2465, %v3500
  %v3629 = vsel %vm3373, %v3235, %v3501
  %v3630 = vsel %vm3374, %v3237, %v3502
  %v3631 = vsel %vm3375, %v2469, %v3503
  %v3632 = vsel %vm3376, %v2471, %v3504
  %v3633 = vsel %vm3377, %v3241, %v3505
  %v3634 = vsel %vm3378, %v3243, %v3506
  %v3635 = vsel %vm3379, %v2473, %v3507
  %v3636 = vsel %vm3380, %v2475, %v3508
  %v3637 = vsel %vm3381, %v3245, %v3509
  %v3638 = vsel %vm3382, %v3247, %v3510
  %v3639 = vsel %vm3383, %v2479, %v3511
  %v3640 = vsel %vm3384, %v2481, %v3512
  %v3641 = vsel %vm3385, %v3251, %v3513
  %v3642 = vsel %vm3386, %v3253, %v3514
  %v3643 = vsel %vm3387, %v2483, %v3515
  %v3644 = vsel %vm3388, %v2485, %v3516
  %v3645 = vsel %vm3389, %v3255, %v3517
  %v3646 = vsel %vm3390, %v3257, %v3518
  %v3647 = vsel %vm3391, %v2489, %v3519
  %v3648 = vsel %vm3392, %v2491, %v3520
  %v3649 = vsel %vm3393, %v3261, %v3521
  %v3650 = vsel %vm3394, %v3263, %v3522
  %v3651 = vsel %vm3395, %v2493, %v3523
  %v3652 = vsel %vm3396, %v2495, %v3524
  %v3653 = vsel %vm3397, %v3265, %v3525
  %v3654 = vsel %vm3398, %v3267, %v3526
  %v3655 = vsel %vm3399, %v2499, %v3527
  %v3656 = vsel %vm3400, %v2501, %v3528
  %v3657 = vsel %vm3401, %v3271, %v3529
  %v3658 = vsel %vm3402, %v3273, %v3530
  %v3659 = vsel %vm3403, %v2503, %v3531
  %v3660 = vsel %vm3404, %v2505, %v3532
  %v3661 = vsel %vm3405, %v3275, %v3533
  %v3662 = vsel %vm3406, %v3277, %v3534
  %v3663 = vpack.c.bf16 %v3539, %v3535
  %v3664 = vpack.c.bf16 %v3540, %v3536
  %v3665 = vpack.c.bf16 %v3541, %v3537
  %v3666 = vpack.c.bf16 %v3542, %v3538
  %v3667 = vpack.c.bf16 %v3547, %v3543
  %v3668 = vpack.c.bf16 %v3548, %v3544
  %v3669 = vpack.c.bf16 %v3549, %v3545
  %v3670 = vpack.c.bf16 %v3550, %v3546
  %v3671 = vpack.c.bf16 %v3555, %v3551
  %v3672 = vpack.c.bf16 %v3556, %v3552
  %v3673 = vpack.c.bf16 %v3557, %v3553
  %v3674 = vpack.c.bf16 %v3558, %v3554
  %v3675 = vpack.c.bf16 %v3563, %v3559
  %v3676 = vpack.c.bf16 %v3564, %v3560
  %v3677 = vpack.c.bf16 %v3565, %v3561
  %v3678 = vpack.c.bf16 %v3566, %v3562
  %v3679 = vpack.c.bf16 %v3571, %v3567
  %v3680 = vpack.c.bf16 %v3572, %v3568
  %v3681 = vpack.c.bf16 %v3573, %v3569
  %v3682 = vpack.c.bf16 %v3574, %v3570
  %v3683 = vpack.c.bf16 %v3579, %v3575
  %v3684 = vpack.c.bf16 %v3580, %v3576
  %v3685 = vpack.c.bf16 %v3581, %v3577
  %v3686 = vpack.c.bf16 %v3582, %v3578
  %v3687 = vpack.c.bf16 %v3587, %v3583
  %v3688 = vpack.c.bf16 %v3588, %v3584
  %v3689 = vpack.c.bf16 %v3589, %v3585
  %v3690 = vpack.c.bf16 %v3590, %v3586
  %v3691 = vpack.c.bf16 %v3595, %v3591
  %v3692 = vpack.c.bf16 %v3596, %v3592
  %v3693 = vpack.c.bf16 %v3597, %v3593
  %v3694 = vpack.c.bf16 %v3598, %v3594
  %v3695 = vpack.c.bf16 %v3603, %v3599
  %v3696 = vpack.c.bf16 %v3604, %v3600
  %v3697 = vpack.c.bf16 %v3605, %v3601
  %v3698 = vpack.c.bf16 %v3606, %v3602
  %v3699 = vpack.c.bf16 %v3611, %v3607
  %v3700 = vpack.c.bf16 %v3612, %v3608
  %v3701 = vpack.c.bf16 %v3613, %v3609
  %v3702 = vpack.c.bf16 %v3614, %v3610
  %v3703 = vpack.c.bf16 %v3619, %v3615
  %v3704 = vpack.c.bf16 %v3620, %v3616
  %v3705 = vpack.c.bf16 %v3621, %v3617
  %v3706 = vpack.c.bf16 %v3622, %v3618
  %v3707 = vpack.c.bf16 %v3627, %v3623
  %v3708 = vpack.c.bf16 %v3628, %v3624
  %v3709 = vpack.c.bf16 %v3629, %v3625
  %v3710 = vpack.c.bf16 %v3630, %v3626
  %v3711 = vpack.c.bf16 %v3635, %v3631
  %v3712 = vpack.c.bf16 %v3636, %v3632
  %v3713 = vpack.c.bf16 %v3637, %v3633
  %v3714 = vpack.c.bf16 %v3638, %v3634
  %v3715 = vpack.c.bf16 %v3643, %v3639
  %v3716 = vpack.c.bf16 %v3644, %v3640
  %v3717 = vpack.c.bf16 %v3645, %v3641
  %v3718 = vpack.c.bf16 %v3646, %v3642
  %v3719 = vpack.c.bf16 %v3651, %v3647
  %v3720 = vpack.c.bf16 %v3652, %v3648
  %v3721 = vpack.c.bf16 %v3653, %v3649
  %v3722 = vpack.c.bf16 %v3654, %v3650
  %v3723 = vpack.c.bf16 %v3659, %v3655
  %v3724 = vpack.c.bf16 %v3660, %v3656
  %v3725 = vpack.c.bf16 %v3661, %v3657
  %v3726 = vpack.c.bf16 %v3662, %v3658
  %v3727 = vld [vmem:[%s3] sm:$0xff]
  %v3728 = vld [vmem:[%s3 + $0x8] sm:$0xff]
  %v3729 = vld [vmem:[%s3 + $0x10] sm:$0xff]
  %v3730 = vld [vmem:[%s3 + $0x18] sm:$0xff]
  %v3731 = vld [vmem:[%s3 + $0x20] sm:$0xff]
  %v3732 = vld [vmem:[%s3 + $0x28] sm:$0xff]
  %v3733 = vld [vmem:[%s3 + $0x30] sm:$0xff]
  %v3734 = vld [vmem:[%s3 + $0x38] sm:$0xff]
  %v3735 = vld [vmem:[%s3 + $0x40] sm:$0xff]
  %v3736 = vld [vmem:[%s3 + $0x48] sm:$0xff]
  %v3737 = vld [vmem:[%s3 + $0x50] sm:$0xff]
  %v3738 = vld [vmem:[%s3 + $0x58] sm:$0xff]
  %v3739 = vld [vmem:[%s3 + $0x60] sm:$0xff]
  %v3740 = vld [vmem:[%s3 + $0x68] sm:$0xff]
  %v3741 = vld [vmem:[%s3 + $0x70] sm:$0xff]
  %v3742 = vld [vmem:[%s3 + $0x78] sm:$0xff]
  %v3743 = vld [vmem:[%s3 + $0x80] sm:$0xff]
  %v3744 = vld [vmem:[%s3 + $0x88] sm:$0xff]
  %v3745 = vld [vmem:[%s3 + $0x90] sm:$0xff]
  %v3746 = vld [vmem:[%s3 + $0x98] sm:$0xff]
  %v3747 = vld [vmem:[%s3 + $0xa0] sm:$0xff]
  %v3748 = vld [vmem:[%s3 + $0xa8] sm:$0xff]
  %v3749 = vld [vmem:[%s3 + $0xb0] sm:$0xff]
  %v3750 = vld [vmem:[%s3 + $0xb8] sm:$0xff]
  %v3751 = vld [vmem:[%s3 + $0xc0] sm:$0xff]
  %v3752 = vld [vmem:[%s3 + $0xc8] sm:$0xff]
  %v3753 = vld [vmem:[%s3 + $0xd0] sm:$0xff]
  %v3754 = vld [vmem:[%s3 + $0xd8] sm:$0xff]
  %v3755 = vld [vmem:[%s3 + $0xe0] sm:$0xff]
  %v3756 = vld [vmem:[%s3 + $0xe8] sm:$0xff]
  %v3757 = vld [vmem:[%s3 + $0xf0] sm:$0xff]
  %v3758 = vld [vmem:[%s3 + $0xf8] sm:$0xff]
  %v3759 = vld [vmem:[%s3 + $0x100] sm:$0xff]
  %v3760 = vld [vmem:[%s3 + $0x108] sm:$0xff]
  %v3761 = vld [vmem:[%s3 + $0x110] sm:$0xff]
  %v3762 = vld [vmem:[%s3 + $0x118] sm:$0xff]
  %v3763 = vld [vmem:[%s3 + $0x120] sm:$0xff]
  %v3764 = vld [vmem:[%s3 + $0x128] sm:$0xff]
  %v3765 = vld [vmem:[%s3 + $0x130] sm:$0xff]
  %v3766 = vld [vmem:[%s3 + $0x138] sm:$0xff]
  %v3767 = vld [vmem:[%s3 + $0x140] sm:$0xff]
  %v3768 = vld [vmem:[%s3 + $0x148] sm:$0xff]
  %v3769 = vld [vmem:[%s3 + $0x150] sm:$0xff]
  %v3770 = vld [vmem:[%s3 + $0x158] sm:$0xff]
  %v3771 = vld [vmem:[%s3 + $0x160] sm:$0xff]
  %v3772 = vld [vmem:[%s3 + $0x168] sm:$0xff]
  %v3773 = vld [vmem:[%s3 + $0x170] sm:$0xff]
  %v3774 = vld [vmem:[%s3 + $0x178] sm:$0xff]
  %v3775 = vld [vmem:[%s3 + $0x180] sm:$0xff]
  %v3776 = vld [vmem:[%s3 + $0x188] sm:$0xff]
  %v3777 = vld [vmem:[%s3 + $0x190] sm:$0xff]
  %v3778 = vld [vmem:[%s3 + $0x198] sm:$0xff]
  %v3779 = vld [vmem:[%s3 + $0x1a0] sm:$0xff]
  %v3780 = vld [vmem:[%s3 + $0x1a8] sm:$0xff]
  %v3781 = vld [vmem:[%s3 + $0x1b0] sm:$0xff]
  %v3782 = vld [vmem:[%s3 + $0x1b8] sm:$0xff]
  %v3783 = vld [vmem:[%s3 + $0x1c0] sm:$0xff]
  %v3784 = vld [vmem:[%s3 + $0x1c8] sm:$0xff]
  %v3785 = vld [vmem:[%s3 + $0x1d0] sm:$0xff]
  %v3786 = vld [vmem:[%s3 + $0x1d8] sm:$0xff]
  %v3787 = vld [vmem:[%s3 + $0x1e0] sm:$0xff]
  %v3788 = vld [vmem:[%s3 + $0x1e8] sm:$0xff]
  %v3789 = vld [vmem:[%s3 + $0x1f0] sm:$0xff]
  %v3790 = vld [vmem:[%s3 + $0x1f8] sm:$0xff]
  %v3791 = vld [vmem:[%s4] sm:$0x3]
  %v3793 = vlaneseq
  %v3794 = vshrl.u32 %v3793, 7
  %v3795 = vsub.s32 0, %v3794
  %v3796 = vrot.slane %v3791, %v3795
  %v3797 = vlaneseq
  %v3798 = vshrl.u32 %v3797, 7
  %v3799 = vsub.s32 1, %v3798
  %v3800 = vrot.slane %v3791, %v3799
  %v3867 = vunpack.c.l.b16 %v3727
  %v3868 = vunpack.c.h.b16 %v3727
  %v3869 = vunpack.c.l.b16 %v3728
  %v3870 = vunpack.c.h.b16 %v3728
  %v3871 = vunpack.c.l.b16 %v3729
  %v3872 = vunpack.c.h.b16 %v3729
  %v3873 = vunpack.c.l.b16 %v3730
  %v3874 = vunpack.c.h.b16 %v3730
  %v3875 = vunpack.c.l.b16 %v3731
  %v3876 = vunpack.c.h.b16 %v3731
  %v3877 = vunpack.c.l.b16 %v3732
  %v3878 = vunpack.c.h.b16 %v3732
  %v3879 = vunpack.c.l.b16 %v3733
  %v3880 = vunpack.c.h.b16 %v3733
  %v3881 = vunpack.c.l.b16 %v3734
  %v3882 = vunpack.c.h.b16 %v3734
  %v3883 = vunpack.c.l.b16 %v3735
  %v3884 = vunpack.c.h.b16 %v3735
  %v3885 = vunpack.c.l.b16 %v3736
  %v3886 = vunpack.c.h.b16 %v3736
  %v3887 = vunpack.c.l.b16 %v3737
  %v3888 = vunpack.c.h.b16 %v3737
  %v3889 = vunpack.c.l.b16 %v3738
  %v3890 = vunpack.c.h.b16 %v3738
  %v3891 = vunpack.c.l.b16 %v3739
  %v3892 = vunpack.c.h.b16 %v3739
  %v3893 = vunpack.c.l.b16 %v3740
  %v3894 = vunpack.c.h.b16 %v3740
  %v3895 = vunpack.c.l.b16 %v3741
  %v3896 = vunpack.c.h.b16 %v3741
  %v3897 = vunpack.c.l.b16 %v3742
  %v3898 = vunpack.c.h.b16 %v3742
  %v3899 = vunpack.c.l.b16 %v3743
  %v3900 = vunpack.c.h.b16 %v3743
  %v3901 = vunpack.c.l.b16 %v3744
  %v3902 = vunpack.c.h.b16 %v3744
  %v3903 = vunpack.c.l.b16 %v3745
  %v3904 = vunpack.c.h.b16 %v3745
  %v3905 = vunpack.c.l.b16 %v3746
  %v3906 = vunpack.c.h.b16 %v3746
  %v3907 = vunpack.c.l.b16 %v3747
  %v3908 = vunpack.c.h.b16 %v3747
  %v3909 = vunpack.c.l.b16 %v3748
  %v3910 = vunpack.c.h.b16 %v3748
  %v3911 = vunpack.c.l.b16 %v3749
  %v3912 = vunpack.c.h.b16 %v3749
  %v3913 = vunpack.c.l.b16 %v3750
  %v3914 = vunpack.c.h.b16 %v3750
  %v3915 = vunpack.c.l.b16 %v3751
  %v3916 = vunpack.c.h.b16 %v3751
  %v3917 = vunpack.c.l.b16 %v3752
  %v3918 = vunpack.c.h.b16 %v3752
  %v3919 = vunpack.c.l.b16 %v3753
  %v3920 = vunpack.c.h.b16 %v3753
  %v3921 = vunpack.c.l.b16 %v3754
  %v3922 = vunpack.c.h.b16 %v3754
  %v3923 = vunpack.c.l.b16 %v3755
  %v3924 = vunpack.c.h.b16 %v3755
  %v3925 = vunpack.c.l.b16 %v3756
  %v3926 = vunpack.c.h.b16 %v3756
  %v3927 = vunpack.c.l.b16 %v3757
  %v3928 = vunpack.c.h.b16 %v3757
  %v3929 = vunpack.c.l.b16 %v3758
  %v3930 = vunpack.c.h.b16 %v3758
  %v3931 = vunpack.c.l.b16 %v3759
  %v3932 = vunpack.c.h.b16 %v3759
  %v3933 = vunpack.c.l.b16 %v3760
  %v3934 = vunpack.c.h.b16 %v3760
  %v3935 = vunpack.c.l.b16 %v3761
  %v3936 = vunpack.c.h.b16 %v3761
  %v3937 = vunpack.c.l.b16 %v3762
  %v3938 = vunpack.c.h.b16 %v3762
  %v3939 = vunpack.c.l.b16 %v3763
  %v3940 = vunpack.c.h.b16 %v3763
  %v3941 = vunpack.c.l.b16 %v3764
  %v3942 = vunpack.c.h.b16 %v3764
  %v3943 = vunpack.c.l.b16 %v3765
  %v3944 = vunpack.c.h.b16 %v3765
  %v3945 = vunpack.c.l.b16 %v3766
  %v3946 = vunpack.c.h.b16 %v3766
  %v3947 = vunpack.c.l.b16 %v3767
  %v3948 = vunpack.c.h.b16 %v3767
  %v3949 = vunpack.c.l.b16 %v3768
  %v3950 = vunpack.c.h.b16 %v3768
  %v3951 = vunpack.c.l.b16 %v3769
  %v3952 = vunpack.c.h.b16 %v3769
  %v3953 = vunpack.c.l.b16 %v3770
  %v3954 = vunpack.c.h.b16 %v3770
  %v3955 = vunpack.c.l.b16 %v3771
  %v3956 = vunpack.c.h.b16 %v3771
  %v3957 = vunpack.c.l.b16 %v3772
  %v3958 = vunpack.c.h.b16 %v3772
  %v3959 = vunpack.c.l.b16 %v3773
  %v3960 = vunpack.c.h.b16 %v3773
  %v3961 = vunpack.c.l.b16 %v3774
  %v3962 = vunpack.c.h.b16 %v3774
  %v3963 = vunpack.c.l.b16 %v3775
  %v3964 = vunpack.c.h.b16 %v3775
  %v3965 = vunpack.c.l.b16 %v3776
  %v3966 = vunpack.c.h.b16 %v3776
  %v3967 = vunpack.c.l.b16 %v3777
  %v3968 = vunpack.c.h.b16 %v3777
  %v3969 = vunpack.c.l.b16 %v3778
  %v3970 = vunpack.c.h.b16 %v3778
  %v3971 = vunpack.c.l.b16 %v3779
  %v3972 = vunpack.c.h.b16 %v3779
  %v3973 = vunpack.c.l.b16 %v3780
  %v3974 = vunpack.c.h.b16 %v3780
  %v3975 = vunpack.c.l.b16 %v3781
  %v3976 = vunpack.c.h.b16 %v3781
  %v3977 = vunpack.c.l.b16 %v3782
  %v3978 = vunpack.c.h.b16 %v3782
  %v3979 = vunpack.c.l.b16 %v3783
  %v3980 = vunpack.c.h.b16 %v3783
  %v3981 = vunpack.c.l.b16 %v3784
  %v3982 = vunpack.c.h.b16 %v3784
  %v3983 = vunpack.c.l.b16 %v3785
  %v3984 = vunpack.c.h.b16 %v3785
  %v3985 = vunpack.c.l.b16 %v3786
  %v3986 = vunpack.c.h.b16 %v3786
  %v3987 = vunpack.c.l.b16 %v3787
  %v3988 = vunpack.c.h.b16 %v3787
  %v3989 = vunpack.c.l.b16 %v3788
  %v3990 = vunpack.c.h.b16 %v3788
  %v3991 = vunpack.c.l.b16 %v3789
  %v3992 = vunpack.c.h.b16 %v3789
  %v3993 = vunpack.c.l.b16 %v3790
  %v3994 = vunpack.c.h.b16 %v3790
  %v3995 = vpack.c.b16 %v3869, %v3867
  %v3996 = vpack.c.b16 %v3870, %v3868
  %v3997 = vpack.c.b16 %v3873, %v3871
  %v3998 = vpack.c.b16 %v3874, %v3872
  %v3999 = vpack.c.b16 %v3877, %v3875
  %v4000 = vpack.c.b16 %v3878, %v3876
  %v4001 = vpack.c.b16 %v3881, %v3879
  %v4002 = vpack.c.b16 %v3882, %v3880
  %v4003 = vpack.c.b16 %v3885, %v3883
  %v4004 = vpack.c.b16 %v3886, %v3884
  %v4005 = vpack.c.b16 %v3889, %v3887
  %v4006 = vpack.c.b16 %v3890, %v3888
  %v4007 = vpack.c.b16 %v3893, %v3891
  %v4008 = vpack.c.b16 %v3894, %v3892
  %v4009 = vpack.c.b16 %v3897, %v3895
  %v4010 = vpack.c.b16 %v3898, %v3896
  %v4011 = vpack.c.b16 %v3901, %v3899
  %v4012 = vpack.c.b16 %v3902, %v3900
  %v4013 = vpack.c.b16 %v3905, %v3903
  %v4014 = vpack.c.b16 %v3906, %v3904
  %v4015 = vpack.c.b16 %v3909, %v3907
  %v4016 = vpack.c.b16 %v3910, %v3908
  %v4017 = vpack.c.b16 %v3913, %v3911
  %v4018 = vpack.c.b16 %v3914, %v3912
  %v4019 = vpack.c.b16 %v3917, %v3915
  %v4020 = vpack.c.b16 %v3918, %v3916
  %v4021 = vpack.c.b16 %v3921, %v3919
  %v4022 = vpack.c.b16 %v3922, %v3920
  %v4023 = vpack.c.b16 %v3925, %v3923
  %v4024 = vpack.c.b16 %v3926, %v3924
  %v4025 = vpack.c.b16 %v3929, %v3927
  %v4026 = vpack.c.b16 %v3930, %v3928
  %v4027 = vpack.c.b16 %v3933, %v3931
  %v4028 = vpack.c.b16 %v3934, %v3932
  %v4029 = vpack.c.b16 %v3937, %v3935
  %v4030 = vpack.c.b16 %v3938, %v3936
  %v4031 = vpack.c.b16 %v3941, %v3939
  %v4032 = vpack.c.b16 %v3942, %v3940
  %v4033 = vpack.c.b16 %v3945, %v3943
  %v4034 = vpack.c.b16 %v3946, %v3944
  %v4035 = vpack.c.b16 %v3949, %v3947
  %v4036 = vpack.c.b16 %v3950, %v3948
  %v4037 = vpack.c.b16 %v3953, %v3951
  %v4038 = vpack.c.b16 %v3954, %v3952
  %v4039 = vpack.c.b16 %v3957, %v3955
  %v4040 = vpack.c.b16 %v3958, %v3956
  %v4041 = vpack.c.b16 %v3961, %v3959
  %v4042 = vpack.c.b16 %v3962, %v3960
  %v4043 = vpack.c.b16 %v3965, %v3963
  %v4044 = vpack.c.b16 %v3966, %v3964
  %v4045 = vpack.c.b16 %v3969, %v3967
  %v4046 = vpack.c.b16 %v3970, %v3968
  %v4047 = vpack.c.b16 %v3973, %v3971
  %v4048 = vpack.c.b16 %v3974, %v3972
  %v4049 = vpack.c.b16 %v3977, %v3975
  %v4050 = vpack.c.b16 %v3978, %v3976
  %v4051 = vpack.c.b16 %v3981, %v3979
  %v4052 = vpack.c.b16 %v3982, %v3980
  %v4053 = vpack.c.b16 %v3985, %v3983
  %v4054 = vpack.c.b16 %v3986, %v3984
  %v4055 = vpack.c.b16 %v3989, %v3987
  %v4056 = vpack.c.b16 %v3990, %v3988
  %v4057 = vpack.c.b16 %v3993, %v3991
  %v4058 = vpack.c.b16 %v3994, %v3992
  %4123 = vmatprep.subr.bf16.mxu0 %v3996
  %4124 = vmatpush1.bf16.msra.mxu0 %v3995
  %4125 = vmatprep.subr.bf16.mxu0 %v3998
  %4126 = vmatpush1.bf16.msra.mxu0 %v3997
  %4127 = vmatprep.subr.bf16.mxu0 %v4000
  %4128 = vmatpush1.bf16.msra.mxu0 %v3999
  %4129 = vmatprep.subr.bf16.mxu0 %v4002
  %4130 = vmatpush1.bf16.msra.mxu0 %v4001
  %4131 = vmatprep.subr.bf16.mxu0 %v4004
  %4132 = vmatpush1.bf16.msra.mxu0 %v4003
  %4133 = vmatprep.subr.bf16.mxu0 %v4006
  %4134 = vmatpush1.bf16.msra.mxu0 %v4005
  %4135 = vmatprep.subr.bf16.mxu0 %v4008
  %4136 = vmatpush1.bf16.msra.mxu0 %v4007
  %4137 = vmatprep.subr.bf16.mxu0 %v4010
  %4138 = vmatpush1.bf16.msra.mxu0 %v4009
  %4139 = vmatprep.subr.bf16.mxu0 %v4012
  %4140 = vmatpush1.bf16.msra.mxu0 %v4011
  %4141 = vmatprep.subr.bf16.mxu0 %v4014
  %4142 = vmatpush1.bf16.msra.mxu0 %v4013
  %4143 = vmatprep.subr.bf16.mxu0 %v4016
  %4144 = vmatpush1.bf16.msra.mxu0 %v4015
  %4145 = vmatprep.subr.bf16.mxu0 %v4018
  %4146 = vmatpush1.bf16.msra.mxu0 %v4017
  %4147 = vmatprep.subr.bf16.mxu0 %v4020
  %4148 = vmatpush1.bf16.msra.mxu0 %v4019
  %4149 = vmatprep.subr.bf16.mxu0 %v4022
  %4150 = vmatpush1.bf16.msra.mxu0 %v4021
  %4151 = vmatprep.subr.bf16.mxu0 %v4024
  %4152 = vmatpush1.bf16.msra.mxu0 %v4023
  %4153 = vmatprep.subr.bf16.mxu0 %v4026
  %4154 = vmatpush1.bf16.msra.mxu0 %v4025
  %4155 = vmatprep.mubr.bf16.mxu0 %v3664
  %4156 = vmatmul.mubr.bf16.gmra.mrb[0].mxu0 %v3663
  %v4157 = vpop.f32.mrb[0].mxu0
  %v4158 = vadd.f32 %v3796, %v4157
  %v4159 = vpop.f32.mrb[0].mxu0
  %v4160 = vadd.f32 %v3800, %v4159
  %v4161 = vpop.f32.mrb[0].mxu0
  %v4162 = vadd.f32 %v3796, %v4161
  %v4163 = vpop.f32.mrb[0].mxu0
  %v4164 = vadd.f32 %v3800, %v4163
  %4165 = vmatprep.mubr.bf16.mxu0 %v3668
  %4166 = vmatmul.mubr.bf16.gmra.mrb[0].mxu0 %v3667
  %v4167 = vpop.f32.mrb[0].mxu0
  %v4168 = vadd.f32 %v3796, %v4167
  %v4169 = vpop.f32.mrb[0].mxu0
  %v4170 = vadd.f32 %v3800, %v4169
  %v4171 = vpop.f32.mrb[0].mxu0
  %v4172 = vadd.f32 %v3796, %v4171
  %v4173 = vpop.f32.mrb[0].mxu0
  %v4174 = vadd.f32 %v3800, %v4173
  %4175 = vmatprep.mubr.bf16.mxu0 %v3672
  %4176 = vmatmul.mubr.bf16.gmra.mrb[0].mxu0 %v3671
  %v4177 = vpop.f32.mrb[0].mxu0
  %v4178 = vadd.f32 %v3796, %v4177
  %v4179 = vpop.f32.mrb[0].mxu0
  %v4180 = vadd.f32 %v3800, %v4179
  %v4181 = vpop.f32.mrb[0].mxu0
  %v4182 = vadd.f32 %v3796, %v4181
  %v4183 = vpop.f32.mrb[0].mxu0
  %v4184 = vadd.f32 %v3800, %v4183
  %4185 = vmatprep.mubr.bf16.mxu0 %v3676
  %4186 = vmatmul.mubr.bf16.gmra.mrb[0].mxu0 %v3675
  %v4187 = vpop.f32.mrb[0].mxu0
  %v4188 = vadd.f32 %v3796, %v4187
  %v4189 = vpop.f32.mrb[0].mxu0
  %v4190 = vadd.f32 %v3800, %v4189
  %v4191 = vpop.f32.mrb[0].mxu0
  %v4192 = vadd.f32 %v3796, %v4191
  %v4193 = vpop.f32.mrb[0].mxu0
  %v4194 = vadd.f32 %v3800, %v4193
  %4195 = vmatprep.mubr.bf16.mxu0 %v3680
  %4196 = vmatmul.mubr.bf16.gmra.mrb[0].mxu0 %v3679
  %v4197 = vpop.f32.mrb[0].mxu0
  %v4198 = vadd.f32 %v3796, %v4197
  %v4199 = vpop.f32.mrb[0].mxu0
  %v4200 = vadd.f32 %v3800, %v4199
  %v4201 = vpop.f32.mrb[0].mxu0
  %v4202 = vadd.f32 %v3796, %v4201
  %v4203 = vpop.f32.mrb[0].mxu0
  %v4204 = vadd.f32 %v3800, %v4203
  %4205 = vmatprep.mubr.bf16.mxu0 %v3684
  %4206 = vmatmul.mubr.bf16.gmra.mrb[0].mxu0 %v3683
  %v4207 = vpop.f32.mrb[0].mxu0
  %v4208 = vadd.f32 %v3796, %v4207
  %v4209 = vpop.f32.mrb[0].mxu0
  %v4210 = vadd.f32 %v3800, %v4209
  %v4211 = vpop.f32.mrb[0].mxu0
  %v4212 = vadd.f32 %v3796, %v4211
  %v4213 = vpop.f32.mrb[0].mxu0
  %v4214 = vadd.f32 %v3800, %v4213
  %4215 = vmatprep.mubr.bf16.mxu0 %v3688
  %4216 = vmatmul.mubr.bf16.gmra.mrb[0].mxu0 %v3687
  %v4217 = vpop.f32.mrb[0].mxu0
  %v4218 = vadd.f32 %v3796, %v4217
  %v4219 = vpop.f32.mrb[0].mxu0
  %v4220 = vadd.f32 %v3800, %v4219
  %v4221 = vpop.f32.mrb[0].mxu0
  %v4222 = vadd.f32 %v3796, %v4221
  %v4223 = vpop.f32.mrb[0].mxu0
  %v4224 = vadd.f32 %v3800, %v4223
  %4225 = vmatprep.mubr.bf16.mxu0 %v3692
  %4226 = vmatmul.mubr.bf16.gmra.mrb[0].mxu0 %v3691
  %v4227 = vpop.f32.mrb[0].mxu0
  %v4228 = vadd.f32 %v3796, %v4227
  %v4229 = vpop.f32.mrb[0].mxu0
  %v4230 = vadd.f32 %v3800, %v4229
  %v4231 = vpop.f32.mrb[0].mxu0
  %v4232 = vadd.f32 %v3796, %v4231
  %v4233 = vpop.f32.mrb[0].mxu0
  %v4234 = vadd.f32 %v3800, %v4233
  %4235 = vmatprep.mubr.bf16.mxu0 %v3696
  %4236 = vmatmul.mubr.bf16.gmra.mrb[0].mxu0 %v3695
  %v4237 = vpop.f32.mrb[0].mxu0
  %v4238 = vadd.f32 %v3796, %v4237
  %v4239 = vpop.f32.mrb[0].mxu0
  %v4240 = vadd.f32 %v3800, %v4239
  %v4241 = vpop.f32.mrb[0].mxu0
  %v4242 = vadd.f32 %v3796, %v4241
  %v4243 = vpop.f32.mrb[0].mxu0
  %v4244 = vadd.f32 %v3800, %v4243
  %4245 = vmatprep.mubr.bf16.mxu0 %v3700
  %4246 = vmatmul.mubr.bf16.gmra.mrb[0].mxu0 %v3699
  %v4247 = vpop.f32.mrb[0].mxu0
  %v4248 = vadd.f32 %v3796, %v4247
  %v4249 = vpop.f32.mrb[0].mxu0
  %v4250 = vadd.f32 %v3800, %v4249
  %v4251 = vpop.f32.mrb[0].mxu0
  %v4252 = vadd.f32 %v3796, %v4251
  %v4253 = vpop.f32.mrb[0].mxu0
  %v4254 = vadd.f32 %v3800, %v4253
  %4255 = vmatprep.mubr.bf16.mxu0 %v3704
  %4256 = vmatmul.mubr.bf16.gmra.mrb[0].mxu0 %v3703
  %v4257 = vpop.f32.mrb[0].mxu0
  %v4258 = vadd.f32 %v3796, %v4257
  %v4259 = vpop.f32.mrb[0].mxu0
  %v4260 = vadd.f32 %v3800, %v4259
  %v4261 = vpop.f32.mrb[0].mxu0
  %v4262 = vadd.f32 %v3796, %v4261
  %v4263 = vpop.f32.mrb[0].mxu0
  %v4264 = vadd.f32 %v3800, %v4263
  %4265 = vmatprep.mubr.bf16.mxu0 %v3708
  %4266 = vmatmul.mubr.bf16.gmra.mrb[0].mxu0 %v3707
  %v4267 = vpop.f32.mrb[0].mxu0
  %v4268 = vadd.f32 %v3796, %v4267
  %v4269 = vpop.f32.mrb[0].mxu0
  %v4270 = vadd.f32 %v3800, %v4269
  %v4271 = vpop.f32.mrb[0].mxu0
  %v4272 = vadd.f32 %v3796, %v4271
  %v4273 = vpop.f32.mrb[0].mxu0
  %v4274 = vadd.f32 %v3800, %v4273
  %4275 = vmatprep.mubr.bf16.mxu0 %v3712
  %4276 = vmatmul.mubr.bf16.gmra.mrb[0].mxu0 %v3711
  %v4277 = vpop.f32.mrb[0].mxu0
  %v4278 = vadd.f32 %v3796, %v4277
  %v4279 = vpop.f32.mrb[0].mxu0
  %v4280 = vadd.f32 %v3800, %v4279
  %v4281 = vpop.f32.mrb[0].mxu0
  %v4282 = vadd.f32 %v3796, %v4281
  %v4283 = vpop.f32.mrb[0].mxu0
  %v4284 = vadd.f32 %v3800, %v4283
  %4285 = vmatprep.mubr.bf16.mxu0 %v3716
  %4286 = vmatmul.mubr.bf16.gmra.mrb[0].mxu0 %v3715
  %v4287 = vpop.f32.mrb[0].mxu0
  %v4288 = vadd.f32 %v3796, %v4287
  %v4289 = vpop.f32.mrb[0].mxu0
  %v4290 = vadd.f32 %v3800, %v4289
  %v4291 = vpop.f32.mrb[0].mxu0
  %v4292 = vadd.f32 %v3796, %v4291
  %v4293 = vpop.f32.mrb[0].mxu0
  %v4294 = vadd.f32 %v3800, %v4293
  %4295 = vmatprep.mubr.bf16.mxu0 %v3720
  %4296 = vmatmul.mubr.bf16.gmra.mrb[0].mxu0 %v3719
  %v4297 = vpop.f32.mrb[0].mxu0
  %v4298 = vadd.f32 %v3796, %v4297
  %v4299 = vpop.f32.mrb[0].mxu0
  %v4300 = vadd.f32 %v3800, %v4299
  %v4301 = vpop.f32.mrb[0].mxu0
  %v4302 = vadd.f32 %v3796, %v4301
  %v4303 = vpop.f32.mrb[0].mxu0
  %v4304 = vadd.f32 %v3800, %v4303
  %4305 = vmatprep.mubr.bf16.mxu0 %v3724
  %4306 = vmatmul.mubr.bf16.gmra.mrb[0].mxu0 %v3723
  %v4307 = vpop.f32.mrb[0].mxu0
  %v4308 = vadd.f32 %v3796, %v4307
  %v4309 = vpop.f32.mrb[0].mxu0
  %v4310 = vadd.f32 %v3800, %v4309
  %v4311 = vpop.f32.mrb[0].mxu0
  %v4312 = vadd.f32 %v3796, %v4311
  %v4313 = vpop.f32.mrb[0].mxu0
  %v4314 = vadd.f32 %v3800, %v4313
  %4315 = vdwg.mxu0
  %4316 = vmatprep.subr.bf16.mxu0 %v4028
  %4317 = vmatpush1.bf16.msra.mxu0 %v4027
  %4318 = vmatprep.subr.bf16.mxu0 %v4030
  %4319 = vmatpush1.bf16.msra.mxu0 %v4029
  %4320 = vmatprep.subr.bf16.mxu0 %v4032
  %4321 = vmatpush1.bf16.msra.mxu0 %v4031
  %4322 = vmatprep.subr.bf16.mxu0 %v4034
  %4323 = vmatpush1.bf16.msra.mxu0 %v4033
  %4324 = vmatprep.subr.bf16.mxu0 %v4036
  %4325 = vmatpush1.bf16.msra.mxu0 %v4035
  %4326 = vmatprep.subr.bf16.mxu0 %v4038
  %4327 = vmatpush1.bf16.msra.mxu0 %v4037
  %4328 = vmatprep.subr.bf16.mxu0 %v4040
  %4329 = vmatpush1.bf16.msra.mxu0 %v4039
  %4330 = vmatprep.subr.bf16.mxu0 %v4042
  %4331 = vmatpush1.bf16.msra.mxu0 %v4041
  %4332 = vmatprep.subr.bf16.mxu0 %v4044
  %4333 = vmatpush1.bf16.msra.mxu0 %v4043
  %4334 = vmatprep.subr.bf16.mxu0 %v4046
  %4335 = vmatpush1.bf16.msra.mxu0 %v4045
  %4336 = vmatprep.subr.bf16.mxu0 %v4048
  %4337 = vmatpush1.bf16.msra.mxu0 %v4047
  %4338 = vmatprep.subr.bf16.mxu0 %v4050
  %4339 = vmatpush1.bf16.msra.mxu0 %v4049
  %4340 = vmatprep.subr.bf16.mxu0 %v4052
  %4341 = vmatpush1.bf16.msra.mxu0 %v4051
  %4342 = vmatprep.subr.bf16.mxu0 %v4054
  %4343 = vmatpush1.bf16.msra.mxu0 %v4053
  %4344 = vmatprep.subr.bf16.mxu0 %v4056
  %4345 = vmatpush1.bf16.msra.mxu0 %v4055
  %4346 = vmatprep.subr.bf16.mxu0 %v4058
  %4347 = vmatpush1.bf16.msra.mxu0 %v4057
  %4348 = vmatprep.mubr.bf16.mxu0 %v3666
  %4349 = vmatmul.mubr.bf16.gmra.mrb[0].mxu0 %v3665
  %v4350 = vpop.f32.mrb[0].mxu0
  %v4351 = vadd.f32 %v4158, %v4350
  %v4352 = vpop.f32.mrb[0].mxu0
  %v4353 = vadd.f32 %v4160, %v4352
  %v4354 = vpop.f32.mrb[0].mxu0
  %v4355 = vadd.f32 %v4162, %v4354
  %v4356 = vpop.f32.mrb[0].mxu0
  %v4357 = vadd.f32 %v4164, %v4356
  %4358 = vmatprep.mubr.bf16.mxu0 %v3670
  %4359 = vmatmul.mubr.bf16.gmra.mrb[0].mxu0 %v3669
  %v4360 = vpop.f32.mrb[0].mxu0
  %v4361 = vadd.f32 %v4168, %v4360
  %v4362 = vpop.f32.mrb[0].mxu0
  %v4363 = vadd.f32 %v4170, %v4362
  %v4364 = vpop.f32.mrb[0].mxu0
  %v4365 = vadd.f32 %v4172, %v4364
  %v4366 = vpop.f32.mrb[0].mxu0
  %v4367 = vadd.f32 %v4174, %v4366
  %4368 = vmatprep.mubr.bf16.mxu0 %v3674
  %4369 = vmatmul.mubr.bf16.gmra.mrb[0].mxu0 %v3673
  %v4370 = vpop.f32.mrb[0].mxu0
  %v4371 = vadd.f32 %v4178, %v4370
  %v4372 = vpop.f32.mrb[0].mxu0
  %v4373 = vadd.f32 %v4180, %v4372
  %v4374 = vpop.f32.mrb[0].mxu0
  %v4375 = vadd.f32 %v4182, %v4374
  %v4376 = vpop.f32.mrb[0].mxu0
  %v4377 = vadd.f32 %v4184, %v4376
  %4378 = vmatprep.mubr.bf16.mxu0 %v3678
  %4379 = vmatmul.mubr.bf16.gmra.mrb[0].mxu0 %v3677
  %v4380 = vpop.f32.mrb[0].mxu0
  %v4381 = vadd.f32 %v4188, %v4380
  %v4382 = vpop.f32.mrb[0].mxu0
  %v4383 = vadd.f32 %v4190, %v4382
  %v4384 = vpop.f32.mrb[0].mxu0
  %v4385 = vadd.f32 %v4192, %v4384
  %v4386 = vpop.f32.mrb[0].mxu0
  %v4387 = vadd.f32 %v4194, %v4386
  %4388 = vmatprep.mubr.bf16.mxu0 %v3682
  %4389 = vmatmul.mubr.bf16.gmra.mrb[0].mxu0 %v3681
  %v4390 = vpop.f32.mrb[0].mxu0
  %v4391 = vadd.f32 %v4198, %v4390
  %v4392 = vpop.f32.mrb[0].mxu0
  %v4393 = vadd.f32 %v4200, %v4392
  %v4394 = vpop.f32.mrb[0].mxu0
  %v4395 = vadd.f32 %v4202, %v4394
  %v4396 = vpop.f32.mrb[0].mxu0
  %v4397 = vadd.f32 %v4204, %v4396
  %4398 = vmatprep.mubr.bf16.mxu0 %v3686
  %4399 = vmatmul.mubr.bf16.gmra.mrb[0].mxu0 %v3685
  %v4400 = vpop.f32.mrb[0].mxu0
  %v4401 = vadd.f32 %v4208, %v4400
  %v4402 = vpop.f32.mrb[0].mxu0
  %v4403 = vadd.f32 %v4210, %v4402
  %v4404 = vpop.f32.mrb[0].mxu0
  %v4405 = vadd.f32 %v4212, %v4404
  %v4406 = vpop.f32.mrb[0].mxu0
  %v4407 = vadd.f32 %v4214, %v4406
  %4408 = vmatprep.mubr.bf16.mxu0 %v3690
  %4409 = vmatmul.mubr.bf16.gmra.mrb[0].mxu0 %v3689
  %v4410 = vpop.f32.mrb[0].mxu0
  %v4411 = vadd.f32 %v4218, %v4410
  %v4412 = vpop.f32.mrb[0].mxu0
  %v4413 = vadd.f32 %v4220, %v4412
  %v4414 = vpop.f32.mrb[0].mxu0
  %v4415 = vadd.f32 %v4222, %v4414
  %v4416 = vpop.f32.mrb[0].mxu0
  %v4417 = vadd.f32 %v4224, %v4416
  %4418 = vmatprep.mubr.bf16.mxu0 %v3694
  %4419 = vmatmul.mubr.bf16.gmra.mrb[0].mxu0 %v3693
  %v4420 = vpop.f32.mrb[0].mxu0
  %v4421 = vadd.f32 %v4228, %v4420
  %v4422 = vpop.f32.mrb[0].mxu0
  %v4423 = vadd.f32 %v4230, %v4422
  %v4424 = vpop.f32.mrb[0].mxu0
  %v4425 = vadd.f32 %v4232, %v4424
  %v4426 = vpop.f32.mrb[0].mxu0
  %v4427 = vadd.f32 %v4234, %v4426
  %4428 = vmatprep.mubr.bf16.mxu0 %v3698
  %4429 = vmatmul.mubr.bf16.gmra.mrb[0].mxu0 %v3697
  %v4430 = vpop.f32.mrb[0].mxu0
  %v4431 = vadd.f32 %v4238, %v4430
  %v4432 = vpop.f32.mrb[0].mxu0
  %v4433 = vadd.f32 %v4240, %v4432
  %v4434 = vpop.f32.mrb[0].mxu0
  %v4435 = vadd.f32 %v4242, %v4434
  %v4436 = vpop.f32.mrb[0].mxu0
  %v4437 = vadd.f32 %v4244, %v4436
  %4438 = vmatprep.mubr.bf16.mxu0 %v3702
  %4439 = vmatmul.mubr.bf16.gmra.mrb[0].mxu0 %v3701
  %v4440 = vpop.f32.mrb[0].mxu0
  %v4441 = vadd.f32 %v4248, %v4440
  %v4442 = vpop.f32.mrb[0].mxu0
  %v4443 = vadd.f32 %v4250, %v4442
  %v4444 = vpop.f32.mrb[0].mxu0
  %v4445 = vadd.f32 %v4252, %v4444
  %v4446 = vpop.f32.mrb[0].mxu0
  %v4447 = vadd.f32 %v4254, %v4446
  %4448 = vmatprep.mubr.bf16.mxu0 %v3706
  %4449 = vmatmul.mubr.bf16.gmra.mrb[0].mxu0 %v3705
  %v4450 = vpop.f32.mrb[0].mxu0
  %v4451 = vadd.f32 %v4258, %v4450
  %v4452 = vpop.f32.mrb[0].mxu0
  %v4453 = vadd.f32 %v4260, %v4452
  %v4454 = vpop.f32.mrb[0].mxu0
  %v4455 = vadd.f32 %v4262, %v4454
  %v4456 = vpop.f32.mrb[0].mxu0
  %v4457 = vadd.f32 %v4264, %v4456
  %4458 = vmatprep.mubr.bf16.mxu0 %v3710
  %4459 = vmatmul.mubr.bf16.gmra.mrb[0].mxu0 %v3709
  %v4460 = vpop.f32.mrb[0].mxu0
  %v4461 = vadd.f32 %v4268, %v4460
  %v4462 = vpop.f32.mrb[0].mxu0
  %v4463 = vadd.f32 %v4270, %v4462
  %v4464 = vpop.f32.mrb[0].mxu0
  %v4465 = vadd.f32 %v4272, %v4464
  %v4466 = vpop.f32.mrb[0].mxu0
  %v4467 = vadd.f32 %v4274, %v4466
  %4468 = vmatprep.mubr.bf16.mxu0 %v3714
  %4469 = vmatmul.mubr.bf16.gmra.mrb[0].mxu0 %v3713
  %v4470 = vpop.f32.mrb[0].mxu0
  %v4471 = vadd.f32 %v4278, %v4470
  %v4472 = vpop.f32.mrb[0].mxu0
  %v4473 = vadd.f32 %v4280, %v4472
  %v4474 = vpop.f32.mrb[0].mxu0
  %v4475 = vadd.f32 %v4282, %v4474
  %v4476 = vpop.f32.mrb[0].mxu0
  %v4477 = vadd.f32 %v4284, %v4476
  %4478 = vmatprep.mubr.bf16.mxu0 %v3718
  %4479 = vmatmul.mubr.bf16.gmra.mrb[0].mxu0 %v3717
  %v4480 = vpop.f32.mrb[0].mxu0
  %v4481 = vadd.f32 %v4288, %v4480
  %v4482 = vpop.f32.mrb[0].mxu0
  %v4483 = vadd.f32 %v4290, %v4482
  %v4484 = vpop.f32.mrb[0].mxu0
  %v4485 = vadd.f32 %v4292, %v4484
  %v4486 = vpop.f32.mrb[0].mxu0
  %v4487 = vadd.f32 %v4294, %v4486
  %4488 = vmatprep.mubr.bf16.mxu0 %v3722
  %4489 = vmatmul.mubr.bf16.gmra.mrb[0].mxu0 %v3721
  %v4490 = vpop.f32.mrb[0].mxu0
  %v4491 = vadd.f32 %v4298, %v4490
  %v4492 = vpop.f32.mrb[0].mxu0
  %v4493 = vadd.f32 %v4300, %v4492
  %v4494 = vpop.f32.mrb[0].mxu0
  %v4495 = vadd.f32 %v4302, %v4494
  %v4496 = vpop.f32.mrb[0].mxu0
  %v4497 = vadd.f32 %v4304, %v4496
  %4498 = vmatprep.mubr.bf16.mxu0 %v3726
  %4499 = vmatmul.mubr.bf16.gmra.mrb[0].mxu0 %v3725
  %v4500 = vpop.f32.mrb[0].mxu0
  %v4501 = vadd.f32 %v4308, %v4500
  %v4502 = vpop.f32.mrb[0].mxu0
  %v4503 = vadd.f32 %v4310, %v4502
  %v4504 = vpop.f32.mrb[0].mxu0
  %v4505 = vadd.f32 %v4312, %v4504
  %v4506 = vpop.f32.mrb[0].mxu0
  %v4507 = vadd.f32 %v4314, %v4506
  %4508 = vdwg.mxu0
  %vm4509 = vcmp.gt.f32.partialorder %v4351, 0.0
  %vm4510 = vcmp.gt.f32.partialorder %v4353, 0.0
  %vm4511 = vcmp.gt.f32.partialorder %v4355, 0.0
  %vm4512 = vcmp.gt.f32.partialorder %v4357, 0.0
  %vm4513 = vcmp.gt.f32.partialorder %v4361, 0.0
  %vm4514 = vcmp.gt.f32.partialorder %v4363, 0.0
  %vm4515 = vcmp.gt.f32.partialorder %v4365, 0.0
  %vm4516 = vcmp.gt.f32.partialorder %v4367, 0.0
  %vm4517 = vcmp.gt.f32.partialorder %v4371, 0.0
  %vm4518 = vcmp.gt.f32.partialorder %v4373, 0.0
  %vm4519 = vcmp.gt.f32.partialorder %v4375, 0.0
  %vm4520 = vcmp.gt.f32.partialorder %v4377, 0.0
  %vm4521 = vcmp.gt.f32.partialorder %v4381, 0.0
  %vm4522 = vcmp.gt.f32.partialorder %v4383, 0.0
  %vm4523 = vcmp.gt.f32.partialorder %v4385, 0.0
  %vm4524 = vcmp.gt.f32.partialorder %v4387, 0.0
  %vm4525 = vcmp.gt.f32.partialorder %v4391, 0.0
  %vm4526 = vcmp.gt.f32.partialorder %v4393, 0.0
  %vm4527 = vcmp.gt.f32.partialorder %v4395, 0.0
  %vm4528 = vcmp.gt.f32.partialorder %v4397, 0.0
  %vm4529 = vcmp.gt.f32.partialorder %v4401, 0.0
  %vm4530 = vcmp.gt.f32.partialorder %v4403, 0.0
  %vm4531 = vcmp.gt.f32.partialorder %v4405, 0.0
  %vm4532 = vcmp.gt.f32.partialorder %v4407, 0.0
  %vm4533 = vcmp.gt.f32.partialorder %v4411, 0.0
  %vm4534 = vcmp.gt.f32.partialorder %v4413, 0.0
  %vm4535 = vcmp.gt.f32.partialorder %v4415, 0.0
  %vm4536 = vcmp.gt.f32.partialorder %v4417, 0.0
  %vm4537 = vcmp.gt.f32.partialorder %v4421, 0.0
  %vm4538 = vcmp.gt.f32.partialorder %v4423, 0.0
  %vm4539 = vcmp.gt.f32.partialorder %v4425, 0.0
  %vm4540 = vcmp.gt.f32.partialorder %v4427, 0.0
  %vm4541 = vcmp.gt.f32.partialorder %v4431, 0.0
  %vm4542 = vcmp.gt.f32.partialorder %v4433, 0.0
  %vm4543 = vcmp.gt.f32.partialorder %v4435, 0.0
  %vm4544 = vcmp.gt.f32.partialorder %v4437, 0.0
  %vm4545 = vcmp.gt.f32.partialorder %v4441, 0.0
  %vm4546 = vcmp.gt.f32.partialorder %v4443, 0.0
  %vm4547 = vcmp.gt.f32.partialorder %v4445, 0.0
  %vm4548 = vcmp.gt.f32.partialorder %v4447, 0.0
  %vm4549 = vcmp.gt.f32.partialorder %v4451, 0.0
  %vm4550 = vcmp.gt.f32.partialorder %v4453, 0.0
  %vm4551 = vcmp.gt.f32.partialorder %v4455, 0.0
  %vm4552 = vcmp.gt.f32.partialorder %v4457, 0.0
  %vm4553 = vcmp.gt.f32.partialorder %v4461, 0.0
  %vm4554 = vcmp.gt.f32.partialorder %v4463, 0.0
  %vm4555 = vcmp.gt.f32.partialorder %v4465, 0.0
  %vm4556 = vcmp.gt.f32.partialorder %v4467, 0.0
  %vm4557 = vcmp.gt.f32.partialorder %v4471, 0.0
  %vm4558 = vcmp.gt.f32.partialorder %v4473, 0.0
  %vm4559 = vcmp.gt.f32.partialorder %v4475, 0.0
  %vm4560 = vcmp.gt.f32.partialorder %v4477, 0.0
  %vm4561 = vcmp.gt.f32.partialorder %v4481, 0.0
  %vm4562 = vcmp.gt.f32.partialorder %v4483, 0.0
  %vm4563 = vcmp.gt.f32.partialorder %v4485, 0.0
  %vm4564 = vcmp.gt.f32.partialorder %v4487, 0.0
  %vm4565 = vcmp.gt.f32.partialorder %v4491, 0.0
  %vm4566 = vcmp.gt.f32.partialorder %v4493, 0.0
  %vm4567 = vcmp.gt.f32.partialorder %v4495, 0.0
  %vm4568 = vcmp.gt.f32.partialorder %v4497, 0.0
  %vm4569 = vcmp.gt.f32.partialorder %v4501, 0.0
  %vm4570 = vcmp.gt.f32.partialorder %v4503, 0.0
  %vm4571 = vcmp.gt.f32.partialorder %v4505, 0.0
  %vm4572 = vcmp.gt.f32.partialorder %v4507, 0.0
  %v4573 = vmul.f32 %v4351, 0.001
  %v4574 = vmul.f32 %v4353, 0.001
  %v4575 = vmul.f32 %v4355, 0.001
  %v4576 = vmul.f32 %v4357, 0.001
  %v4577 = vmul.f32 %v4361, 0.001
  %v4578 = vmul.f32 %v4363, 0.001
  %v4579 = vmul.f32 %v4365, 0.001
  %v4580 = vmul.f32 %v4367, 0.001
  %v4581 = vmul.f32 %v4371, 0.001
  %v4582 = vmul.f32 %v4373, 0.001
  %v4583 = vmul.f32 %v4375, 0.001
  %v4584 = vmul.f32 %v4377, 0.001
  %v4585 = vmul.f32 %v4381, 0.001
  %v4586 = vmul.f32 %v4383, 0.001
  %v4587 = vmul.f32 %v4385, 0.001
  %v4588 = vmul.f32 %v4387, 0.001
  %v4589 = vmul.f32 %v4391, 0.001
  %v4590 = vmul.f32 %v4393, 0.001
  %v4591 = vmul.f32 %v4395, 0.001
  %v4592 = vmul.f32 %v4397, 0.001
  %v4593 = vmul.f32 %v4401, 0.001
  %v4594 = vmul.f32 %v4403, 0.001
  %v4595 = vmul.f32 %v4405, 0.001
  %v4596 = vmul.f32 %v4407, 0.001
  %v4597 = vmul.f32 %v4411, 0.001
  %v4598 = vmul.f32 %v4413, 0.001
  %v4599 = vmul.f32 %v4415, 0.001
  %v4600 = vmul.f32 %v4417, 0.001
  %v4601 = vmul.f32 %v4421, 0.001
  %v4602 = vmul.f32 %v4423, 0.001
  %v4603 = vmul.f32 %v4425, 0.001
  %v4604 = vmul.f32 %v4427, 0.001
  %v4605 = vmul.f32 %v4431, 0.001
  %v4606 = vmul.f32 %v4433, 0.001
  %v4607 = vmul.f32 %v4435, 0.001
  %v4608 = vmul.f32 %v4437, 0.001
  %v4609 = vmul.f32 %v4441, 0.001
  %v4610 = vmul.f32 %v4443, 0.001
  %v4611 = vmul.f32 %v4445, 0.001
  %v4612 = vmul.f32 %v4447, 0.001
  %v4613 = vmul.f32 %v4451, 0.001
  %v4614 = vmul.f32 %v4453, 0.001
  %v4615 = vmul.f32 %v4455, 0.001
  %v4616 = vmul.f32 %v4457, 0.001
  %v4617 = vmul.f32 %v4461, 0.001
  %v4618 = vmul.f32 %v4463, 0.001
  %v4619 = vmul.f32 %v4465, 0.001
  %v4620 = vmul.f32 %v4467, 0.001
  %v4621 = vmul.f32 %v4471, 0.001
  %v4622 = vmul.f32 %v4473, 0.001
  %v4623 = vmul.f32 %v4475, 0.001
  %v4624 = vmul.f32 %v4477, 0.001
  %v4625 = vmul.f32 %v4481, 0.001
  %v4626 = vmul.f32 %v4483, 0.001
  %v4627 = vmul.f32 %v4485, 0.001
  %v4628 = vmul.f32 %v4487, 0.001
  %v4629 = vmul.f32 %v4491, 0.001
  %v4630 = vmul.f32 %v4493, 0.001
  %v4631 = vmul.f32 %v4495, 0.001
  %v4632 = vmul.f32 %v4497, 0.001
  %v4633 = vmul.f32 %v4501, 0.001
  %v4634 = vmul.f32 %v4503, 0.001
  %v4635 = vmul.f32 %v4505, 0.001
  %v4636 = vmul.f32 %v4507, 0.001
  %v4637 = vsel %vm4509, %v4351, %v4573
  %v4638 = vsel %vm4510, %v4353, %v4574
  %v4639 = vsel %vm4511, %v4355, %v4575
  %v4640 = vsel %vm4512, %v4357, %v4576
  %v4641 = vsel %vm4513, %v4361, %v4577
  %v4642 = vsel %vm4514, %v4363, %v4578
  %v4643 = vsel %vm4515, %v4365, %v4579
  %v4644 = vsel %vm4516, %v4367, %v4580
  %v4645 = vsel %vm4517, %v4371, %v4581
  %v4646 = vsel %vm4518, %v4373, %v4582
  %v4647 = vsel %vm4519, %v4375, %v4583
  %v4648 = vsel %vm4520, %v4377, %v4584
  %v4649 = vsel %vm4521, %v4381, %v4585
  %v4650 = vsel %vm4522, %v4383, %v4586
  %v4651 = vsel %vm4523, %v4385, %v4587
  %v4652 = vsel %vm4524, %v4387, %v4588
  %v4653 = vsel %vm4525, %v4391, %v4589
  %v4654 = vsel %vm4526, %v4393, %v4590
  %v4655 = vsel %vm4527, %v4395, %v4591
  %v4656 = vsel %vm4528, %v4397, %v4592
  %v4657 = vsel %vm4529, %v4401, %v4593
  %v4658 = vsel %vm4530, %v4403, %v4594
  %v4659 = vsel %vm4531, %v4405, %v4595
  %v4660 = vsel %vm4532, %v4407, %v4596
  %v4661 = vsel %vm4533, %v4411, %v4597
  %v4662 = vsel %vm4534, %v4413, %v4598
  %v4663 = vsel %vm4535, %v4415, %v4599
  %v4664 = vsel %vm4536, %v4417, %v4600
  %v4665 = vsel %vm4537, %v4421, %v4601
  %v4666 = vsel %vm4538, %v4423, %v4602
  %v4667 = vsel %vm4539, %v4425, %v4603
  %v4668 = vsel %vm4540, %v4427, %v4604
  %v4669 = vsel %vm4541, %v4431, %v4605
  %v4670 = vsel %vm4542, %v4433, %v4606
  %v4671 = vsel %vm4543, %v4435, %v4607
  %v4672 = vsel %vm4544, %v4437, %v4608
  %v4673 = vsel %vm4545, %v4441, %v4609
  %v4674 = vsel %vm4546, %v4443, %v4610
  %v4675 = vsel %vm4547, %v4445, %v4611
  %v4676 = vsel %vm4548, %v4447, %v4612
  %v4677 = vsel %vm4549, %v4451, %v4613
  %v4678 = vsel %vm4550, %v4453, %v4614
  %v4679 = vsel %vm4551, %v4455, %v4615
  %v4680 = vsel %vm4552, %v4457, %v4616
  %v4681 = vsel %vm4553, %v4461, %v4617
  %v4682 = vsel %vm4554, %v4463, %v4618
  %v4683 = vsel %vm4555, %v4465, %v4619
  %v4684 = vsel %vm4556, %v4467, %v4620
  %v4685 = vsel %vm4557, %v4471, %v4621
  %v4686 = vsel %vm4558, %v4473, %v4622
  %v4687 = vsel %vm4559, %v4475, %v4623
  %v4688 = vsel %vm4560, %v4477, %v4624
  %v4689 = vsel %vm4561, %v4481, %v4625
  %v4690 = vsel %vm4562, %v4483, %v4626
  %v4691 = vsel %vm4563, %v4485, %v4627
  %v4692 = vsel %vm4564, %v4487, %v4628
  %v4693 = vsel %vm4565, %v4491, %v4629
  %v4694 = vsel %vm4566, %v4493, %v4630
  %v4695 = vsel %vm4567, %v4495, %v4631
  %v4696 = vsel %vm4568, %v4497, %v4632
  %v4697 = vsel %vm4569, %v4501, %v4633
  %v4698 = vsel %vm4570, %v4503, %v4634
  %v4699 = vsel %vm4571, %v4505, %v4635
  %v4700 = vsel %vm4572, %v4507, %v4636
  %v4701 = vpack.c.bf16 %v4639, %v4637
  %v4702 = vpack.c.bf16 %v4640, %v4638
  %v4703 = vpack.c.bf16 %v4643, %v4641
  %v4704 = vpack.c.bf16 %v4644, %v4642
  %v4705 = vpack.c.bf16 %v4647, %v4645
  %v4706 = vpack.c.bf16 %v4648, %v4646
  %v4707 = vpack.c.bf16 %v4651, %v4649
  %v4708 = vpack.c.bf16 %v4652, %v4650
  %v4709 = vpack.c.bf16 %v4655, %v4653
  %v4710 = vpack.c.bf16 %v4656, %v4654
  %v4711 = vpack.c.bf16 %v4659, %v4657
  %v4712 = vpack.c.bf16 %v4660, %v4658
  %v4713 = vpack.c.bf16 %v4663, %v4661
  %v4714 = vpack.c.bf16 %v4664, %v4662
  %v4715 = vpack.c.bf16 %v4667, %v4665
  %v4716 = vpack.c.bf16 %v4668, %v4666
  %v4717 = vpack.c.bf16 %v4671, %v4669
  %v4718 = vpack.c.bf16 %v4672, %v4670
  %v4719 = vpack.c.bf16 %v4675, %v4673
  %v4720 = vpack.c.bf16 %v4676, %v4674
  %v4721 = vpack.c.bf16 %v4679, %v4677
  %v4722 = vpack.c.bf16 %v4680, %v4678
  %v4723 = vpack.c.bf16 %v4683, %v4681
  %v4724 = vpack.c.bf16 %v4684, %v4682
  %v4725 = vpack.c.bf16 %v4687, %v4685
  %v4726 = vpack.c.bf16 %v4688, %v4686
  %v4727 = vpack.c.bf16 %v4691, %v4689
  %v4728 = vpack.c.bf16 %v4692, %v4690
  %v4729 = vpack.c.bf16 %v4695, %v4693
  %v4730 = vpack.c.bf16 %v4696, %v4694
  %v4731 = vpack.c.bf16 %v4699, %v4697
  %v4732 = vpack.c.bf16 %v4700, %v4698
  %v4733 = vld [vmem:[%s5] sm:$0xf]
  %v4734 = vld [vmem:[%s5 + $0x4] sm:$0xf]
  %v4735 = vld [vmem:[%s5 + $0x8] sm:$0xf]
  %v4736 = vld [vmem:[%s5 + $0xc] sm:$0xf]
  %v4737 = vld [vmem:[%s5 + $0x10] sm:$0xf]
  %v4738 = vld [vmem:[%s5 + $0x14] sm:$0xf]
  %v4739 = vld [vmem:[%s5 + $0x18] sm:$0xf]
  %v4740 = vld [vmem:[%s5 + $0x1c] sm:$0xf]
  %v4741 = vld [vmem:[%s5 + $0x20] sm:$0xf]
  %v4742 = vld [vmem:[%s5 + $0x24] sm:$0xf]
  %v4743 = vld [vmem:[%s5 + $0x28] sm:$0xf]
  %v4744 = vld [vmem:[%s5 + $0x2c] sm:$0xf]
  %v4745 = vld [vmem:[%s5 + $0x30] sm:$0xf]
  %v4746 = vld [vmem:[%s5 + $0x34] sm:$0xf]
  %v4747 = vld [vmem:[%s5 + $0x38] sm:$0xf]
  %v4748 = vld [vmem:[%s5 + $0x3c] sm:$0xf]
  %v4749 = vld [vmem:[%s5 + $0x40] sm:$0xf]
  %v4750 = vld [vmem:[%s5 + $0x44] sm:$0xf]
  %v4751 = vld [vmem:[%s5 + $0x48] sm:$0xf]
  %v4752 = vld [vmem:[%s5 + $0x4c] sm:$0xf]
  %v4753 = vld [vmem:[%s5 + $0x50] sm:$0xf]
  %v4754 = vld [vmem:[%s5 + $0x54] sm:$0xf]
  %v4755 = vld [vmem:[%s5 + $0x58] sm:$0xf]
  %v4756 = vld [vmem:[%s5 + $0x5c] sm:$0xf]
  %v4757 = vld [vmem:[%s5 + $0x60] sm:$0xf]
  %v4758 = vld [vmem:[%s5 + $0x64] sm:$0xf]
  %v4759 = vld [vmem:[%s5 + $0x68] sm:$0xf]
  %v4760 = vld [vmem:[%s5 + $0x6c] sm:$0xf]
  %v4761 = vld [vmem:[%s5 + $0x70] sm:$0xf]
  %v4762 = vld [vmem:[%s5 + $0x74] sm:$0xf]
  %v4763 = vld [vmem:[%s5 + $0x78] sm:$0xf]
  %v4764 = vld [vmem:[%s5 + $0x7c] sm:$0xf]
  %v4765 = vld [vmem:[%s6] sm:$0x1]
  %v4767 = vlaneseq
  %v4768 = vshrl.u32 %v4767, 7
  %v4769 = vsub.s32 0, %v4768
  %v4770 = vrot.slane %v4765, %v4769
  %v4804 = vunpack.c.l.b16 %v4733
  %v4805 = vunpack.c.l.b16 %v4734
  %v4806 = vunpack.c.l.b16 %v4735
  %v4807 = vunpack.c.l.b16 %v4736
  %v4808 = vunpack.c.l.b16 %v4737
  %v4809 = vunpack.c.l.b16 %v4738
  %v4810 = vunpack.c.l.b16 %v4739
  %v4811 = vunpack.c.l.b16 %v4740
  %v4812 = vunpack.c.l.b16 %v4741
  %v4813 = vunpack.c.l.b16 %v4742
  %v4814 = vunpack.c.l.b16 %v4743
  %v4815 = vunpack.c.l.b16 %v4744
  %v4816 = vunpack.c.l.b16 %v4745
  %v4817 = vunpack.c.l.b16 %v4746
  %v4818 = vunpack.c.l.b16 %v4747
  %v4819 = vunpack.c.l.b16 %v4748
  %v4820 = vunpack.c.l.b16 %v4749
  %v4821 = vunpack.c.l.b16 %v4750
  %v4822 = vunpack.c.l.b16 %v4751
  %v4823 = vunpack.c.l.b16 %v4752
  %v4824 = vunpack.c.l.b16 %v4753
  %v4825 = vunpack.c.l.b16 %v4754
  %v4826 = vunpack.c.l.b16 %v4755
  %v4827 = vunpack.c.l.b16 %v4756
  %v4828 = vunpack.c.l.b16 %v4757
  %v4829 = vunpack.c.l.b16 %v4758
  %v4830 = vunpack.c.l.b16 %v4759
  %v4831 = vunpack.c.l.b16 %v4760
  %v4832 = vunpack.c.l.b16 %v4761
  %v4833 = vunpack.c.l.b16 %v4762
  %v4834 = vunpack.c.l.b16 %v4763
  %v4835 = vunpack.c.l.b16 %v4764
  %v4836 = vpack.c.b16 %v4805, %v4804
  %v4837 = vpack.c.b16 %v4807, %v4806
  %v4838 = vpack.c.b16 %v4809, %v4808
  %v4839 = vpack.c.b16 %v4811, %v4810
  %v4840 = vpack.c.b16 %v4813, %v4812
  %v4841 = vpack.c.b16 %v4815, %v4814
  %v4842 = vpack.c.b16 %v4817, %v4816
  %v4843 = vpack.c.b16 %v4819, %v4818
  %v4844 = vpack.c.b16 %v4821, %v4820
  %v4845 = vpack.c.b16 %v4823, %v4822
  %v4846 = vpack.c.b16 %v4825, %v4824
  %v4847 = vpack.c.b16 %v4827, %v4826
  %v4848 = vpack.c.b16 %v4829, %v4828
  %v4849 = vpack.c.b16 %v4831, %v4830
  %v4850 = vpack.c.b16 %v4833, %v4832
  %v4851 = vpack.c.b16 %v4835, %v4834
  %4868 = vmatprep.subr.bf16.mxu0 0
  %4869 = vmatpush1.bf16.msra.mxu0 %v4836
  %4870 = vmatprep.subr.bf16.mxu0 0
  %4871 = vmatpush1.bf16.msra.mxu0 %v4837
  %4872 = vmatprep.subr.bf16.mxu0 0
  %4873 = vmatpush1.bf16.msra.mxu0 %v4838
  %4874 = vmatprep.subr.bf16.mxu0 0
  %4875 = vmatpush1.bf16.msra.mxu0 %v4839
  %4876 = vmatprep.subr.bf16.mxu0 0
  %4877 = vmatpush1.bf16.msra.mxu0 %v4840
  %4878 = vmatprep.subr.bf16.mxu0 0
  %4879 = vmatpush1.bf16.msra.mxu0 %v4841
  %4880 = vmatprep.subr.bf16.mxu0 0
  %4881 = vmatpush1.bf16.msra.mxu0 %v4842
  %4882 = vmatprep.subr.bf16.mxu0 0
  %4883 = vmatpush1.bf16.msra.mxu0 %v4843
  %4884 = vmatprep.subr.bf16.mxu0 0
  %4885 = vmatpush1.bf16.msra.mxu0 %v4844
  %4886 = vmatprep.subr.bf16.mxu0 0
  %4887 = vmatpush1.bf16.msra.mxu0 %v4845
  %4888 = vmatprep.subr.bf16.mxu0 0
  %4889 = vmatpush1.bf16.msra.mxu0 %v4846
  %4890 = vmatprep.subr.bf16.mxu0 0
  %4891 = vmatpush1.bf16.msra.mxu0 %v4847
  %4892 = vmatprep.subr.bf16.mxu0 0
  %4893 = vmatpush1.bf16.msra.mxu0 %v4848
  %4894 = vmatprep.subr.bf16.mxu0 0
  %4895 = vmatpush1.bf16.msra.mxu0 %v4849
  %4896 = vmatprep.subr.bf16.mxu0 0
  %4897 = vmatpush1.bf16.msra.mxu0 %v4850
  %4898 = vmatprep.subr.bf16.mxu0 0
  %4899 = vmatpush1.bf16.msra.mxu0 %v4851
  %4900 = vmatprep.mubr.bf16.mxu0 %v4702
  %4901 = vmatmul.mubr.bf16.gmra.mrb[0].mxu0 %v4701
  %v4902 = vpop.f32.mrb[0].mxu0
  %v4903 = vadd.f32 %v4770, %v4902
  %v4904 = vpop.f32.mrb[0].mxu0
  %v4905 = vpop.f32.mrb[0].mxu0
  %v4906 = vadd.f32 %v4770, %v4905
  %v4907 = vpop.f32.mrb[0].mxu0
  %4908 = vmatprep.mubr.bf16.mxu0 %v4704
  %4909 = vmatmul.mubr.bf16.gmra.mrb[0].mxu0 %v4703
  %v4910 = vpop.f32.mrb[0].mxu0
  %v4911 = vadd.f32 %v4770, %v4910
  %v4912 = vpop.f32.mrb[0].mxu0
  %v4913 = vpop.f32.mrb[0].mxu0
  %v4914 = vadd.f32 %v4770, %v4913
  %v4915 = vpop.f32.mrb[0].mxu0
  %4916 = vmatprep.mubr.bf16.mxu0 %v4706
  %4917 = vmatmul.mubr.bf16.gmra.mrb[0].mxu0 %v4705
  %v4918 = vpop.f32.mrb[0].mxu0
  %v4919 = vadd.f32 %v4770, %v4918
  %v4920 = vpop.f32.mrb[0].mxu0
  %v4921 = vpop.f32.mrb[0].mxu0
  %v4922 = vadd.f32 %v4770, %v4921
  %v4923 = vpop.f32.mrb[0].mxu0
  %4924 = vmatprep.mubr.bf16.mxu0 %v4708
  %4925 = vmatmul.mubr.bf16.gmra.mrb[0].mxu0 %v4707
  %v4926 = vpop.f32.mrb[0].mxu0
  %v4927 = vadd.f32 %v4770, %v4926
  %v4928 = vpop.f32.mrb[0].mxu0
  %v4929 = vpop.f32.mrb[0].mxu0
  %v4930 = vadd.f32 %v4770, %v4929
  %v4931 = vpop.f32.mrb[0].mxu0
  %4932 = vmatprep.mubr.bf16.mxu0 %v4710
  %4933 = vmatmul.mubr.bf16.gmra.mrb[0].mxu0 %v4709
  %v4934 = vpop.f32.mrb[0].mxu0
  %v4935 = vadd.f32 %v4770, %v4934
  %v4936 = vpop.f32.mrb[0].mxu0
  %v4937 = vpop.f32.mrb[0].mxu0
  %v4938 = vadd.f32 %v4770, %v4937
  %v4939 = vpop.f32.mrb[0].mxu0
  %4940 = vmatprep.mubr.bf16.mxu0 %v4712
  %4941 = vmatmul.mubr.bf16.gmra.mrb[0].mxu0 %v4711
  %v4942 = vpop.f32.mrb[0].mxu0
  %v4943 = vadd.f32 %v4770, %v4942
  %v4944 = vpop.f32.mrb[0].mxu0
  %v4945 = vpop.f32.mrb[0].mxu0
  %v4946 = vadd.f32 %v4770, %v4945
  %v4947 = vpop.f32.mrb[0].mxu0
  %4948 = vmatprep.mubr.bf16.mxu0 %v4714
  %4949 = vmatmul.mubr.bf16.gmra.mrb[0].mxu0 %v4713
  %v4950 = vpop.f32.mrb[0].mxu0
  %v4951 = vadd.f32 %v4770, %v4950
  %v4952 = vpop.f32.mrb[0].mxu0
  %v4953 = vpop.f32.mrb[0].mxu0
  %v4954 = vadd.f32 %v4770, %v4953
  %v4955 = vpop.f32.mrb[0].mxu0
  %4956 = vmatprep.mubr.bf16.mxu0 %v4716
  %4957 = vmatmul.mubr.bf16.gmra.mrb[0].mxu0 %v4715
  %v4958 = vpop.f32.mrb[0].mxu0
  %v4959 = vadd.f32 %v4770, %v4958
  %v4960 = vpop.f32.mrb[0].mxu0
  %v4961 = vpop.f32.mrb[0].mxu0
  %v4962 = vadd.f32 %v4770, %v4961
  %v4963 = vpop.f32.mrb[0].mxu0
  %4964 = vmatprep.mubr.bf16.mxu0 %v4718
  %4965 = vmatmul.mubr.bf16.gmra.mrb[0].mxu0 %v4717
  %v4966 = vpop.f32.mrb[0].mxu0
  %v4967 = vadd.f32 %v4770, %v4966
  %v4968 = vpop.f32.mrb[0].mxu0
  %v4969 = vpop.f32.mrb[0].mxu0
  %v4970 = vadd.f32 %v4770, %v4969
  %v4971 = vpop.f32.mrb[0].mxu0
  %4972 = vmatprep.mubr.bf16.mxu0 %v4720
  %4973 = vmatmul.mubr.bf16.gmra.mrb[0].mxu0 %v4719
  %v4974 = vpop.f32.mrb[0].mxu0
  %v4975 = vadd.f32 %v4770, %v4974
  %v4976 = vpop.f32.mrb[0].mxu0
  %v4977 = vpop.f32.mrb[0].mxu0
  %v4978 = vadd.f32 %v4770, %v4977
  %v4979 = vpop.f32.mrb[0].mxu0
  %4980 = vmatprep.mubr.bf16.mxu0 %v4722
  %4981 = vmatmul.mubr.bf16.gmra.mrb[0].mxu0 %v4721
  %v4982 = vpop.f32.mrb[0].mxu0
  %v4983 = vadd.f32 %v4770, %v4982
  %v4984 = vpop.f32.mrb[0].mxu0
  %v4985 = vpop.f32.mrb[0].mxu0
  %v4986 = vadd.f32 %v4770, %v4985
  %v4987 = vpop.f32.mrb[0].mxu0
  %4988 = vmatprep.mubr.bf16.mxu0 %v4724
  %4989 = vmatmul.mubr.bf16.gmra.mrb[0].mxu0 %v4723
  %v4990 = vpop.f32.mrb[0].mxu0
  %v4991 = vadd.f32 %v4770, %v4990
  %v4992 = vpop.f32.mrb[0].mxu0
  %v4993 = vpop.f32.mrb[0].mxu0
  %v4994 = vadd.f32 %v4770, %v4993
  %v4995 = vpop.f32.mrb[0].mxu0
  %4996 = vmatprep.mubr.bf16.mxu0 %v4726
  %4997 = vmatmul.mubr.bf16.gmra.mrb[0].mxu0 %v4725
  %v4998 = vpop.f32.mrb[0].mxu0
  %v4999 = vadd.f32 %v4770, %v4998
  %v5000 = vpop.f32.mrb[0].mxu0
  %v5001 = vpop.f32.mrb[0].mxu0
  %v5002 = vadd.f32 %v4770, %v5001
  %v5003 = vpop.f32.mrb[0].mxu0
  %5004 = vmatprep.mubr.bf16.mxu0 %v4728
  %5005 = vmatmul.mubr.bf16.gmra.mrb[0].mxu0 %v4727
  %v5006 = vpop.f32.mrb[0].mxu0
  %v5007 = vadd.f32 %v4770, %v5006
  %v5008 = vpop.f32.mrb[0].mxu0
  %v5009 = vpop.f32.mrb[0].mxu0
  %v5010 = vadd.f32 %v4770, %v5009
  %v5011 = vpop.f32.mrb[0].mxu0
  %5012 = vmatprep.mubr.bf16.mxu0 %v4730
  %5013 = vmatmul.mubr.bf16.gmra.mrb[0].mxu0 %v4729
  %v5014 = vpop.f32.mrb[0].mxu0
  %v5015 = vadd.f32 %v4770, %v5014
  %v5016 = vpop.f32.mrb[0].mxu0
  %v5017 = vpop.f32.mrb[0].mxu0
  %v5018 = vadd.f32 %v4770, %v5017
  %v5019 = vpop.f32.mrb[0].mxu0
  %5020 = vmatprep.mubr.bf16.mxu0 %v4732
  %5021 = vmatmul.mubr.bf16.gmra.mrb[0].mxu0 %v4731
  %v5022 = vpop.f32.mrb[0].mxu0
  %v5023 = vadd.f32 %v4770, %v5022
  %v5024 = vpop.f32.mrb[0].mxu0
  %v5025 = vpop.f32.mrb[0].mxu0
  %v5026 = vadd.f32 %v4770, %v5025
  %v5027 = vpop.f32.mrb[0].mxu0
  %5028 = vdwg.mxu0
  %vm5029 = vcmp.gt.f32.partialorder %v4903, 0.0
  %vm5030 = vcmp.gt.f32.partialorder %v4906, 0.0
  %vm5031 = vcmp.gt.f32.partialorder %v4911, 0.0
  %vm5032 = vcmp.gt.f32.partialorder %v4914, 0.0
  %vm5033 = vcmp.gt.f32.partialorder %v4919, 0.0
  %vm5034 = vcmp.gt.f32.partialorder %v4922, 0.0
  %vm5035 = vcmp.gt.f32.partialorder %v4927, 0.0
  %vm5036 = vcmp.gt.f32.partialorder %v4930, 0.0
  %vm5037 = vcmp.gt.f32.partialorder %v4935, 0.0
  %vm5038 = vcmp.gt.f32.partialorder %v4938, 0.0
  %vm5039 = vcmp.gt.f32.partialorder %v4943, 0.0
  %vm5040 = vcmp.gt.f32.partialorder %v4946, 0.0
  %vm5041 = vcmp.gt.f32.partialorder %v4951, 0.0
  %vm5042 = vcmp.gt.f32.partialorder %v4954, 0.0
  %vm5043 = vcmp.gt.f32.partialorder %v4959, 0.0
  %vm5044 = vcmp.gt.f32.partialorder %v4962, 0.0
  %vm5045 = vcmp.gt.f32.partialorder %v4967, 0.0
  %vm5046 = vcmp.gt.f32.partialorder %v4970, 0.0
  %vm5047 = vcmp.gt.f32.partialorder %v4975, 0.0
  %vm5048 = vcmp.gt.f32.partialorder %v4978, 0.0
  %vm5049 = vcmp.gt.f32.partialorder %v4983, 0.0
  %vm5050 = vcmp.gt.f32.partialorder %v4986, 0.0
  %vm5051 = vcmp.gt.f32.partialorder %v4991, 0.0
  %vm5052 = vcmp.gt.f32.partialorder %v4994, 0.0
  %vm5053 = vcmp.gt.f32.partialorder %v4999, 0.0
  %vm5054 = vcmp.gt.f32.partialorder %v5002, 0.0
  %vm5055 = vcmp.gt.f32.partialorder %v5007, 0.0
  %vm5056 = vcmp.gt.f32.partialorder %v5010, 0.0
  %vm5057 = vcmp.gt.f32.partialorder %v5015, 0.0
  %vm5058 = vcmp.gt.f32.partialorder %v5018, 0.0
  %vm5059 = vcmp.gt.f32.partialorder %v5023, 0.0
  %vm5060 = vcmp.gt.f32.partialorder %v5026, 0.0
  %v5061 = vmul.f32 %v4903, 0.001
  %v5062 = vmul.f32 %v4906, 0.001
  %v5063 = vmul.f32 %v4911, 0.001
  %v5064 = vmul.f32 %v4914, 0.001
  %v5065 = vmul.f32 %v4919, 0.001
  %v5066 = vmul.f32 %v4922, 0.001
  %v5067 = vmul.f32 %v4927, 0.001
  %v5068 = vmul.f32 %v4930, 0.001
  %v5069 = vmul.f32 %v4935, 0.001
  %v5070 = vmul.f32 %v4938, 0.001
  %v5071 = vmul.f32 %v4943, 0.001
  %v5072 = vmul.f32 %v4946, 0.001
  %v5073 = vmul.f32 %v4951, 0.001
  %v5074 = vmul.f32 %v4954, 0.001
  %v5075 = vmul.f32 %v4959, 0.001
  %v5076 = vmul.f32 %v4962, 0.001
  %v5077 = vmul.f32 %v4967, 0.001
  %v5078 = vmul.f32 %v4970, 0.001
  %v5079 = vmul.f32 %v4975, 0.001
  %v5080 = vmul.f32 %v4978, 0.001
  %v5081 = vmul.f32 %v4983, 0.001
  %v5082 = vmul.f32 %v4986, 0.001
  %v5083 = vmul.f32 %v4991, 0.001
  %v5084 = vmul.f32 %v4994, 0.001
  %v5085 = vmul.f32 %v4999, 0.001
  %v5086 = vmul.f32 %v5002, 0.001
  %v5087 = vmul.f32 %v5007, 0.001
  %v5088 = vmul.f32 %v5010, 0.001
  %v5089 = vmul.f32 %v5015, 0.001
  %v5090 = vmul.f32 %v5018, 0.001
  %v5091 = vmul.f32 %v5023, 0.001
  %v5092 = vmul.f32 %v5026, 0.001
  %v5093 = vsel %vm5029, %v4903, %v5061
  %v5094 = vsel %vm5030, %v4906, %v5062
  %v5095 = vsel %vm5031, %v4911, %v5063
  %v5096 = vsel %vm5032, %v4914, %v5064
  %v5097 = vsel %vm5033, %v4919, %v5065
  %v5098 = vsel %vm5034, %v4922, %v5066
  %v5099 = vsel %vm5035, %v4927, %v5067
  %v5100 = vsel %vm5036, %v4930, %v5068
  %v5101 = vsel %vm5037, %v4935, %v5069
  %v5102 = vsel %vm5038, %v4938, %v5070
  %v5103 = vsel %vm5039, %v4943, %v5071
  %v5104 = vsel %vm5040, %v4946, %v5072
  %v5105 = vsel %vm5041, %v4951, %v5073
  %v5106 = vsel %vm5042, %v4954, %v5074
  %v5107 = vsel %vm5043, %v4959, %v5075
  %v5108 = vsel %vm5044, %v4962, %v5076
  %v5109 = vsel %vm5045, %v4967, %v5077
  %v5110 = vsel %vm5046, %v4970, %v5078
  %v5111 = vsel %vm5047, %v4975, %v5079
  %v5112 = vsel %vm5048, %v4978, %v5080
  %v5113 = vsel %vm5049, %v4983, %v5081
  %v5114 = vsel %vm5050, %v4986, %v5082
  %v5115 = vsel %vm5051, %v4991, %v5083
  %v5116 = vsel %vm5052, %v4994, %v5084
  %v5117 = vsel %vm5053, %v4999, %v5085
  %v5118 = vsel %vm5054, %v5002, %v5086
  %v5119 = vsel %vm5055, %v5007, %v5087
  %v5120 = vsel %vm5056, %v5010, %v5088
  %v5121 = vsel %vm5057, %v5015, %v5089
  %v5122 = vsel %vm5058, %v5018, %v5090
  %v5123 = vsel %vm5059, %v5023, %v5091
  %v5124 = vsel %vm5060, %v5026, %v5092
  %v5125 = vpack.c.bf16 %v5094, %v5093
  %v5126 = vpack.c.bf16 %v5096, %v5095
  %v5127 = vpack.c.bf16 %v5098, %v5097
  %v5128 = vpack.c.bf16 %v5100, %v5099
  %v5129 = vpack.c.bf16 %v5102, %v5101
  %v5130 = vpack.c.bf16 %v5104, %v5103
  %v5131 = vpack.c.bf16 %v5106, %v5105
  %v5132 = vpack.c.bf16 %v5108, %v5107
  %v5133 = vpack.c.bf16 %v5110, %v5109
  %v5134 = vpack.c.bf16 %v5112, %v5111
  %v5135 = vpack.c.bf16 %v5114, %v5113
  %v5136 = vpack.c.bf16 %v5116, %v5115
  %v5137 = vpack.c.bf16 %v5118, %v5117
  %v5138 = vpack.c.bf16 %v5120, %v5119
  %v5139 = vpack.c.bf16 %v5122, %v5121
  %v5140 = vpack.c.bf16 %v5124, %v5123
  %v5141 = vld [vmem:[%s7] sm:$0xf]
  %v5142 = vld [vmem:[%s7 + $0x4] sm:$0xf]
  %v5143 = vld [vmem:[%s7 + $0x8] sm:$0xf]
  %v5144 = vld [vmem:[%s7 + $0xc] sm:$0xf]
  %v5145 = vld [vmem:[%s7 + $0x10] sm:$0xf]
  %v5146 = vld [vmem:[%s7 + $0x14] sm:$0xf]
  %v5147 = vld [vmem:[%s7 + $0x18] sm:$0xf]
  %v5148 = vld [vmem:[%s7 + $0x1c] sm:$0xf]
  %v5149 = vld [vmem:[%s7 + $0x20] sm:$0xf]
  %v5150 = vld [vmem:[%s7 + $0x24] sm:$0xf]
  %v5151 = vld [vmem:[%s7 + $0x28] sm:$0xf]
  %v5152 = vld [vmem:[%s7 + $0x2c] sm:$0xf]
  %v5153 = vld [vmem:[%s7 + $0x30] sm:$0xf]
  %v5154 = vld [vmem:[%s7 + $0x34] sm:$0xf]
  %v5155 = vld [vmem:[%s7 + $0x38] sm:$0xf]
  %v5156 = vld [vmem:[%s7 + $0x3c] sm:$0xf]
  %v5157 = vld [vmem:[%s8] sm:$0x1]
  %v5159 = vlaneseq
  %v5160 = vshrl.u32 %v5159, 7
  %v5161 = vsub.s32 0, %v5160
  %v5162 = vrot.slane %v5157, %v5161
  %v5180 = vunpack.c.l.b16 %v5141
  %v5181 = vunpack.c.l.b16 %v5142
  %v5182 = vunpack.c.l.b16 %v5143
  %v5183 = vunpack.c.l.b16 %v5144
  %v5184 = vunpack.c.l.b16 %v5145
  %v5185 = vunpack.c.l.b16 %v5146
  %v5186 = vunpack.c.l.b16 %v5147
  %v5187 = vunpack.c.l.b16 %v5148
  %v5188 = vunpack.c.l.b16 %v5149
  %v5189 = vunpack.c.l.b16 %v5150
  %v5190 = vunpack.c.l.b16 %v5151
  %v5191 = vunpack.c.l.b16 %v5152
  %v5192 = vunpack.c.l.b16 %v5153
  %v5193 = vunpack.c.l.b16 %v5154
  %v5194 = vunpack.c.l.b16 %v5155
  %v5195 = vunpack.c.l.b16 %v5156
  %v5196 = vpack.c.b16 %v5181, %v5180
  %v5197 = vpack.c.b16 %v5183, %v5182
  %v5198 = vpack.c.b16 %v5185, %v5184
  %v5199 = vpack.c.b16 %v5187, %v5186
  %v5200 = vpack.c.b16 %v5189, %v5188
  %v5201 = vpack.c.b16 %v5191, %v5190
  %v5202 = vpack.c.b16 %v5193, %v5192
  %v5203 = vpack.c.b16 %v5195, %v5194
  %5212 = vmatprep.subr.bf16.mxu0 0
  %5213 = vmatpush1.bf16.msra.mxu0 %v5196
  %5214 = vmatprep.subr.bf16.mxu0 0
  %5215 = vmatpush1.bf16.msra.mxu0 %v5197
  %5216 = vmatprep.subr.bf16.mxu0 0
  %5217 = vmatpush1.bf16.msra.mxu0 %v5198
  %5218 = vmatprep.subr.bf16.mxu0 0
  %5219 = vmatpush1.bf16.msra.mxu0 %v5199
  %5220 = vmatprep.subr.bf16.mxu0 0
  %5221 = vmatpush1.bf16.msra.mxu0 %v5200
  %5222 = vmatprep.subr.bf16.mxu0 0
  %5223 = vmatpush1.bf16.msra.mxu0 %v5201
  %5224 = vmatprep.subr.bf16.mxu0 0
  %5225 = vmatpush1.bf16.msra.mxu0 %v5202
  %5226 = vmatprep.subr.bf16.mxu0 0
  %5227 = vmatpush1.bf16.msra.mxu0 %v5203
  %5228 = vmatprep.subr.bf16.mxu0 0
  %5229 = vmatpush1.bf16.msra.mxu0 0
  %5230 = vmatprep.subr.bf16.mxu0 0
  %5231 = vmatpush1.bf16.msra.mxu0 0
  %5232 = vmatprep.subr.bf16.mxu0 0
  %5233 = vmatpush1.bf16.msra.mxu0 0
  %5234 = vmatprep.subr.bf16.mxu0 0
  %5235 = vmatpush1.bf16.msra.mxu0 0
  %5236 = vmatprep.subr.bf16.mxu0 0
  %5237 = vmatpush1.bf16.msra.mxu0 0
  %5238 = vmatprep.subr.bf16.mxu0 0
  %5239 = vmatpush1.bf16.msra.mxu0 0
  %5240 = vmatprep.subr.bf16.mxu0 0
  %5241 = vmatpush1.bf16.msra.mxu0 0
  %5242 = vmatprep.subr.bf16.mxu0 0
  %5243 = vmatpush1.bf16.msra.mxu0 0
  %5244 = vmatprep.mubr.bf16.mxu0 0
  %5245 = vmatmul.mubr.bf16.gmra.mrb[0].mxu0 %v5125
  %v5246 = vpop.f32.mrb[0].mxu0
  %v5247 = vadd.f32 %v5162, %v5246
  %v5248 = vpop.f32.mrb[0].mxu0
  %v5249 = vpop.f32.mrb[0].mxu0
  %v5250 = vadd.f32 %v5162, %v5249
  %v5251 = vpop.f32.mrb[0].mxu0
  %5252 = vmatprep.mubr.bf16.mxu0 0
  %5253 = vmatmul.mubr.bf16.gmra.mrb[0].mxu0 %v5126
  %v5254 = vpop.f32.mrb[0].mxu0
  %v5255 = vadd.f32 %v5162, %v5254
  %v5256 = vpop.f32.mrb[0].mxu0
  %v5257 = vpop.f32.mrb[0].mxu0
  %v5258 = vadd.f32 %v5162, %v5257
  %v5259 = vpop.f32.mrb[0].mxu0
  %5260 = vmatprep.mubr.bf16.mxu0 0
  %5261 = vmatmul.mubr.bf16.gmra.mrb[0].mxu0 %v5127
  %v5262 = vpop.f32.mrb[0].mxu0
  %v5263 = vadd.f32 %v5162, %v5262
  %v5264 = vpop.f32.mrb[0].mxu0
  %v5265 = vpop.f32.mrb[0].mxu0
  %v5266 = vadd.f32 %v5162, %v5265
  %v5267 = vpop.f32.mrb[0].mxu0
  %5268 = vmatprep.mubr.bf16.mxu0 0
  %5269 = vmatmul.mubr.bf16.gmra.mrb[0].mxu0 %v5128
  %v5270 = vpop.f32.mrb[0].mxu0
  %v5271 = vadd.f32 %v5162, %v5270
  %v5272 = vpop.f32.mrb[0].mxu0
  %v5273 = vpop.f32.mrb[0].mxu0
  %v5274 = vadd.f32 %v5162, %v5273
  %v5275 = vpop.f32.mrb[0].mxu0
  %5276 = vmatprep.mubr.bf16.mxu0 0
  %5277 = vmatmul.mubr.bf16.gmra.mrb[0].mxu0 %v5129
  %v5278 = vpop.f32.mrb[0].mxu0
  %v5279 = vadd.f32 %v5162, %v5278
  %v5280 = vpop.f32.mrb[0].mxu0
  %v5281 = vpop.f32.mrb[0].mxu0
  %v5282 = vadd.f32 %v5162, %v5281
  %v5283 = vpop.f32.mrb[0].mxu0
  %5284 = vmatprep.mubr.bf16.mxu0 0
  %5285 = vmatmul.mubr.bf16.gmra.mrb[0].mxu0 %v5130
  %v5286 = vpop.f32.mrb[0].mxu0
  %v5287 = vadd.f32 %v5162, %v5286
  %v5288 = vpop.f32.mrb[0].mxu0
  %v5289 = vpop.f32.mrb[0].mxu0
  %v5290 = vadd.f32 %v5162, %v5289
  %v5291 = vpop.f32.mrb[0].mxu0
  %5292 = vmatprep.mubr.bf16.mxu0 0
  %5293 = vmatmul.mubr.bf16.gmra.mrb[0].mxu0 %v5131
  %v5294 = vpop.f32.mrb[0].mxu0
  %v5295 = vadd.f32 %v5162, %v5294
  %v5296 = vpop.f32.mrb[0].mxu0
  %v5297 = vpop.f32.mrb[0].mxu0
  %v5298 = vadd.f32 %v5162, %v5297
  %v5299 = vpop.f32.mrb[0].mxu0
  %5300 = vmatprep.mubr.bf16.mxu0 0
  %5301 = vmatmul.mubr.bf16.gmra.mrb[0].mxu0 %v5132
  %v5302 = vpop.f32.mrb[0].mxu0
  %v5303 = vadd.f32 %v5162, %v5302
  %v5304 = vpop.f32.mrb[0].mxu0
  %v5305 = vpop.f32.mrb[0].mxu0
  %v5306 = vadd.f32 %v5162, %v5305
  %v5307 = vpop.f32.mrb[0].mxu0
  %5308 = vmatprep.mubr.bf16.mxu0 0
  %5309 = vmatmul.mubr.bf16.gmra.mrb[0].mxu0 %v5133
  %v5310 = vpop.f32.mrb[0].mxu0
  %v5311 = vadd.f32 %v5162, %v5310
  %v5312 = vpop.f32.mrb[0].mxu0
  %v5313 = vpop.f32.mrb[0].mxu0
  %v5314 = vadd.f32 %v5162, %v5313
  %v5315 = vpop.f32.mrb[0].mxu0
  %5316 = vmatprep.mubr.bf16.mxu0 0
  %5317 = vmatmul.mubr.bf16.gmra.mrb[0].mxu0 %v5134
  %v5318 = vpop.f32.mrb[0].mxu0
  %v5319 = vadd.f32 %v5162, %v5318
  %v5320 = vpop.f32.mrb[0].mxu0
  %v5321 = vpop.f32.mrb[0].mxu0
  %v5322 = vadd.f32 %v5162, %v5321
  %v5323 = vpop.f32.mrb[0].mxu0
  %5324 = vmatprep.mubr.bf16.mxu0 0
  %5325 = vmatmul.mubr.bf16.gmra.mrb[0].mxu0 %v5135
  %v5326 = vpop.f32.mrb[0].mxu0
  %v5327 = vadd.f32 %v5162, %v5326
  %v5328 = vpop.f32.mrb[0].mxu0
  %v5329 = vpop.f32.mrb[0].mxu0
  %v5330 = vadd.f32 %v5162, %v5329
  %v5331 = vpop.f32.mrb[0].mxu0
  %5332 = vmatprep.mubr.bf16.mxu0 0
  %5333 = vmatmul.mubr.bf16.gmra.mrb[0].mxu0 %v5136
  %v5334 = vpop.f32.mrb[0].mxu0
  %v5335 = vadd.f32 %v5162, %v5334
  %v5336 = vpop.f32.mrb[0].mxu0
  %v5337 = vpop.f32.mrb[0].mxu0
  %v5338 = vadd.f32 %v5162, %v5337
  %v5339 = vpop.f32.mrb[0].mxu0
  %5340 = vmatprep.mubr.bf16.mxu0 0
  %5341 = vmatmul.mubr.bf16.gmra.mrb[0].mxu0 %v5137
  %v5342 = vpop.f32.mrb[0].mxu0
  %v5343 = vadd.f32 %v5162, %v5342
  %v5344 = vpop.f32.mrb[0].mxu0
  %v5345 = vpop.f32.mrb[0].mxu0
  %v5346 = vadd.f32 %v5162, %v5345
  %v5347 = vpop.f32.mrb[0].mxu0
  %5348 = vmatprep.mubr.bf16.mxu0 0
  %5349 = vmatmul.mubr.bf16.gmra.mrb[0].mxu0 %v5138
  %v5350 = vpop.f32.mrb[0].mxu0
  %v5351 = vadd.f32 %v5162, %v5350
  %v5352 = vpop.f32.mrb[0].mxu0
  %v5353 = vpop.f32.mrb[0].mxu0
  %v5354 = vadd.f32 %v5162, %v5353
  %v5355 = vpop.f32.mrb[0].mxu0
  %5356 = vmatprep.mubr.bf16.mxu0 0
  %5357 = vmatmul.mubr.bf16.gmra.mrb[0].mxu0 %v5139
  %v5358 = vpop.f32.mrb[0].mxu0
  %v5359 = vadd.f32 %v5162, %v5358
  %v5360 = vpop.f32.mrb[0].mxu0
  %v5361 = vpop.f32.mrb[0].mxu0
  %v5362 = vadd.f32 %v5162, %v5361
  %v5363 = vpop.f32.mrb[0].mxu0
  %5364 = vmatprep.mubr.bf16.mxu0 0
  %5365 = vmatmul.mubr.bf16.gmra.mrb[0].mxu0 %v5140
  %v5366 = vpop.f32.mrb[0].mxu0
  %v5367 = vadd.f32 %v5162, %v5366
  %v5368 = vpop.f32.mrb[0].mxu0
  %v5369 = vpop.f32.mrb[0].mxu0
  %v5370 = vadd.f32 %v5162, %v5369
  %v5371 = vpop.f32.mrb[0].mxu0
  %5372 = vdwg.mxu0
  %v5373 = vsub.f32 0.0, %v5247
  %v5374 = vsub.f32 0.0, %v5250
  %v5375 = vsub.f32 0.0, %v5255
  %v5376 = vsub.f32 0.0, %v5258
  %v5377 = vsub.f32 0.0, %v5263
  %v5378 = vsub.f32 0.0, %v5266
  %v5379 = vsub.f32 0.0, %v5271
  %v5380 = vsub.f32 0.0, %v5274
  %v5381 = vsub.f32 0.0, %v5279
  %v5382 = vsub.f32 0.0, %v5282
  %v5383 = vsub.f32 0.0, %v5287
  %v5384 = vsub.f32 0.0, %v5290
  %v5385 = vsub.f32 0.0, %v5295
  %v5386 = vsub.f32 0.0, %v5298
  %v5387 = vsub.f32 0.0, %v5303
  %v5388 = vsub.f32 0.0, %v5306
  %v5389 = vsub.f32 0.0, %v5311
  %v5390 = vsub.f32 0.0, %v5314
  %v5391 = vsub.f32 0.0, %v5319
  %v5392 = vsub.f32 0.0, %v5322
  %v5393 = vsub.f32 0.0, %v5327
  %v5394 = vsub.f32 0.0, %v5330
  %v5395 = vsub.f32 0.0, %v5335
  %v5396 = vsub.f32 0.0, %v5338
  %v5397 = vsub.f32 0.0, %v5343
  %v5398 = vsub.f32 0.0, %v5346
  %v5399 = vsub.f32 0.0, %v5351
  %v5400 = vsub.f32 0.0, %v5354
  %v5401 = vsub.f32 0.0, %v5359
  %v5402 = vsub.f32 0.0, %v5362
  %v5403 = vsub.f32 0.0, %v5367
  %v5404 = vsub.f32 0.0, %v5370
  %v5405 = vmul.f32 %v5373, 1.442695
  %v5406 = vpow.pop %v5405
  %v5407 = vmul.f32 %v5374, 1.442695
  %v5408 = vpow.pop %v5407
  %v5409 = vmul.f32 %v5375, 1.442695
  %v5410 = vpow.pop %v5409
  %v5411 = vmul.f32 %v5376, 1.442695
  %v5412 = vpow.pop %v5411
  %v5413 = vmul.f32 %v5377, 1.442695
  %v5414 = vpow.pop %v5413
  %v5415 = vmul.f32 %v5378, 1.442695
  %v5416 = vpow.pop %v5415
  %v5417 = vmul.f32 %v5379, 1.442695
  %v5418 = vpow.pop %v5417
  %v5419 = vmul.f32 %v5380, 1.442695
  %v5420 = vpow.pop %v5419
  %v5421 = vmul.f32 %v5381, 1.442695
  %v5422 = vpow.pop %v5421
  %v5423 = vmul.f32 %v5382, 1.442695
  %v5424 = vpow.pop %v5423
  %v5425 = vmul.f32 %v5383, 1.442695
  %v5426 = vpow.pop %v5425
  %v5427 = vmul.f32 %v5384, 1.442695
  %v5428 = vpow.pop %v5427
  %v5429 = vmul.f32 %v5385, 1.442695
  %v5430 = vpow.pop %v5429
  %v5431 = vmul.f32 %v5386, 1.442695
  %v5432 = vpow.pop %v5431
  %v5433 = vmul.f32 %v5387, 1.442695
  %v5434 = vpow.pop %v5433
  %v5435 = vmul.f32 %v5388, 1.442695
  %v5436 = vpow.pop %v5435
  %v5437 = vmul.f32 %v5389, 1.442695
  %v5438 = vpow.pop %v5437
  %v5439 = vmul.f32 %v5390, 1.442695
  %v5440 = vpow.pop %v5439
  %v5441 = vmul.f32 %v5391, 1.442695
  %v5442 = vpow.pop %v5441
  %v5443 = vmul.f32 %v5392, 1.442695
  %v5444 = vpow.pop %v5443
  %v5445 = vmul.f32 %v5393, 1.442695
  %v5446 = vpow.pop %v5445
  %v5447 = vmul.f32 %v5394, 1.442695
  %v5448 = vpow.pop %v5447
  %v5449 = vmul.f32 %v5395, 1.442695
  %v5450 = vpow.pop %v5449
  %v5451 = vmul.f32 %v5396, 1.442695
  %v5452 = vpow.pop %v5451
  %v5453 = vmul.f32 %v5397, 1.442695
  %v5454 = vpow.pop %v5453
  %v5455 = vmul.f32 %v5398, 1.442695
  %v5456 = vpow.pop %v5455
  %v5457 = vmul.f32 %v5399, 1.442695
  %v5458 = vpow.pop %v5457
  %v5459 = vmul.f32 %v5400, 1.442695
  %v5460 = vpow.pop %v5459
  %v5461 = vmul.f32 %v5401, 1.442695
  %v5462 = vpow.pop %v5461
  %v5463 = vmul.f32 %v5402, 1.442695
  %v5464 = vpow.pop %v5463
  %v5465 = vmul.f32 %v5403, 1.442695
  %v5466 = vpow.pop %v5465
  %v5467 = vmul.f32 %v5404, 1.442695
  %v5468 = vpow.pop %v5467
  %v5469 = vadd.f32 %v5406, 1.0
  %v5470 = vadd.f32 %v5408, 1.0
  %v5471 = vadd.f32 %v5410, 1.0
  %v5472 = vadd.f32 %v5412, 1.0
  %v5473 = vadd.f32 %v5414, 1.0
  %v5474 = vadd.f32 %v5416, 1.0
  %v5475 = vadd.f32 %v5418, 1.0
  %v5476 = vadd.f32 %v5420, 1.0
  %v5477 = vadd.f32 %v5422, 1.0
  %v5478 = vadd.f32 %v5424, 1.0
  %v5479 = vadd.f32 %v5426, 1.0
  %v5480 = vadd.f32 %v5428, 1.0
  %v5481 = vadd.f32 %v5430, 1.0
  %v5482 = vadd.f32 %v5432, 1.0
  %v5483 = vadd.f32 %v5434, 1.0
  %v5484 = vadd.f32 %v5436, 1.0
  %v5485 = vadd.f32 %v5438, 1.0
  %v5486 = vadd.f32 %v5440, 1.0
  %v5487 = vadd.f32 %v5442, 1.0
  %v5488 = vadd.f32 %v5444, 1.0
  %v5489 = vadd.f32 %v5446, 1.0
  %v5490 = vadd.f32 %v5448, 1.0
  %v5491 = vadd.f32 %v5450, 1.0
  %v5492 = vadd.f32 %v5452, 1.0
  %v5493 = vadd.f32 %v5454, 1.0
  %v5494 = vadd.f32 %v5456, 1.0
  %v5495 = vadd.f32 %v5458, 1.0
  %v5496 = vadd.f32 %v5460, 1.0
  %v5497 = vadd.f32 %v5462, 1.0
  %v5498 = vadd.f32 %v5464, 1.0
  %v5499 = vadd.f32 %v5466, 1.0
  %v5500 = vadd.f32 %v5468, 1.0
  %v5501 = vrcp.pop %v5469
  %v5502 = vrcp.pop %v5470
  %v5503 = vrcp.pop %v5471
  %v5504 = vrcp.pop %v5472
  %v5505 = vrcp.pop %v5473
  %v5506 = vrcp.pop %v5474
  %v5507 = vrcp.pop %v5475
  %v5508 = vrcp.pop %v5476
  %v5509 = vrcp.pop %v5477
  %v5510 = vrcp.pop %v5478
  %v5511 = vrcp.pop %v5479
  %v5512 = vrcp.pop %v5480
  %v5513 = vrcp.pop %v5481
  %v5514 = vrcp.pop %v5482
  %v5515 = vrcp.pop %v5483
  %v5516 = vrcp.pop %v5484
  %v5517 = vrcp.pop %v5485
  %v5518 = vrcp.pop %v5486
  %v5519 = vrcp.pop %v5487
  %v5520 = vrcp.pop %v5488
  %v5521 = vrcp.pop %v5489
  %v5522 = vrcp.pop %v5490
  %v5523 = vrcp.pop %v5491
  %v5524 = vrcp.pop %v5492
  %v5525 = vrcp.pop %v5493
  %v5526 = vrcp.pop %v5494
  %v5527 = vrcp.pop %v5495
  %v5528 = vrcp.pop %v5496
  %v5529 = vrcp.pop %v5497
  %v5530 = vrcp.pop %v5498
  %v5531 = vrcp.pop %v5499
  %v5532 = vrcp.pop %v5500
  %5533 = vst [vmem:[%s9] sm:$0xff] %v5501
  %5534 = vst [vmem:[%s9 + $0x8] sm:$0xff] %v5502
  %5535 = vst [vmem:[%s9 + $0x10] sm:$0xff] %v5503
  %5536 = vst [vmem:[%s9 + $0x18] sm:$0xff] %v5504
  %5537 = vst [vmem:[%s9 + $0x20] sm:$0xff] %v5505
  %5538 = vst [vmem:[%s9 + $0x28] sm:$0xff] %v5506
  %5539 = vst [vmem:[%s9 + $0x30] sm:$0xff] %v5507
  %5540 = vst [vmem:[%s9 + $0x38] sm:$0xff] %v5508
  %5541 = vst [vmem:[%s9 + $0x40] sm:$0xff] %v5509
  %5542 = vst [vmem:[%s9 + $0x48] sm:$0xff] %v5510
  %5543 = vst [vmem:[%s9 + $0x50] sm:$0xff] %v5511
  %5544 = vst [vmem:[%s9 + $0x58] sm:$0xff] %v5512
  %5545 = vst [vmem:[%s9 + $0x60] sm:$0xff] %v5513
  %5546 = vst [vmem:[%s9 + $0x68] sm:$0xff] %v5514
  %5547 = vst [vmem:[%s9 + $0x70] sm:$0xff] %v5515
  %5548 = vst [vmem:[%s9 + $0x78] sm:$0xff] %v5516
  %5549 = vst [vmem:[%s9 + $0x80] sm:$0xff] %v5517
  %5550 = vst [vmem:[%s9 + $0x88] sm:$0xff] %v5518
  %5551 = vst [vmem:[%s9 + $0x90] sm:$0xff] %v5519
  %5552 = vst [vmem:[%s9 + $0x98] sm:$0xff] %v5520
  %5553 = vst [vmem:[%s9 + $0xa0] sm:$0xff] %v5521
  %5554 = vst [vmem:[%s9 + $0xa8] sm:$0xff] %v5522
  %5555 = vst [vmem:[%s9 + $0xb0] sm:$0xff] %v5523
  %5556 = vst [vmem:[%s9 + $0xb8] sm:$0xff] %v5524
  %5557 = vst [vmem:[%s9 + $0xc0] sm:$0xff] %v5525
  %5558 = vst [vmem:[%s9 + $0xc8] sm:$0xff] %v5526
  %5559 = vst [vmem:[%s9 + $0xd0] sm:$0xff] %v5527
  %5560 = vst [vmem:[%s9 + $0xd8] sm:$0xff] %v5528
  %5561 = vst [vmem:[%s9 + $0xe0] sm:$0xff] %v5529
  %5562 = vst [vmem:[%s9 + $0xe8] sm:$0xff] %v5530
  %5563 = vst [vmem:[%s9 + $0xf0] sm:$0xff] %v5531
  %5564 = vst [vmem:[%s9 + $0xf8] sm:$0xff] %v5532
  // Predicated region
  $region38: #{discriminator_forward.1} parent=0 // pred_check
    _
  $region39: #{discriminator_forward.1} parent=0 // pred_check_branch
    %5566 = sbr.rel (0) target = $region41
  $region40: #{discriminator_forward.1} parent=0 // pred_region
    _
  $region41: #{discriminator_forward.1} parent=0 // pred_fallthru
    _
  // Predicated region
  $region42: #{discriminator_forward.1} parent=0 // pred_check
    _
  $region43: #{discriminator_forward.1} parent=0 // pred_check_branch
    %5568 = sbr.rel (0) target = $region45
  $region44: #{discriminator_forward.1} parent=0 // pred_region
    _
  $region45: #{discriminator_forward.1} parent=0 // pred_fallthru
    _

</llo_original>
